<compile_context>
chip_gen: v7x
topology: tpu7x:2x2x1
jax: 0.10.0
libtpu: 0.0.40
codegen_flags: <defaults>
</compile_context>

<pallas_src>
import functools

import jax
import jax.numpy as jnp
from jax import lax
from jax.experimental import pallas as pl
from jax.experimental.pallas import tpu as pltpu


def _round_up(x, m):
    return ((x + m - 1) // m) * m


# ----------------------------------------------------------------------------
# Fused kernel: conv1 + ReLU + conv2 + ReLU + flatten + fc1 + ReLU + fc2
# ----------------------------------------------------------------------------
def _fused_forward_kernel(p1_ref, w1_ref, b1_ref, w2_ref, b2_ref,
                          fc1_ref, b3_ref, fc2_ref, b4_ref,
                          out_ref, h2_ref):
    n_j = p1_ref.shape[0]          # 25 conv2 kernel offsets (kh2, kw2)
    m = p1_ref.shape[1]            # 9 * TB rows, ordered (p, b) within the tile
    tb = out_ref.shape[0]          # batch tile size
    n_p = m // tb                  # 9 conv2 output positions

    w1 = w1_ref[...]               # (Kp, 32) bf16
    b1 = b1_ref[...]               # (1, 32)  f32
    b2 = b2_ref[...]               # (1, 64)  f32

    # conv1 (+bias, ReLU) and conv2 accumulation, fully VMEM resident.
    acc2 = jnp.zeros((m, w2_ref.shape[2]), jnp.float32)
    for j in range(n_j):
        h1 = jnp.dot(p1_ref[j], w1, preferred_element_type=jnp.float32) + b1
        h1 = jnp.maximum(h1, 0.0).astype(jnp.bfloat16)
        acc2 = acc2 + jnp.dot(h1, w2_ref[j], preferred_element_type=jnp.float32)
    h2_ref[...] = jnp.maximum(acc2 + b2, 0.0)          # (9*TB, 64) f32 scratch

    # fc1 (+bias, ReLU): contraction over 576 = 9*64, done per conv2 position p
    # (rows [p*tb, (p+1)*tb) of the scratch are the p-th block -- contiguous).
    acc3 = jnp.zeros((tb, fc1_ref.shape[2]), jnp.float32)
    for p in range(n_p):
        acc3 = acc3 + jnp.dot(h2_ref[pl.ds(p * tb, tb), :], fc1_ref[p],
                              preferred_element_type=jnp.float32)
    h3 = jnp.maximum(acc3 + b3_ref[...], 0.0)

    # fc2 into a lane-dense (TB, 128) output tile (wrapper slices to n_out).
    out_ref[...] = (jnp.dot(h3, fc2_ref[...], preferred_element_type=jnp.float32)
                    + b4_ref[...])


# ----------------------------------------------------------------------------
# Parameter construction (PyTorch-style init) and one-time weight reordering
# ----------------------------------------------------------------------------
def init_params(key, h_size, n_out, stacks):
    ks = jax.random.split(key, 8)

    def u(k, shape, fan_in):
        bound = 1.0 / jnp.sqrt(float(fan_in))
        return jax.random.uniform(k, shape, jnp.float32, -bound, bound)

    return {
        "conv1_w": u(ks[0], (32, stacks, 5, 5), stacks * 25),
        "conv1_b": u(ks[1], (32,), stacks * 25),
        "conv2_w": u(ks[2], (64, 32, 5, 5), 32 * 25),
        "conv2_b": u(ks[3], (64,), 32 * 25),
        "fc1_w":   u(ks[4], (h_size, 576), 576),
        "fc1_b":   u(ks[5], (h_size,), 576),
        "fc2_w":   u(ks[6], (n_out, h_size), h_size),
        "fc2_b":   u(ks[7], (n_out,), h_size),
    }


def prepare_params(raw):
    """One-time (outside jit) weight reordering / padding for the fused kernel."""
    stacks = raw["conv1_w"].shape[1]
    h_size = raw["fc1_w"].shape[0]
    n_out = raw["fc2_w"].shape[0]
    kp = _round_up(stacks * 25, 128)          # conv1 reduction dim, lane-dense
    npad = _round_up(n_out, 128)              # fc2 output, lane-dense

    # conv1: (32, C, 5, 5) -> (C*25, 32) zero-padded to (kp, 32), bf16.
    w1 = raw["conv1_w"].reshape(32, stacks * 25).T
    w1 = jnp.pad(w1, ((0, kp - stacks * 25), (0, 0))).astype(jnp.bfloat16)
    b1 = raw["conv1_b"].reshape(1, 32).astype(jnp.float32)

    # conv2: (64, 32, 5, 5) -> (25, 32, 64) indexed by j = kh2*5 + kw2.
    w2 = jnp.transpose(raw["conv2_w"], (2, 3, 1, 0)).reshape(25, 32, 64)
    w2 = w2.astype(jnp.bfloat16)
    b2 = raw["conv2_b"].reshape(1, 64).astype(jnp.float32)

    # fc1: torch flatten index = co*9 + p  ->  regroup to (p, co, h).
    fc1 = jnp.transpose(raw["fc1_w"].reshape(h_size, 64, 9), (2, 1, 0))
    fc1 = fc1.astype(jnp.float32)
    b3 = raw["fc1_b"].reshape(1, h_size).astype(jnp.float32)

    # fc2: (n_out, h) -> (h, 128-padded).
    fc2 = jnp.pad(raw["fc2_w"].T, ((0, 0), (0, npad - n_out))).astype(jnp.float32)
    b4 = jnp.pad(raw["fc2_b"], (0, npad - n_out)).reshape(1, npad)
    b4 = b4.astype(jnp.float32)

    return {"w1": w1, "b1": b1, "w2": w2, "b2": b2,
            "fc1": fc1, "b3": b3, "fc2": fc2, "b4": b4}


# ----------------------------------------------------------------------------
# Wrapper: patch extraction glue + pallas_call
# ----------------------------------------------------------------------------
def _batch_tiling(B):
    if B <= 8:
        tb = B
    elif B % 32 == 0:
        tb = 32
    else:
        tb = 16
    return tb, _round_up(B, tb)


def _build_patches(x, tb, bp, kp):
    """x: (B, C, 75, 75) -> (25, NT*9*TB, kp) bf16.

    Axis 0 : conv2 kernel offset j = kh2*5 + kw2.
    Axis 1 : bo*(9*TB) + p*TB + bi  with p = oh2*3 + ow2 (conv2 position).
    Axis 2 : conv1 patch features c*25 + i1*5 + j1, zero-padded to kp.
    """
    B, C, H, W = x.shape
    if bp > B:
        x = jnp.concatenate([x, jnp.zeros((bp - B, C, H, W), x.dtype)], axis=0)
    nt = bp // tb
    # 75 = 3 * 5 * 5 along each spatial dim: (oh2, kh2, i1) / (ow2, kw2, j1)
    x9 = x.reshape(nt, tb, C, 3, 5, 5, 3, 5, 5)
    # -> (kh2, kw2, bo, oh2, ow2, bi, c, i1, j1)
    xt = jnp.transpose(x9, (4, 7, 0, 3, 6, 1, 2, 5, 8))
    p = xt.reshape(25, nt * 9 * tb, C * 25)
    if kp > C * 25:
        p = jnp.pad(p, ((0, 0), (0, 0), (0, kp - C * 25)))
    return p.astype(jnp.bfloat16)


@functools.partial(jax.jit, static_argnames=("n_out",))
def data_efficient_convnet_forward(params, x, *, n_out):
    """x: (B, stacks, 75, 75) f32 NCHW -> (B, n_out) f32."""
    B = x.shape[0]
    assert x.shape[2] == 75 and x.shape[3] == 75, \
        "conv_output_size == 576 implies 75x75 inputs"
    tb, bp = _batch_tiling(B)
    nt = bp // tb
    kp = params["w1"].shape[0]
    npad = params["fc2"].shape[1]
    h_size = params["fc1"].shape[2]

    patches = _build_patches(x, tb, bp, kp)            # (25, nt*9*tb, kp) bf16

    out = pl.pallas_call(
        _fused_forward_kernel,
        out_shape=jax.ShapeDtypeStruct((bp, npad), jnp.float32),
        grid=(nt,),
        in_specs=[
            pl.BlockSpec((25, 9 * tb, kp), lambda i: (0, i, 0)),   # patches
            pl.BlockSpec((kp, 32), lambda i: (0, 0)),              # conv1 w
            pl.BlockSpec((1, 32), lambda i: (0, 0)),               # conv1 b
            pl.BlockSpec((25, 32, 64), lambda i: (0, 0, 0)),       # conv2 w
            pl.BlockSpec((1, 64), lambda i: (0, 0)),               # conv2 b
            pl.BlockSpec((9, 64, h_size), lambda i: (0, 0, 0)),    # fc1 w
            pl.BlockSpec((1, h_size), lambda i: (0, 0)),           # fc1 b
            pl.BlockSpec((h_size, npad), lambda i: (0, 0)),        # fc2 w
            pl.BlockSpec((1, npad), lambda i: (0, 0)),             # fc2 b
        ],
        out_specs=pl.BlockSpec((tb, npad), lambda i: (i, 0)),
        scratch_shapes=[pltpu.VMEM((9 * tb, 64), jnp.float32)],
        compiler_params=pltpu.CompilerParams(
            dimension_semantics=("parallel",),
            vmem_limit_bytes=32 * 1024 * 1024),
    )(patches, params["w1"], params["b1"], params["w2"], params["b2"],
      params["fc1"], params["b3"], params["fc2"], params["b4"])

    return out[:B, :n_out]


# ----------------------------------------------------------------------------
# Pure-JAX reference (mirrors the kernel's bf16 rounding of conv operands)
# ----------------------------------------------------------------------------
def _reference_forward(raw, x):
    f32, bf16 = jnp.float32, jnp.bfloat16
    dn = ("NCHW", "OIHW", "NCHW")
    xb = x.astype(bf16).astype(f32)
    w1 = raw["conv1_w"].astype(bf16).astype(f32)
    w2 = raw["conv2_w"].astype(bf16).astype(f32)
    h = lax.conv_general_dilated(xb, w1, (5, 5), "VALID", dimension_numbers=dn)
    h = jnp.maximum(h + raw["conv1_b"][None, :, None, None], 0.0)
    h = h.astype(bf16).astype(f32)
    h = lax.conv_general_dilated(h, w2, (5, 5), "VALID", dimension_numbers=dn)
    h = jnp.maximum(h + raw["conv2_b"][None, :, None, None], 0.0)
    flat = h.reshape(h.shape[0], -1)                   # NCHW flatten -> 576
    h = jnp.maximum(flat @ raw["fc1_w"].T + raw["fc1_b"], 0.0)
    return h @ raw["fc2_w"].T + raw["fc2_b"]


if __name__ == "__main__":
    h_size, n_out, stacks = 32, 6, 4
    batch = 2

    key = jax.random.PRNGKey(0)
    k_params, k_x = jax.random.split(key)
    raw_params = init_params(k_params, h_size, n_out, stacks)
    params = prepare_params(raw_params)

    # Input spatial size 75x75 is forced by conv_output_size == 576.
    x = jax.random.normal(k_x, (batch, stacks, 75, 75), jnp.float32)

    y = data_efficient_convnet_forward(params, x, n_out=n_out)
    y = jax.block_until_ready(y)
    assert y.shape == (batch, n_out), y.shape
    assert y.dtype == jnp.float32

    ref = jax.block_until_ready(_reference_forward(raw_params, x))
    max_err = float(jnp.max(jnp.abs(y - ref)))
    assert max_err < 2e-2, f"mismatch vs reference: max abs err {max_err}"

    print("KERNEL_OK")
</pallas_src>

<mosaic_0001>
module attributes {stable_mosaic.version = 11 : i64} {
  func.func @_fused_forward_kernel(%arg0: i32, %arg1: memref<25x18x128xbf16, #tpu.memory_space<vmem>>, %arg2: memref<128x32xbf16, #tpu.memory_space<vmem>>, %arg3: memref<1x32xf32, #tpu.memory_space<vmem>>, %arg4: memref<25x32x64xbf16, #tpu.memory_space<vmem>>, %arg5: memref<1x64xf32, #tpu.memory_space<vmem>>, %arg6: memref<9x64x32xf32, #tpu.memory_space<vmem>>, %arg7: memref<1x32xf32, #tpu.memory_space<vmem>>, %arg8: memref<32x128xf32, #tpu.memory_space<vmem>>, %arg9: memref<1x128xf32, #tpu.memory_space<vmem>>, %arg10: memref<2x128xf32, #tpu.memory_space<vmem>>, %arg11: memref<18x64xf32, #tpu.memory_space<vmem>>) attributes {dimension_semantics = [#tpu.dimension_semantics<parallel>], iteration_bounds = array<i64: 1>, scalar_prefetch = 0 : i64, scratch_operands = 1 : i64, tpu.core_type = #tpu.core_type<tc>, window_params = [{transform_indices = @transform_0, window_bounds = array<i64: 25, 18, 128>}, {pipeline_mode = #tpu.pipeline_mode<synchronous>, transform_indices = @transform_1, window_bounds = array<i64: 128, 32>}, {pipeline_mode = #tpu.pipeline_mode<synchronous>, transform_indices = @transform_2, window_bounds = array<i64: 1, 32>}, {pipeline_mode = #tpu.pipeline_mode<synchronous>, transform_indices = @transform_3, window_bounds = array<i64: 25, 32, 64>}, {pipeline_mode = #tpu.pipeline_mode<synchronous>, transform_indices = @transform_4, window_bounds = array<i64: 1, 64>}, {pipeline_mode = #tpu.pipeline_mode<synchronous>, transform_indices = @transform_5, window_bounds = array<i64: 9, 64, 32>}, {pipeline_mode = #tpu.pipeline_mode<synchronous>, transform_indices = @transform_6, window_bounds = array<i64: 1, 32>}, {pipeline_mode = #tpu.pipeline_mode<synchronous>, transform_indices = @transform_7, window_bounds = array<i64: 32, 128>}, {pipeline_mode = #tpu.pipeline_mode<synchronous>, transform_indices = @transform_8, window_bounds = array<i64: 1, 128>}, {transform_indices = @transform_9, window_bounds = array<i64: 2, 128>}]} {
    %c0 = arith.constant 0 : index
    %c0_0 = arith.constant 0 : index
    %0 = vector.load %arg2[%c0, %c0_0] : memref<128x32xbf16, #tpu.memory_space<vmem>>, vector<128x32xbf16>
    %c0_1 = arith.constant 0 : index
    %c0_2 = arith.constant 0 : index
    %1 = vector.load %arg3[%c0_1, %c0_2] : memref<1x32xf32, #tpu.memory_space<vmem>>, vector<1x32xf32>
    %c0_3 = arith.constant 0 : index
    %c0_4 = arith.constant 0 : index
    %2 = vector.load %arg5[%c0_3, %c0_4] : memref<1x64xf32, #tpu.memory_space<vmem>>, vector<1x64xf32>
    %cst = arith.constant 0.000000e+00 : f32
    %3 = vector.broadcast %cst : f32 to vector<18x64xf32>
    %c0_5 = arith.constant 0 : index
    %c0_6 = arith.constant 0 : index
    %c0_7 = arith.constant 0 : index
    %4 = vector.load %arg1[%c0_5, %c0_6, %c0_7] : memref<25x18x128xbf16, #tpu.memory_space<vmem>>, vector<1x18x128xbf16>
    %5 = vector.shape_cast %4 : vector<1x18x128xbf16> to vector<18x128xbf16>
    %cst_8 = arith.constant dense<0.000000e+00> : vector<18x32xf32>
    %6 = tpu.matmul %5, %0, %cst_8 {dimension_numbers = #tpu.dot_dimension_numbers<[1], [0], [0], [1], [0, 0, 1, 1], [], []>} : vector<18x128xbf16>, vector<128x32xbf16>, vector<18x32xf32> -> vector<18x32xf32>
    %7 = vector.broadcast %1 : vector<1x32xf32> to vector<18x32xf32>
    %8 = arith.addf %6, %7 : vector<18x32xf32>
    %cst_9 = arith.constant 0.000000e+00 : f32
    %9 = vector.broadcast %cst_9 : f32 to vector<18x32xf32>
    %10 = arith.maximumf %8, %9 : vector<18x32xf32>
    %11 = arith.truncf %10 : vector<18x32xf32> to vector<18x32xbf16>
    %c0_10 = arith.constant 0 : index
    %c0_11 = arith.constant 0 : index
    %c0_12 = arith.constant 0 : index
    %12 = vector.load %arg4[%c0_10, %c0_11, %c0_12] : memref<25x32x64xbf16, #tpu.memory_space<vmem>>, vector<1x32x64xbf16>
    %13 = vector.shape_cast %12 : vector<1x32x64xbf16> to vector<32x64xbf16>
    %cst_13 = arith.constant dense<0.000000e+00> : vector<18x64xf32>
    %14 = tpu.matmul %11, %13, %cst_13 {dimension_numbers = #tpu.dot_dimension_numbers<[1], [0], [0], [1], [0, 0, 1, 1], [], []>} : vector<18x32xbf16>, vector<32x64xbf16>, vector<18x64xf32> -> vector<18x64xf32>
    %15 = arith.addf %3, %14 : vector<18x64xf32>
    %c1 = arith.constant 1 : index
    %c0_14 = arith.constant 0 : index
    %c0_15 = arith.constant 0 : index
    %16 = vector.load %arg1[%c1, %c0_14, %c0_15] : memref<25x18x128xbf16, #tpu.memory_space<vmem>>, vector<1x18x128xbf16>
    %17 = vector.shape_cast %16 : vector<1x18x128xbf16> to vector<18x128xbf16>
    %cst_16 = arith.constant dense<0.000000e+00> : vector<18x32xf32>
    %18 = tpu.matmul %17, %0, %cst_16 {dimension_numbers = #tpu.dot_dimension_numbers<[1], [0], [0], [1], [0, 0, 1, 1], [], []>} : vector<18x128xbf16>, vector<128x32xbf16>, vector<18x32xf32> -> vector<18x32xf32>
    %19 = vector.broadcast %1 : vector<1x32xf32> to vector<18x32xf32>
    %20 = arith.addf %18, %19 : vector<18x32xf32>
    %cst_17 = arith.constant 0.000000e+00 : f32
    %21 = vector.broadcast %cst_17 : f32 to vector<18x32xf32>
    %22 = arith.maximumf %20, %21 : vector<18x32xf32>
    %23 = arith.truncf %22 : vector<18x32xf32> to vector<18x32xbf16>
    %c1_18 = arith.constant 1 : index
    %c0_19 = arith.constant 0 : index
    %c0_20 = arith.constant 0 : index
    %24 = vector.load %arg4[%c1_18, %c0_19, %c0_20] : memref<25x32x64xbf16, #tpu.memory_space<vmem>>, vector<1x32x64xbf16>
    %25 = vector.shape_cast %24 : vector<1x32x64xbf16> to vector<32x64xbf16>
    %cst_21 = arith.constant dense<0.000000e+00> : vector<18x64xf32>
    %26 = tpu.matmul %23, %25, %cst_21 {dimension_numbers = #tpu.dot_dimension_numbers<[1], [0], [0], [1], [0, 0, 1, 1], [], []>} : vector<18x32xbf16>, vector<32x64xbf16>, vector<18x64xf32> -> vector<18x64xf32>
    %27 = arith.addf %15, %26 : vector<18x64xf32>
    %c2 = arith.constant 2 : index
    %c0_22 = arith.constant 0 : index
    %c0_23 = arith.constant 0 : index
    %28 = vector.load %arg1[%c2, %c0_22, %c0_23] : memref<25x18x128xbf16, #tpu.memory_space<vmem>>, vector<1x18x128xbf16>
    %29 = vector.shape_cast %28 : vector<1x18x128xbf16> to vector<18x128xbf16>
    %cst_24 = arith.constant dense<0.000000e+00> : vector<18x32xf32>
    %30 = tpu.matmul %29, %0, %cst_24 {dimension_numbers = #tpu.dot_dimension_numbers<[1], [0], [0], [1], [0, 0, 1, 1], [], []>} : vector<18x128xbf16>, vector<128x32xbf16>, vector<18x32xf32> -> vector<18x32xf32>
    %31 = vector.broadcast %1 : vector<1x32xf32> to vector<18x32xf32>
    %32 = arith.addf %30, %31 : vector<18x32xf32>
    %cst_25 = arith.constant 0.000000e+00 : f32
    %33 = vector.broadcast %cst_25 : f32 to vector<18x32xf32>
    %34 = arith.maximumf %32, %33 : vector<18x32xf32>
    %35 = arith.truncf %34 : vector<18x32xf32> to vector<18x32xbf16>
    %c2_26 = arith.constant 2 : index
    %c0_27 = arith.constant 0 : index
    %c0_28 = arith.constant 0 : index
    %36 = vector.load %arg4[%c2_26, %c0_27, %c0_28] : memref<25x32x64xbf16, #tpu.memory_space<vmem>>, vector<1x32x64xbf16>
    %37 = vector.shape_cast %36 : vector<1x32x64xbf16> to vector<32x64xbf16>
    %cst_29 = arith.constant dense<0.000000e+00> : vector<18x64xf32>
    %38 = tpu.matmul %35, %37, %cst_29 {dimension_numbers = #tpu.dot_dimension_numbers<[1], [0], [0], [1], [0, 0, 1, 1], [], []>} : vector<18x32xbf16>, vector<32x64xbf16>, vector<18x64xf32> -> vector<18x64xf32>
    %39 = arith.addf %27, %38 : vector<18x64xf32>
    %c3 = arith.constant 3 : index
    %c0_30 = arith.constant 0 : index
    %c0_31 = arith.constant 0 : index
    %40 = vector.load %arg1[%c3, %c0_30, %c0_31] : memref<25x18x128xbf16, #tpu.memory_space<vmem>>, vector<1x18x128xbf16>
    %41 = vector.shape_cast %40 : vector<1x18x128xbf16> to vector<18x128xbf16>
    %cst_32 = arith.constant dense<0.000000e+00> : vector<18x32xf32>
    %42 = tpu.matmul %41, %0, %cst_32 {dimension_numbers = #tpu.dot_dimension_numbers<[1], [0], [0], [1], [0, 0, 1, 1], [], []>} : vector<18x128xbf16>, vector<128x32xbf16>, vector<18x32xf32> -> vector<18x32xf32>
    %43 = vector.broadcast %1 : vector<1x32xf32> to vector<18x32xf32>
    %44 = arith.addf %42, %43 : vector<18x32xf32>
    %cst_33 = arith.constant 0.000000e+00 : f32
    %45 = vector.broadcast %cst_33 : f32 to vector<18x32xf32>
    %46 = arith.maximumf %44, %45 : vector<18x32xf32>
    %47 = arith.truncf %46 : vector<18x32xf32> to vector<18x32xbf16>
    %c3_34 = arith.constant 3 : index
    %c0_35 = arith.constant 0 : index
    %c0_36 = arith.constant 0 : index
    %48 = vector.load %arg4[%c3_34, %c0_35, %c0_36] : memref<25x32x64xbf16, #tpu.memory_space<vmem>>, vector<1x32x64xbf16>
    %49 = vector.shape_cast %48 : vector<1x32x64xbf16> to vector<32x64xbf16>
    %cst_37 = arith.constant dense<0.000000e+00> : vector<18x64xf32>
    %50 = tpu.matmul %47, %49, %cst_37 {dimension_numbers = #tpu.dot_dimension_numbers<[1], [0], [0], [1], [0, 0, 1, 1], [], []>} : vector<18x32xbf16>, vector<32x64xbf16>, vector<18x64xf32> -> vector<18x64xf32>
    %51 = arith.addf %39, %50 : vector<18x64xf32>
    %c4 = arith.constant 4 : index
    %c0_38 = arith.constant 0 : index
    %c0_39 = arith.constant 0 : index
    %52 = vector.load %arg1[%c4, %c0_38, %c0_39] : memref<25x18x128xbf16, #tpu.memory_space<vmem>>, vector<1x18x128xbf16>
    %53 = vector.shape_cast %52 : vector<1x18x128xbf16> to vector<18x128xbf16>
    %cst_40 = arith.constant dense<0.000000e+00> : vector<18x32xf32>
    %54 = tpu.matmul %53, %0, %cst_40 {dimension_numbers = #tpu.dot_dimension_numbers<[1], [0], [0], [1], [0, 0, 1, 1], [], []>} : vector<18x128xbf16>, vector<128x32xbf16>, vector<18x32xf32> -> vector<18x32xf32>
    %55 = vector.broadcast %1 : vector<1x32xf32> to vector<18x32xf32>
    %56 = arith.addf %54, %55 : vector<18x32xf32>
    %cst_41 = arith.constant 0.000000e+00 : f32
    %57 = vector.broadcast %cst_41 : f32 to vector<18x32xf32>
    %58 = arith.maximumf %56, %57 : vector<18x32xf32>
    %59 = arith.truncf %58 : vector<18x32xf32> to vector<18x32xbf16>
    %c4_42 = arith.constant 4 : index
    %c0_43 = arith.constant 0 : index
    %c0_44 = arith.constant 0 : index
    %60 = vector.load %arg4[%c4_42, %c0_43, %c0_44] : memref<25x32x64xbf16, #tpu.memory_space<vmem>>, vector<1x32x64xbf16>
    %61 = vector.shape_cast %60 : vector<1x32x64xbf16> to vector<32x64xbf16>
    %cst_45 = arith.constant dense<0.000000e+00> : vector<18x64xf32>
    %62 = tpu.matmul %59, %61, %cst_45 {dimension_numbers = #tpu.dot_dimension_numbers<[1], [0], [0], [1], [0, 0, 1, 1], [], []>} : vector<18x32xbf16>, vector<32x64xbf16>, vector<18x64xf32> -> vector<18x64xf32>
    %63 = arith.addf %51, %62 : vector<18x64xf32>
    %c5 = arith.constant 5 : index
    %c0_46 = arith.constant 0 : index
    %c0_47 = arith.constant 0 : index
    %64 = vector.load %arg1[%c5, %c0_46, %c0_47] : memref<25x18x128xbf16, #tpu.memory_space<vmem>>, vector<1x18x128xbf16>
    %65 = vector.shape_cast %64 : vector<1x18x128xbf16> to vector<18x128xbf16>
    %cst_48 = arith.constant dense<0.000000e+00> : vector<18x32xf32>
    %66 = tpu.matmul %65, %0, %cst_48 {dimension_numbers = #tpu.dot_dimension_numbers<[1], [0], [0], [1], [0, 0, 1, 1], [], []>} : vector<18x128xbf16>, vector<128x32xbf16>, vector<18x32xf32> -> vector<18x32xf32>
    %67 = vector.broadcast %1 : vector<1x32xf32> to vector<18x32xf32>
    %68 = arith.addf %66, %67 : vector<18x32xf32>
    %cst_49 = arith.constant 0.000000e+00 : f32
    %69 = vector.broadcast %cst_49 : f32 to vector<18x32xf32>
    %70 = arith.maximumf %68, %69 : vector<18x32xf32>
    %71 = arith.truncf %70 : vector<18x32xf32> to vector<18x32xbf16>
    %c5_50 = arith.constant 5 : index
    %c0_51 = arith.constant 0 : index
    %c0_52 = arith.constant 0 : index
    %72 = vector.load %arg4[%c5_50, %c0_51, %c0_52] : memref<25x32x64xbf16, #tpu.memory_space<vmem>>, vector<1x32x64xbf16>
    %73 = vector.shape_cast %72 : vector<1x32x64xbf16> to vector<32x64xbf16>
    %cst_53 = arith.constant dense<0.000000e+00> : vector<18x64xf32>
    %74 = tpu.matmul %71, %73, %cst_53 {dimension_numbers = #tpu.dot_dimension_numbers<[1], [0], [0], [1], [0, 0, 1, 1], [], []>} : vector<18x32xbf16>, vector<32x64xbf16>, vector<18x64xf32> -> vector<18x64xf32>
    %75 = arith.addf %63, %74 : vector<18x64xf32>
    %c6 = arith.constant 6 : index
    %c0_54 = arith.constant 0 : index
    %c0_55 = arith.constant 0 : index
    %76 = vector.load %arg1[%c6, %c0_54, %c0_55] : memref<25x18x128xbf16, #tpu.memory_space<vmem>>, vector<1x18x128xbf16>
    %77 = vector.shape_cast %76 : vector<1x18x128xbf16> to vector<18x128xbf16>
    %cst_56 = arith.constant dense<0.000000e+00> : vector<18x32xf32>
    %78 = tpu.matmul %77, %0, %cst_56 {dimension_numbers = #tpu.dot_dimension_numbers<[1], [0], [0], [1], [0, 0, 1, 1], [], []>} : vector<18x128xbf16>, vector<128x32xbf16>, vector<18x32xf32> -> vector<18x32xf32>
    %79 = vector.broadcast %1 : vector<1x32xf32> to vector<18x32xf32>
    %80 = arith.addf %78, %79 : vector<18x32xf32>
    %cst_57 = arith.constant 0.000000e+00 : f32
    %81 = vector.broadcast %cst_57 : f32 to vector<18x32xf32>
    %82 = arith.maximumf %80, %81 : vector<18x32xf32>
    %83 = arith.truncf %82 : vector<18x32xf32> to vector<18x32xbf16>
    %c6_58 = arith.constant 6 : index
    %c0_59 = arith.constant 0 : index
    %c0_60 = arith.constant 0 : index
    %84 = vector.load %arg4[%c6_58, %c0_59, %c0_60] : memref<25x32x64xbf16, #tpu.memory_space<vmem>>, vector<1x32x64xbf16>
    %85 = vector.shape_cast %84 : vector<1x32x64xbf16> to vector<32x64xbf16>
    %cst_61 = arith.constant dense<0.000000e+00> : vector<18x64xf32>
    %86 = tpu.matmul %83, %85, %cst_61 {dimension_numbers = #tpu.dot_dimension_numbers<[1], [0], [0], [1], [0, 0, 1, 1], [], []>} : vector<18x32xbf16>, vector<32x64xbf16>, vector<18x64xf32> -> vector<18x64xf32>
    %87 = arith.addf %75, %86 : vector<18x64xf32>
    %c7 = arith.constant 7 : index
    %c0_62 = arith.constant 0 : index
    %c0_63 = arith.constant 0 : index
    %88 = vector.load %arg1[%c7, %c0_62, %c0_63] : memref<25x18x128xbf16, #tpu.memory_space<vmem>>, vector<1x18x128xbf16>
    %89 = vector.shape_cast %88 : vector<1x18x128xbf16> to vector<18x128xbf16>
    %cst_64 = arith.constant dense<0.000000e+00> : vector<18x32xf32>
    %90 = tpu.matmul %89, %0, %cst_64 {dimension_numbers = #tpu.dot_dimension_numbers<[1], [0], [0], [1], [0, 0, 1, 1], [], []>} : vector<18x128xbf16>, vector<128x32xbf16>, vector<18x32xf32> -> vector<18x32xf32>
    %91 = vector.broadcast %1 : vector<1x32xf32> to vector<18x32xf32>
    %92 = arith.addf %90, %91 : vector<18x32xf32>
    %cst_65 = arith.constant 0.000000e+00 : f32
    %93 = vector.broadcast %cst_65 : f32 to vector<18x32xf32>
    %94 = arith.maximumf %92, %93 : vector<18x32xf32>
    %95 = arith.truncf %94 : vector<18x32xf32> to vector<18x32xbf16>
    %c7_66 = arith.constant 7 : index
    %c0_67 = arith.constant 0 : index
    %c0_68 = arith.constant 0 : index
    %96 = vector.load %arg4[%c7_66, %c0_67, %c0_68] : memref<25x32x64xbf16, #tpu.memory_space<vmem>>, vector<1x32x64xbf16>
    %97 = vector.shape_cast %96 : vector<1x32x64xbf16> to vector<32x64xbf16>
    %cst_69 = arith.constant dense<0.000000e+00> : vector<18x64xf32>
    %98 = tpu.matmul %95, %97, %cst_69 {dimension_numbers = #tpu.dot_dimension_numbers<[1], [0], [0], [1], [0, 0, 1, 1], [], []>} : vector<18x32xbf16>, vector<32x64xbf16>, vector<18x64xf32> -> vector<18x64xf32>
    %99 = arith.addf %87, %98 : vector<18x64xf32>
    %c8 = arith.constant 8 : index
    %c0_70 = arith.constant 0 : index
    %c0_71 = arith.constant 0 : index
    %100 = vector.load %arg1[%c8, %c0_70, %c0_71] : memref<25x18x128xbf16, #tpu.memory_space<vmem>>, vector<1x18x128xbf16>
    %101 = vector.shape_cast %100 : vector<1x18x128xbf16> to vector<18x128xbf16>
    %cst_72 = arith.constant dense<0.000000e+00> : vector<18x32xf32>
    %102 = tpu.matmul %101, %0, %cst_72 {dimension_numbers = #tpu.dot_dimension_numbers<[1], [0], [0], [1], [0, 0, 1, 1], [], []>} : vector<18x128xbf16>, vector<128x32xbf16>, vector<18x32xf32> -> vector<18x32xf32>
    %103 = vector.broadcast %1 : vector<1x32xf32> to vector<18x32xf32>
    %104 = arith.addf %102, %103 : vector<18x32xf32>
    %cst_73 = arith.constant 0.000000e+00 : f32
    %105 = vector.broadcast %cst_73 : f32 to vector<18x32xf32>
    %106 = arith.maximumf %104, %105 : vector<18x32xf32>
    %107 = arith.truncf %106 : vector<18x32xf32> to vector<18x32xbf16>
    %c8_74 = arith.constant 8 : index
    %c0_75 = arith.constant 0 : index
    %c0_76 = arith.constant 0 : index
    %108 = vector.load %arg4[%c8_74, %c0_75, %c0_76] : memref<25x32x64xbf16, #tpu.memory_space<vmem>>, vector<1x32x64xbf16>
    %109 = vector.shape_cast %108 : vector<1x32x64xbf16> to vector<32x64xbf16>
    %cst_77 = arith.constant dense<0.000000e+00> : vector<18x64xf32>
    %110 = tpu.matmul %107, %109, %cst_77 {dimension_numbers = #tpu.dot_dimension_numbers<[1], [0], [0], [1], [0, 0, 1, 1], [], []>} : vector<18x32xbf16>, vector<32x64xbf16>, vector<18x64xf32> -> vector<18x64xf32>
    %111 = arith.addf %99, %110 : vector<18x64xf32>
    %c9 = arith.constant 9 : index
    %c0_78 = arith.constant 0 : index
    %c0_79 = arith.constant 0 : index
    %112 = vector.load %arg1[%c9, %c0_78, %c0_79] : memref<25x18x128xbf16, #tpu.memory_space<vmem>>, vector<1x18x128xbf16>
    %113 = vector.shape_cast %112 : vector<1x18x128xbf16> to vector<18x128xbf16>
    %cst_80 = arith.constant dense<0.000000e+00> : vector<18x32xf32>
    %114 = tpu.matmul %113, %0, %cst_80 {dimension_numbers = #tpu.dot_dimension_numbers<[1], [0], [0], [1], [0, 0, 1, 1], [], []>} : vector<18x128xbf16>, vector<128x32xbf16>, vector<18x32xf32> -> vector<18x32xf32>
    %115 = vector.broadcast %1 : vector<1x32xf32> to vector<18x32xf32>
    %116 = arith.addf %114, %115 : vector<18x32xf32>
    %cst_81 = arith.constant 0.000000e+00 : f32
    %117 = vector.broadcast %cst_81 : f32 to vector<18x32xf32>
    %118 = arith.maximumf %116, %117 : vector<18x32xf32>
    %119 = arith.truncf %118 : vector<18x32xf32> to vector<18x32xbf16>
    %c9_82 = arith.constant 9 : index
    %c0_83 = arith.constant 0 : index
    %c0_84 = arith.constant 0 : index
    %120 = vector.load %arg4[%c9_82, %c0_83, %c0_84] : memref<25x32x64xbf16, #tpu.memory_space<vmem>>, vector<1x32x64xbf16>
    %121 = vector.shape_cast %120 : vector<1x32x64xbf16> to vector<32x64xbf16>
    %cst_85 = arith.constant dense<0.000000e+00> : vector<18x64xf32>
    %122 = tpu.matmul %119, %121, %cst_85 {dimension_numbers = #tpu.dot_dimension_numbers<[1], [0], [0], [1], [0, 0, 1, 1], [], []>} : vector<18x32xbf16>, vector<32x64xbf16>, vector<18x64xf32> -> vector<18x64xf32>
    %123 = arith.addf %111, %122 : vector<18x64xf32>
    %c10 = arith.constant 10 : index
    %c0_86 = arith.constant 0 : index
    %c0_87 = arith.constant 0 : index
    %124 = vector.load %arg1[%c10, %c0_86, %c0_87] : memref<25x18x128xbf16, #tpu.memory_space<vmem>>, vector<1x18x128xbf16>
    %125 = vector.shape_cast %124 : vector<1x18x128xbf16> to vector<18x128xbf16>
    %cst_88 = arith.constant dense<0.000000e+00> : vector<18x32xf32>
    %126 = tpu.matmul %125, %0, %cst_88 {dimension_numbers = #tpu.dot_dimension_numbers<[1], [0], [0], [1], [0, 0, 1, 1], [], []>} : vector<18x128xbf16>, vector<128x32xbf16>, vector<18x32xf32> -> vector<18x32xf32>
    %127 = vector.broadcast %1 : vector<1x32xf32> to vector<18x32xf32>
    %128 = arith.addf %126, %127 : vector<18x32xf32>
    %cst_89 = arith.constant 0.000000e+00 : f32
    %129 = vector.broadcast %cst_89 : f32 to vector<18x32xf32>
    %130 = arith.maximumf %128, %129 : vector<18x32xf32>
    %131 = arith.truncf %130 : vector<18x32xf32> to vector<18x32xbf16>
    %c10_90 = arith.constant 10 : index
    %c0_91 = arith.constant 0 : index
    %c0_92 = arith.constant 0 : index
    %132 = vector.load %arg4[%c10_90, %c0_91, %c0_92] : memref<25x32x64xbf16, #tpu.memory_space<vmem>>, vector<1x32x64xbf16>
    %133 = vector.shape_cast %132 : vector<1x32x64xbf16> to vector<32x64xbf16>
    %cst_93 = arith.constant dense<0.000000e+00> : vector<18x64xf32>
    %134 = tpu.matmul %131, %133, %cst_93 {dimension_numbers = #tpu.dot_dimension_numbers<[1], [0], [0], [1], [0, 0, 1, 1], [], []>} : vector<18x32xbf16>, vector<32x64xbf16>, vector<18x64xf32> -> vector<18x64xf32>
    %135 = arith.addf %123, %134 : vector<18x64xf32>
    %c11 = arith.constant 11 : index
    %c0_94 = arith.constant 0 : index
    %c0_95 = arith.constant 0 : index
    %136 = vector.load %arg1[%c11, %c0_94, %c0_95] : memref<25x18x128xbf16, #tpu.memory_space<vmem>>, vector<1x18x128xbf16>
    %137 = vector.shape_cast %136 : vector<1x18x128xbf16> to vector<18x128xbf16>
    %cst_96 = arith.constant dense<0.000000e+00> : vector<18x32xf32>
    %138 = tpu.matmul %137, %0, %cst_96 {dimension_numbers = #tpu.dot_dimension_numbers<[1], [0], [0], [1], [0, 0, 1, 1], [], []>} : vector<18x128xbf16>, vector<128x32xbf16>, vector<18x32xf32> -> vector<18x32xf32>
    %139 = vector.broadcast %1 : vector<1x32xf32> to vector<18x32xf32>
    %140 = arith.addf %138, %139 : vector<18x32xf32>
    %cst_97 = arith.constant 0.000000e+00 : f32
    %141 = vector.broadcast %cst_97 : f32 to vector<18x32xf32>
    %142 = arith.maximumf %140, %141 : vector<18x32xf32>
    %143 = arith.truncf %142 : vector<18x32xf32> to vector<18x32xbf16>
    %c11_98 = arith.constant 11 : index
    %c0_99 = arith.constant 0 : index
    %c0_100 = arith.constant 0 : index
    %144 = vector.load %arg4[%c11_98, %c0_99, %c0_100] : memref<25x32x64xbf16, #tpu.memory_space<vmem>>, vector<1x32x64xbf16>
    %145 = vector.shape_cast %144 : vector<1x32x64xbf16> to vector<32x64xbf16>
    %cst_101 = arith.constant dense<0.000000e+00> : vector<18x64xf32>
    %146 = tpu.matmul %143, %145, %cst_101 {dimension_numbers = #tpu.dot_dimension_numbers<[1], [0], [0], [1], [0, 0, 1, 1], [], []>} : vector<18x32xbf16>, vector<32x64xbf16>, vector<18x64xf32> -> vector<18x64xf32>
    %147 = arith.addf %135, %146 : vector<18x64xf32>
    %c12 = arith.constant 12 : index
    %c0_102 = arith.constant 0 : index
    %c0_103 = arith.constant 0 : index
    %148 = vector.load %arg1[%c12, %c0_102, %c0_103] : memref<25x18x128xbf16, #tpu.memory_space<vmem>>, vector<1x18x128xbf16>
    %149 = vector.shape_cast %148 : vector<1x18x128xbf16> to vector<18x128xbf16>
    %cst_104 = arith.constant dense<0.000000e+00> : vector<18x32xf32>
    %150 = tpu.matmul %149, %0, %cst_104 {dimension_numbers = #tpu.dot_dimension_numbers<[1], [0], [0], [1], [0, 0, 1, 1], [], []>} : vector<18x128xbf16>, vector<128x32xbf16>, vector<18x32xf32> -> vector<18x32xf32>
    %151 = vector.broadcast %1 : vector<1x32xf32> to vector<18x32xf32>
    %152 = arith.addf %150, %151 : vector<18x32xf32>
    %cst_105 = arith.constant 0.000000e+00 : f32
    %153 = vector.broadcast %cst_105 : f32 to vector<18x32xf32>
    %154 = arith.maximumf %152, %153 : vector<18x32xf32>
    %155 = arith.truncf %154 : vector<18x32xf32> to vector<18x32xbf16>
    %c12_106 = arith.constant 12 : index
    %c0_107 = arith.constant 0 : index
    %c0_108 = arith.constant 0 : index
    %156 = vector.load %arg4[%c12_106, %c0_107, %c0_108] : memref<25x32x64xbf16, #tpu.memory_space<vmem>>, vector<1x32x64xbf16>
    %157 = vector.shape_cast %156 : vector<1x32x64xbf16> to vector<32x64xbf16>
    %cst_109 = arith.constant dense<0.000000e+00> : vector<18x64xf32>
    %158 = tpu.matmul %155, %157, %cst_109 {dimension_numbers = #tpu.dot_dimension_numbers<[1], [0], [0], [1], [0, 0, 1, 1], [], []>} : vector<18x32xbf16>, vector<32x64xbf16>, vector<18x64xf32> -> vector<18x64xf32>
    %159 = arith.addf %147, %158 : vector<18x64xf32>
    %c13 = arith.constant 13 : index
    %c0_110 = arith.constant 0 : index
    %c0_111 = arith.constant 0 : index
    %160 = vector.load %arg1[%c13, %c0_110, %c0_111] : memref<25x18x128xbf16, #tpu.memory_space<vmem>>, vector<1x18x128xbf16>
    %161 = vector.shape_cast %160 : vector<1x18x128xbf16> to vector<18x128xbf16>
    %cst_112 = arith.constant dense<0.000000e+00> : vector<18x32xf32>
    %162 = tpu.matmul %161, %0, %cst_112 {dimension_numbers = #tpu.dot_dimension_numbers<[1], [0], [0], [1], [0, 0, 1, 1], [], []>} : vector<18x128xbf16>, vector<128x32xbf16>, vector<18x32xf32> -> vector<18x32xf32>
    %163 = vector.broadcast %1 : vector<1x32xf32> to vector<18x32xf32>
    %164 = arith.addf %162, %163 : vector<18x32xf32>
    %cst_113 = arith.constant 0.000000e+00 : f32
    %165 = vector.broadcast %cst_113 : f32 to vector<18x32xf32>
    %166 = arith.maximumf %164, %165 : vector<18x32xf32>
    %167 = arith.truncf %166 : vector<18x32xf32> to vector<18x32xbf16>
    %c13_114 = arith.constant 13 : index
    %c0_115 = arith.constant 0 : index
    %c0_116 = arith.constant 0 : index
    %168 = vector.load %arg4[%c13_114, %c0_115, %c0_116] : memref<25x32x64xbf16, #tpu.memory_space<vmem>>, vector<1x32x64xbf16>
    %169 = vector.shape_cast %168 : vector<1x32x64xbf16> to vector<32x64xbf16>
    %cst_117 = arith.constant dense<0.000000e+00> : vector<18x64xf32>
    %170 = tpu.matmul %167, %169, %cst_117 {dimension_numbers = #tpu.dot_dimension_numbers<[1], [0], [0], [1], [0, 0, 1, 1], [], []>} : vector<18x32xbf16>, vector<32x64xbf16>, vector<18x64xf32> -> vector<18x64xf32>
    %171 = arith.addf %159, %170 : vector<18x64xf32>
    %c14 = arith.constant 14 : index
    %c0_118 = arith.constant 0 : index
    %c0_119 = arith.constant 0 : index
    %172 = vector.load %arg1[%c14, %c0_118, %c0_119] : memref<25x18x128xbf16, #tpu.memory_space<vmem>>, vector<1x18x128xbf16>
    %173 = vector.shape_cast %172 : vector<1x18x128xbf16> to vector<18x128xbf16>
    %cst_120 = arith.constant dense<0.000000e+00> : vector<18x32xf32>
    %174 = tpu.matmul %173, %0, %cst_120 {dimension_numbers = #tpu.dot_dimension_numbers<[1], [0], [0], [1], [0, 0, 1, 1], [], []>} : vector<18x128xbf16>, vector<128x32xbf16>, vector<18x32xf32> -> vector<18x32xf32>
    %175 = vector.broadcast %1 : vector<1x32xf32> to vector<18x32xf32>
    %176 = arith.addf %174, %175 : vector<18x32xf32>
    %cst_121 = arith.constant 0.000000e+00 : f32
    %177 = vector.broadcast %cst_121 : f32 to vector<18x32xf32>
    %178 = arith.maximumf %176, %177 : vector<18x32xf32>
    %179 = arith.truncf %178 : vector<18x32xf32> to vector<18x32xbf16>
    %c14_122 = arith.constant 14 : index
    %c0_123 = arith.constant 0 : index
    %c0_124 = arith.constant 0 : index
    %180 = vector.load %arg4[%c14_122, %c0_123, %c0_124] : memref<25x32x64xbf16, #tpu.memory_space<vmem>>, vector<1x32x64xbf16>
    %181 = vector.shape_cast %180 : vector<1x32x64xbf16> to vector<32x64xbf16>
    %cst_125 = arith.constant dense<0.000000e+00> : vector<18x64xf32>
    %182 = tpu.matmul %179, %181, %cst_125 {dimension_numbers = #tpu.dot_dimension_numbers<[1], [0], [0], [1], [0, 0, 1, 1], [], []>} : vector<18x32xbf16>, vector<32x64xbf16>, vector<18x64xf32> -> vector<18x64xf32>
    %183 = arith.addf %171, %182 : vector<18x64xf32>
    %c15 = arith.constant 15 : index
    %c0_126 = arith.constant 0 : index
    %c0_127 = arith.constant 0 : index
    %184 = vector.load %arg1[%c15, %c0_126, %c0_127] : memref<25x18x128xbf16, #tpu.memory_space<vmem>>, vector<1x18x128xbf16>
    %185 = vector.shape_cast %184 : vector<1x18x128xbf16> to vector<18x128xbf16>
    %cst_128 = arith.constant dense<0.000000e+00> : vector<18x32xf32>
    %186 = tpu.matmul %185, %0, %cst_128 {dimension_numbers = #tpu.dot_dimension_numbers<[1], [0], [0], [1], [0, 0, 1, 1], [], []>} : vector<18x128xbf16>, vector<128x32xbf16>, vector<18x32xf32> -> vector<18x32xf32>
    %187 = vector.broadcast %1 : vector<1x32xf32> to vector<18x32xf32>
    %188 = arith.addf %186, %187 : vector<18x32xf32>
    %cst_129 = arith.constant 0.000000e+00 : f32
    %189 = vector.broadcast %cst_129 : f32 to vector<18x32xf32>
    %190 = arith.maximumf %188, %189 : vector<18x32xf32>
    %191 = arith.truncf %190 : vector<18x32xf32> to vector<18x32xbf16>
    %c15_130 = arith.constant 15 : index
    %c0_131 = arith.constant 0 : index
    %c0_132 = arith.constant 0 : index
    %192 = vector.load %arg4[%c15_130, %c0_131, %c0_132] : memref<25x32x64xbf16, #tpu.memory_space<vmem>>, vector<1x32x64xbf16>
    %193 = vector.shape_cast %192 : vector<1x32x64xbf16> to vector<32x64xbf16>
    %cst_133 = arith.constant dense<0.000000e+00> : vector<18x64xf32>
    %194 = tpu.matmul %191, %193, %cst_133 {dimension_numbers = #tpu.dot_dimension_numbers<[1], [0], [0], [1], [0, 0, 1, 1], [], []>} : vector<18x32xbf16>, vector<32x64xbf16>, vector<18x64xf32> -> vector<18x64xf32>
    %195 = arith.addf %183, %194 : vector<18x64xf32>
    %c16 = arith.constant 16 : index
    %c0_134 = arith.constant 0 : index
    %c0_135 = arith.constant 0 : index
    %196 = vector.load %arg1[%c16, %c0_134, %c0_135] : memref<25x18x128xbf16, #tpu.memory_space<vmem>>, vector<1x18x128xbf16>
    %197 = vector.shape_cast %196 : vector<1x18x128xbf16> to vector<18x128xbf16>
    %cst_136 = arith.constant dense<0.000000e+00> : vector<18x32xf32>
    %198 = tpu.matmul %197, %0, %cst_136 {dimension_numbers = #tpu.dot_dimension_numbers<[1], [0], [0], [1], [0, 0, 1, 1], [], []>} : vector<18x128xbf16>, vector<128x32xbf16>, vector<18x32xf32> -> vector<18x32xf32>
    %199 = vector.broadcast %1 : vector<1x32xf32> to vector<18x32xf32>
    %200 = arith.addf %198, %199 : vector<18x32xf32>
    %cst_137 = arith.constant 0.000000e+00 : f32
    %201 = vector.broadcast %cst_137 : f32 to vector<18x32xf32>
    %202 = arith.maximumf %200, %201 : vector<18x32xf32>
    %203 = arith.truncf %202 : vector<18x32xf32> to vector<18x32xbf16>
    %c16_138 = arith.constant 16 : index
    %c0_139 = arith.constant 0 : index
    %c0_140 = arith.constant 0 : index
    %204 = vector.load %arg4[%c16_138, %c0_139, %c0_140] : memref<25x32x64xbf16, #tpu.memory_space<vmem>>, vector<1x32x64xbf16>
    %205 = vector.shape_cast %204 : vector<1x32x64xbf16> to vector<32x64xbf16>
    %cst_141 = arith.constant dense<0.000000e+00> : vector<18x64xf32>
    %206 = tpu.matmul %203, %205, %cst_141 {dimension_numbers = #tpu.dot_dimension_numbers<[1], [0], [0], [1], [0, 0, 1, 1], [], []>} : vector<18x32xbf16>, vector<32x64xbf16>, vector<18x64xf32> -> vector<18x64xf32>
    %207 = arith.addf %195, %206 : vector<18x64xf32>
    %c17 = arith.constant 17 : index
    %c0_142 = arith.constant 0 : index
    %c0_143 = arith.constant 0 : index
    %208 = vector.load %arg1[%c17, %c0_142, %c0_143] : memref<25x18x128xbf16, #tpu.memory_space<vmem>>, vector<1x18x128xbf16>
    %209 = vector.shape_cast %208 : vector<1x18x128xbf16> to vector<18x128xbf16>
    %cst_144 = arith.constant dense<0.000000e+00> : vector<18x32xf32>
    %210 = tpu.matmul %209, %0, %cst_144 {dimension_numbers = #tpu.dot_dimension_numbers<[1], [0], [0], [1], [0, 0, 1, 1], [], []>} : vector<18x128xbf16>, vector<128x32xbf16>, vector<18x32xf32> -> vector<18x32xf32>
    %211 = vector.broadcast %1 : vector<1x32xf32> to vector<18x32xf32>
    %212 = arith.addf %210, %211 : vector<18x32xf32>
    %cst_145 = arith.constant 0.000000e+00 : f32
    %213 = vector.broadcast %cst_145 : f32 to vector<18x32xf32>
    %214 = arith.maximumf %212, %213 : vector<18x32xf32>
    %215 = arith.truncf %214 : vector<18x32xf32> to vector<18x32xbf16>
    %c17_146 = arith.constant 17 : index
    %c0_147 = arith.constant 0 : index
    %c0_148 = arith.constant 0 : index
    %216 = vector.load %arg4[%c17_146, %c0_147, %c0_148] : memref<25x32x64xbf16, #tpu.memory_space<vmem>>, vector<1x32x64xbf16>
    %217 = vector.shape_cast %216 : vector<1x32x64xbf16> to vector<32x64xbf16>
    %cst_149 = arith.constant dense<0.000000e+00> : vector<18x64xf32>
    %218 = tpu.matmul %215, %217, %cst_149 {dimension_numbers = #tpu.dot_dimension_numbers<[1], [0], [0], [1], [0, 0, 1, 1], [], []>} : vector<18x32xbf16>, vector<32x64xbf16>, vector<18x64xf32> -> vector<18x64xf32>
    %219 = arith.addf %207, %218 : vector<18x64xf32>
    %c18 = arith.constant 18 : index
    %c0_150 = arith.constant 0 : index
    %c0_151 = arith.constant 0 : index
    %220 = vector.load %arg1[%c18, %c0_150, %c0_151] : memref<25x18x128xbf16, #tpu.memory_space<vmem>>, vector<1x18x128xbf16>
    %221 = vector.shape_cast %220 : vector<1x18x128xbf16> to vector<18x128xbf16>
    %cst_152 = arith.constant dense<0.000000e+00> : vector<18x32xf32>
    %222 = tpu.matmul %221, %0, %cst_152 {dimension_numbers = #tpu.dot_dimension_numbers<[1], [0], [0], [1], [0, 0, 1, 1], [], []>} : vector<18x128xbf16>, vector<128x32xbf16>, vector<18x32xf32> -> vector<18x32xf32>
    %223 = vector.broadcast %1 : vector<1x32xf32> to vector<18x32xf32>
    %224 = arith.addf %222, %223 : vector<18x32xf32>
    %cst_153 = arith.constant 0.000000e+00 : f32
    %225 = vector.broadcast %cst_153 : f32 to vector<18x32xf32>
    %226 = arith.maximumf %224, %225 : vector<18x32xf32>
    %227 = arith.truncf %226 : vector<18x32xf32> to vector<18x32xbf16>
    %c18_154 = arith.constant 18 : index
    %c0_155 = arith.constant 0 : index
    %c0_156 = arith.constant 0 : index
    %228 = vector.load %arg4[%c18_154, %c0_155, %c0_156] : memref<25x32x64xbf16, #tpu.memory_space<vmem>>, vector<1x32x64xbf16>
    %229 = vector.shape_cast %228 : vector<1x32x64xbf16> to vector<32x64xbf16>
    %cst_157 = arith.constant dense<0.000000e+00> : vector<18x64xf32>
    %230 = tpu.matmul %227, %229, %cst_157 {dimension_numbers = #tpu.dot_dimension_numbers<[1], [0], [0], [1], [0, 0, 1, 1], [], []>} : vector<18x32xbf16>, vector<32x64xbf16>, vector<18x64xf32> -> vector<18x64xf32>
    %231 = arith.addf %219, %230 : vector<18x64xf32>
    %c19 = arith.constant 19 : index
    %c0_158 = arith.constant 0 : index
    %c0_159 = arith.constant 0 : index
    %232 = vector.load %arg1[%c19, %c0_158, %c0_159] : memref<25x18x128xbf16, #tpu.memory_space<vmem>>, vector<1x18x128xbf16>
    %233 = vector.shape_cast %232 : vector<1x18x128xbf16> to vector<18x128xbf16>
    %cst_160 = arith.constant dense<0.000000e+00> : vector<18x32xf32>
    %234 = tpu.matmul %233, %0, %cst_160 {dimension_numbers = #tpu.dot_dimension_numbers<[1], [0], [0], [1], [0, 0, 1, 1], [], []>} : vector<18x128xbf16>, vector<128x32xbf16>, vector<18x32xf32> -> vector<18x32xf32>
    %235 = vector.broadcast %1 : vector<1x32xf32> to vector<18x32xf32>
    %236 = arith.addf %234, %235 : vector<18x32xf32>
    %cst_161 = arith.constant 0.000000e+00 : f32
    %237 = vector.broadcast %cst_161 : f32 to vector<18x32xf32>
    %238 = arith.maximumf %236, %237 : vector<18x32xf32>
    %239 = arith.truncf %238 : vector<18x32xf32> to vector<18x32xbf16>
    %c19_162 = arith.constant 19 : index
    %c0_163 = arith.constant 0 : index
    %c0_164 = arith.constant 0 : index
    %240 = vector.load %arg4[%c19_162, %c0_163, %c0_164] : memref<25x32x64xbf16, #tpu.memory_space<vmem>>, vector<1x32x64xbf16>
    %241 = vector.shape_cast %240 : vector<1x32x64xbf16> to vector<32x64xbf16>
    %cst_165 = arith.constant dense<0.000000e+00> : vector<18x64xf32>
    %242 = tpu.matmul %239, %241, %cst_165 {dimension_numbers = #tpu.dot_dimension_numbers<[1], [0], [0], [1], [0, 0, 1, 1], [], []>} : vector<18x32xbf16>, vector<32x64xbf16>, vector<18x64xf32> -> vector<18x64xf32>
    %243 = arith.addf %231, %242 : vector<18x64xf32>
    %c20 = arith.constant 20 : index
    %c0_166 = arith.constant 0 : index
    %c0_167 = arith.constant 0 : index
    %244 = vector.load %arg1[%c20, %c0_166, %c0_167] : memref<25x18x128xbf16, #tpu.memory_space<vmem>>, vector<1x18x128xbf16>
    %245 = vector.shape_cast %244 : vector<1x18x128xbf16> to vector<18x128xbf16>
    %cst_168 = arith.constant dense<0.000000e+00> : vector<18x32xf32>
    %246 = tpu.matmul %245, %0, %cst_168 {dimension_numbers = #tpu.dot_dimension_numbers<[1], [0], [0], [1], [0, 0, 1, 1], [], []>} : vector<18x128xbf16>, vector<128x32xbf16>, vector<18x32xf32> -> vector<18x32xf32>
    %247 = vector.broadcast %1 : vector<1x32xf32> to vector<18x32xf32>
    %248 = arith.addf %246, %247 : vector<18x32xf32>
    %cst_169 = arith.constant 0.000000e+00 : f32
    %249 = vector.broadcast %cst_169 : f32 to vector<18x32xf32>
    %250 = arith.maximumf %248, %249 : vector<18x32xf32>
    %251 = arith.truncf %250 : vector<18x32xf32> to vector<18x32xbf16>
    %c20_170 = arith.constant 20 : index
    %c0_171 = arith.constant 0 : index
    %c0_172 = arith.constant 0 : index
    %252 = vector.load %arg4[%c20_170, %c0_171, %c0_172] : memref<25x32x64xbf16, #tpu.memory_space<vmem>>, vector<1x32x64xbf16>
    %253 = vector.shape_cast %252 : vector<1x32x64xbf16> to vector<32x64xbf16>
    %cst_173 = arith.constant dense<0.000000e+00> : vector<18x64xf32>
    %254 = tpu.matmul %251, %253, %cst_173 {dimension_numbers = #tpu.dot_dimension_numbers<[1], [0], [0], [1], [0, 0, 1, 1], [], []>} : vector<18x32xbf16>, vector<32x64xbf16>, vector<18x64xf32> -> vector<18x64xf32>
    %255 = arith.addf %243, %254 : vector<18x64xf32>
    %c21 = arith.constant 21 : index
    %c0_174 = arith.constant 0 : index
    %c0_175 = arith.constant 0 : index
    %256 = vector.load %arg1[%c21, %c0_174, %c0_175] : memref<25x18x128xbf16, #tpu.memory_space<vmem>>, vector<1x18x128xbf16>
    %257 = vector.shape_cast %256 : vector<1x18x128xbf16> to vector<18x128xbf16>
    %cst_176 = arith.constant dense<0.000000e+00> : vector<18x32xf32>
    %258 = tpu.matmul %257, %0, %cst_176 {dimension_numbers = #tpu.dot_dimension_numbers<[1], [0], [0], [1], [0, 0, 1, 1], [], []>} : vector<18x128xbf16>, vector<128x32xbf16>, vector<18x32xf32> -> vector<18x32xf32>
    %259 = vector.broadcast %1 : vector<1x32xf32> to vector<18x32xf32>
    %260 = arith.addf %258, %259 : vector<18x32xf32>
    %cst_177 = arith.constant 0.000000e+00 : f32
    %261 = vector.broadcast %cst_177 : f32 to vector<18x32xf32>
    %262 = arith.maximumf %260, %261 : vector<18x32xf32>
    %263 = arith.truncf %262 : vector<18x32xf32> to vector<18x32xbf16>
    %c21_178 = arith.constant 21 : index
    %c0_179 = arith.constant 0 : index
    %c0_180 = arith.constant 0 : index
    %264 = vector.load %arg4[%c21_178, %c0_179, %c0_180] : memref<25x32x64xbf16, #tpu.memory_space<vmem>>, vector<1x32x64xbf16>
    %265 = vector.shape_cast %264 : vector<1x32x64xbf16> to vector<32x64xbf16>
    %cst_181 = arith.constant dense<0.000000e+00> : vector<18x64xf32>
    %266 = tpu.matmul %263, %265, %cst_181 {dimension_numbers = #tpu.dot_dimension_numbers<[1], [0], [0], [1], [0, 0, 1, 1], [], []>} : vector<18x32xbf16>, vector<32x64xbf16>, vector<18x64xf32> -> vector<18x64xf32>
    %267 = arith.addf %255, %266 : vector<18x64xf32>
    %c22 = arith.constant 22 : index
    %c0_182 = arith.constant 0 : index
    %c0_183 = arith.constant 0 : index
    %268 = vector.load %arg1[%c22, %c0_182, %c0_183] : memref<25x18x128xbf16, #tpu.memory_space<vmem>>, vector<1x18x128xbf16>
    %269 = vector.shape_cast %268 : vector<1x18x128xbf16> to vector<18x128xbf16>
    %cst_184 = arith.constant dense<0.000000e+00> : vector<18x32xf32>
    %270 = tpu.matmul %269, %0, %cst_184 {dimension_numbers = #tpu.dot_dimension_numbers<[1], [0], [0], [1], [0, 0, 1, 1], [], []>} : vector<18x128xbf16>, vector<128x32xbf16>, vector<18x32xf32> -> vector<18x32xf32>
    %271 = vector.broadcast %1 : vector<1x32xf32> to vector<18x32xf32>
    %272 = arith.addf %270, %271 : vector<18x32xf32>
    %cst_185 = arith.constant 0.000000e+00 : f32
    %273 = vector.broadcast %cst_185 : f32 to vector<18x32xf32>
    %274 = arith.maximumf %272, %273 : vector<18x32xf32>
    %275 = arith.truncf %274 : vector<18x32xf32> to vector<18x32xbf16>
    %c22_186 = arith.constant 22 : index
    %c0_187 = arith.constant 0 : index
    %c0_188 = arith.constant 0 : index
    %276 = vector.load %arg4[%c22_186, %c0_187, %c0_188] : memref<25x32x64xbf16, #tpu.memory_space<vmem>>, vector<1x32x64xbf16>
    %277 = vector.shape_cast %276 : vector<1x32x64xbf16> to vector<32x64xbf16>
    %cst_189 = arith.constant dense<0.000000e+00> : vector<18x64xf32>
    %278 = tpu.matmul %275, %277, %cst_189 {dimension_numbers = #tpu.dot_dimension_numbers<[1], [0], [0], [1], [0, 0, 1, 1], [], []>} : vector<18x32xbf16>, vector<32x64xbf16>, vector<18x64xf32> -> vector<18x64xf32>
    %279 = arith.addf %267, %278 : vector<18x64xf32>
    %c23 = arith.constant 23 : index
    %c0_190 = arith.constant 0 : index
    %c0_191 = arith.constant 0 : index
    %280 = vector.load %arg1[%c23, %c0_190, %c0_191] : memref<25x18x128xbf16, #tpu.memory_space<vmem>>, vector<1x18x128xbf16>
    %281 = vector.shape_cast %280 : vector<1x18x128xbf16> to vector<18x128xbf16>
    %cst_192 = arith.constant dense<0.000000e+00> : vector<18x32xf32>
    %282 = tpu.matmul %281, %0, %cst_192 {dimension_numbers = #tpu.dot_dimension_numbers<[1], [0], [0], [1], [0, 0, 1, 1], [], []>} : vector<18x128xbf16>, vector<128x32xbf16>, vector<18x32xf32> -> vector<18x32xf32>
    %283 = vector.broadcast %1 : vector<1x32xf32> to vector<18x32xf32>
    %284 = arith.addf %282, %283 : vector<18x32xf32>
    %cst_193 = arith.constant 0.000000e+00 : f32
    %285 = vector.broadcast %cst_193 : f32 to vector<18x32xf32>
    %286 = arith.maximumf %284, %285 : vector<18x32xf32>
    %287 = arith.truncf %286 : vector<18x32xf32> to vector<18x32xbf16>
    %c23_194 = arith.constant 23 : index
    %c0_195 = arith.constant 0 : index
    %c0_196 = arith.constant 0 : index
    %288 = vector.load %arg4[%c23_194, %c0_195, %c0_196] : memref<25x32x64xbf16, #tpu.memory_space<vmem>>, vector<1x32x64xbf16>
    %289 = vector.shape_cast %288 : vector<1x32x64xbf16> to vector<32x64xbf16>
    %cst_197 = arith.constant dense<0.000000e+00> : vector<18x64xf32>
    %290 = tpu.matmul %287, %289, %cst_197 {dimension_numbers = #tpu.dot_dimension_numbers<[1], [0], [0], [1], [0, 0, 1, 1], [], []>} : vector<18x32xbf16>, vector<32x64xbf16>, vector<18x64xf32> -> vector<18x64xf32>
    %291 = arith.addf %279, %290 : vector<18x64xf32>
    %c24 = arith.constant 24 : index
    %c0_198 = arith.constant 0 : index
    %c0_199 = arith.constant 0 : index
    %292 = vector.load %arg1[%c24, %c0_198, %c0_199] : memref<25x18x128xbf16, #tpu.memory_space<vmem>>, vector<1x18x128xbf16>
    %293 = vector.shape_cast %292 : vector<1x18x128xbf16> to vector<18x128xbf16>
    %cst_200 = arith.constant dense<0.000000e+00> : vector<18x32xf32>
    %294 = tpu.matmul %293, %0, %cst_200 {dimension_numbers = #tpu.dot_dimension_numbers<[1], [0], [0], [1], [0, 0, 1, 1], [], []>} : vector<18x128xbf16>, vector<128x32xbf16>, vector<18x32xf32> -> vector<18x32xf32>
    %295 = vector.broadcast %1 : vector<1x32xf32> to vector<18x32xf32>
    %296 = arith.addf %294, %295 : vector<18x32xf32>
    %cst_201 = arith.constant 0.000000e+00 : f32
    %297 = vector.broadcast %cst_201 : f32 to vector<18x32xf32>
    %298 = arith.maximumf %296, %297 : vector<18x32xf32>
    %299 = arith.truncf %298 : vector<18x32xf32> to vector<18x32xbf16>
    %c24_202 = arith.constant 24 : index
    %c0_203 = arith.constant 0 : index
    %c0_204 = arith.constant 0 : index
    %300 = vector.load %arg4[%c24_202, %c0_203, %c0_204] : memref<25x32x64xbf16, #tpu.memory_space<vmem>>, vector<1x32x64xbf16>
    %301 = vector.shape_cast %300 : vector<1x32x64xbf16> to vector<32x64xbf16>
    %cst_205 = arith.constant dense<0.000000e+00> : vector<18x64xf32>
    %302 = tpu.matmul %299, %301, %cst_205 {dimension_numbers = #tpu.dot_dimension_numbers<[1], [0], [0], [1], [0, 0, 1, 1], [], []>} : vector<18x32xbf16>, vector<32x64xbf16>, vector<18x64xf32> -> vector<18x64xf32>
    %303 = arith.addf %291, %302 : vector<18x64xf32>
    %304 = vector.broadcast %2 : vector<1x64xf32> to vector<18x64xf32>
    %305 = arith.addf %303, %304 : vector<18x64xf32>
    %cst_206 = arith.constant 0.000000e+00 : f32
    %306 = vector.broadcast %cst_206 : f32 to vector<18x64xf32>
    %307 = arith.maximumf %305, %306 : vector<18x64xf32>
    %c0_207 = arith.constant 0 : index
    %c0_208 = arith.constant 0 : index
    %308 = vector.load %arg11[%c0_207, %c0_208] : memref<18x64xf32, #tpu.memory_space<vmem>>, vector<18x64xf32>
    tpu.vector_store %arg11[%c0_207, %c0_208], %307 {strides = array<i32>} : memref<18x64xf32, #tpu.memory_space<vmem>>, vector<18x64xf32>,
    %cst_209 = arith.constant 0.000000e+00 : f32
    %309 = vector.broadcast %cst_209 : f32 to vector<2x32xf32>
    %c0_210 = arith.constant 0 : index
    %c0_211 = arith.constant 0 : index
    %310 = vector.load %arg11[%c0_210, %c0_211] : memref<18x64xf32, #tpu.memory_space<vmem>>, vector<2x64xf32>
    %c0_212 = arith.constant 0 : index
    %c0_213 = arith.constant 0 : index
    %c0_214 = arith.constant 0 : index
    %311 = vector.load %arg6[%c0_212, %c0_213, %c0_214] : memref<9x64x32xf32, #tpu.memory_space<vmem>>, vector<1x64x32xf32>
    %312 = vector.shape_cast %311 : vector<1x64x32xf32> to vector<64x32xf32>
    %cst_215 = arith.constant dense<0.000000e+00> : vector<2x32xf32>
    %313 = tpu.matmul %310, %312, %cst_215 {dimension_numbers = #tpu.dot_dimension_numbers<[1], [0], [0], [1], [0, 0, 1, 1], [], []>} : vector<2x64xf32>, vector<64x32xf32>, vector<2x32xf32> -> vector<2x32xf32>
    %314 = arith.addf %309, %313 : vector<2x32xf32>
    %c2_216 = arith.constant 2 : index
    %c0_217 = arith.constant 0 : index
    %315 = vector.load %arg11[%c2_216, %c0_217] : memref<18x64xf32, #tpu.memory_space<vmem>>, vector<2x64xf32>
    %c1_218 = arith.constant 1 : index
    %c0_219 = arith.constant 0 : index
    %c0_220 = arith.constant 0 : index
    %316 = vector.load %arg6[%c1_218, %c0_219, %c0_220] : memref<9x64x32xf32, #tpu.memory_space<vmem>>, vector<1x64x32xf32>
    %317 = vector.shape_cast %316 : vector<1x64x32xf32> to vector<64x32xf32>
    %cst_221 = arith.constant dense<0.000000e+00> : vector<2x32xf32>
    %318 = tpu.matmul %315, %317, %cst_221 {dimension_numbers = #tpu.dot_dimension_numbers<[1], [0], [0], [1], [0, 0, 1, 1], [], []>} : vector<2x64xf32>, vector<64x32xf32>, vector<2x32xf32> -> vector<2x32xf32>
    %319 = arith.addf %314, %318 : vector<2x32xf32>
    %c4_222 = arith.constant 4 : index
    %c0_223 = arith.constant 0 : index
    %320 = vector.load %arg11[%c4_222, %c0_223] : memref<18x64xf32, #tpu.memory_space<vmem>>, vector<2x64xf32>
    %c2_224 = arith.constant 2 : index
    %c0_225 = arith.constant 0 : index
    %c0_226 = arith.constant 0 : index
    %321 = vector.load %arg6[%c2_224, %c0_225, %c0_226] : memref<9x64x32xf32, #tpu.memory_space<vmem>>, vector<1x64x32xf32>
    %322 = vector.shape_cast %321 : vector<1x64x32xf32> to vector<64x32xf32>
    %cst_227 = arith.constant dense<0.000000e+00> : vector<2x32xf32>
    %323 = tpu.matmul %320, %322, %cst_227 {dimension_numbers = #tpu.dot_dimension_numbers<[1], [0], [0], [1], [0, 0, 1, 1], [], []>} : vector<2x64xf32>, vector<64x32xf32>, vector<2x32xf32> -> vector<2x32xf32>
    %324 = arith.addf %319, %323 : vector<2x32xf32>
    %c6_228 = arith.constant 6 : index
    %c0_229 = arith.constant 0 : index
    %325 = vector.load %arg11[%c6_228, %c0_229] : memref<18x64xf32, #tpu.memory_space<vmem>>, vector<2x64xf32>
    %c3_230 = arith.constant 3 : index
    %c0_231 = arith.constant 0 : index
    %c0_232 = arith.constant 0 : index
    %326 = vector.load %arg6[%c3_230, %c0_231, %c0_232] : memref<9x64x32xf32, #tpu.memory_space<vmem>>, vector<1x64x32xf32>
    %327 = vector.shape_cast %326 : vector<1x64x32xf32> to vector<64x32xf32>
    %cst_233 = arith.constant dense<0.000000e+00> : vector<2x32xf32>
    %328 = tpu.matmul %325, %327, %cst_233 {dimension_numbers = #tpu.dot_dimension_numbers<[1], [0], [0], [1], [0, 0, 1, 1], [], []>} : vector<2x64xf32>, vector<64x32xf32>, vector<2x32xf32> -> vector<2x32xf32>
    %329 = arith.addf %324, %328 : vector<2x32xf32>
    %c8_234 = arith.constant 8 : index
    %c0_235 = arith.constant 0 : index
    %330 = vector.load %arg11[%c8_234, %c0_235] : memref<18x64xf32, #tpu.memory_space<vmem>>, vector<2x64xf32>
    %c4_236 = arith.constant 4 : index
    %c0_237 = arith.constant 0 : index
    %c0_238 = arith.constant 0 : index
    %331 = vector.load %arg6[%c4_236, %c0_237, %c0_238] : memref<9x64x32xf32, #tpu.memory_space<vmem>>, vector<1x64x32xf32>
    %332 = vector.shape_cast %331 : vector<1x64x32xf32> to vector<64x32xf32>
    %cst_239 = arith.constant dense<0.000000e+00> : vector<2x32xf32>
    %333 = tpu.matmul %330, %332, %cst_239 {dimension_numbers = #tpu.dot_dimension_numbers<[1], [0], [0], [1], [0, 0, 1, 1], [], []>} : vector<2x64xf32>, vector<64x32xf32>, vector<2x32xf32> -> vector<2x32xf32>
    %334 = arith.addf %329, %333 : vector<2x32xf32>
    %c10_240 = arith.constant 10 : index
    %c0_241 = arith.constant 0 : index
    %335 = vector.load %arg11[%c10_240, %c0_241] : memref<18x64xf32, #tpu.memory_space<vmem>>, vector<2x64xf32>
    %c5_242 = arith.constant 5 : index
    %c0_243 = arith.constant 0 : index
    %c0_244 = arith.constant 0 : index
    %336 = vector.load %arg6[%c5_242, %c0_243, %c0_244] : memref<9x64x32xf32, #tpu.memory_space<vmem>>, vector<1x64x32xf32>
    %337 = vector.shape_cast %336 : vector<1x64x32xf32> to vector<64x32xf32>
    %cst_245 = arith.constant dense<0.000000e+00> : vector<2x32xf32>
    %338 = tpu.matmul %335, %337, %cst_245 {dimension_numbers = #tpu.dot_dimension_numbers<[1], [0], [0], [1], [0, 0, 1, 1], [], []>} : vector<2x64xf32>, vector<64x32xf32>, vector<2x32xf32> -> vector<2x32xf32>
    %339 = arith.addf %334, %338 : vector<2x32xf32>
    %c12_246 = arith.constant 12 : index
    %c0_247 = arith.constant 0 : index
    %340 = vector.load %arg11[%c12_246, %c0_247] : memref<18x64xf32, #tpu.memory_space<vmem>>, vector<2x64xf32>
    %c6_248 = arith.constant 6 : index
    %c0_249 = arith.constant 0 : index
    %c0_250 = arith.constant 0 : index
    %341 = vector.load %arg6[%c6_248, %c0_249, %c0_250] : memref<9x64x32xf32, #tpu.memory_space<vmem>>, vector<1x64x32xf32>
    %342 = vector.shape_cast %341 : vector<1x64x32xf32> to vector<64x32xf32>
    %cst_251 = arith.constant dense<0.000000e+00> : vector<2x32xf32>
    %343 = tpu.matmul %340, %342, %cst_251 {dimension_numbers = #tpu.dot_dimension_numbers<[1], [0], [0], [1], [0, 0, 1, 1], [], []>} : vector<2x64xf32>, vector<64x32xf32>, vector<2x32xf32> -> vector<2x32xf32>
    %344 = arith.addf %339, %343 : vector<2x32xf32>
    %c14_252 = arith.constant 14 : index
    %c0_253 = arith.constant 0 : index
    %345 = vector.load %arg11[%c14_252, %c0_253] : memref<18x64xf32, #tpu.memory_space<vmem>>, vector<2x64xf32>
    %c7_254 = arith.constant 7 : index
    %c0_255 = arith.constant 0 : index
    %c0_256 = arith.constant 0 : index
    %346 = vector.load %arg6[%c7_254, %c0_255, %c0_256] : memref<9x64x32xf32, #tpu.memory_space<vmem>>, vector<1x64x32xf32>
    %347 = vector.shape_cast %346 : vector<1x64x32xf32> to vector<64x32xf32>
    %cst_257 = arith.constant dense<0.000000e+00> : vector<2x32xf32>
    %348 = tpu.matmul %345, %347, %cst_257 {dimension_numbers = #tpu.dot_dimension_numbers<[1], [0], [0], [1], [0, 0, 1, 1], [], []>} : vector<2x64xf32>, vector<64x32xf32>, vector<2x32xf32> -> vector<2x32xf32>
    %349 = arith.addf %344, %348 : vector<2x32xf32>
    %c16_258 = arith.constant 16 : index
    %c0_259 = arith.constant 0 : index
    %350 = vector.load %arg11[%c16_258, %c0_259] : memref<18x64xf32, #tpu.memory_space<vmem>>, vector<2x64xf32>
    %c8_260 = arith.constant 8 : index
    %c0_261 = arith.constant 0 : index
    %c0_262 = arith.constant 0 : index
    %351 = vector.load %arg6[%c8_260, %c0_261, %c0_262] : memref<9x64x32xf32, #tpu.memory_space<vmem>>, vector<1x64x32xf32>
    %352 = vector.shape_cast %351 : vector<1x64x32xf32> to vector<64x32xf32>
    %cst_263 = arith.constant dense<0.000000e+00> : vector<2x32xf32>
    %353 = tpu.matmul %350, %352, %cst_263 {dimension_numbers = #tpu.dot_dimension_numbers<[1], [0], [0], [1], [0, 0, 1, 1], [], []>} : vector<2x64xf32>, vector<64x32xf32>, vector<2x32xf32> -> vector<2x32xf32>
    %354 = arith.addf %349, %353 : vector<2x32xf32>
    %c0_264 = arith.constant 0 : index
    %c0_265 = arith.constant 0 : index
    %355 = vector.load %arg7[%c0_264, %c0_265] : memref<1x32xf32, #tpu.memory_space<vmem>>, vector<1x32xf32>
    %356 = vector.broadcast %355 : vector<1x32xf32> to vector<2x32xf32>
    %357 = arith.addf %354, %356 : vector<2x32xf32>
    %cst_266 = arith.constant 0.000000e+00 : f32
    %358 = vector.broadcast %cst_266 : f32 to vector<2x32xf32>
    %359 = arith.maximumf %357, %358 : vector<2x32xf32>
    %c0_267 = arith.constant 0 : index
    %c0_268 = arith.constant 0 : index
    %360 = vector.load %arg8[%c0_267, %c0_268] : memref<32x128xf32, #tpu.memory_space<vmem>>, vector<32x128xf32>
    %cst_269 = arith.constant dense<0.000000e+00> : vector<2x128xf32>
    %361 = tpu.matmul %359, %360, %cst_269 {dimension_numbers = #tpu.dot_dimension_numbers<[1], [0], [0], [1], [0, 0, 1, 1], [], []>} : vector<2x32xf32>, vector<32x128xf32>, vector<2x128xf32> -> vector<2x128xf32>
    %c0_270 = arith.constant 0 : index
    %c0_271 = arith.constant 0 : index
    %362 = vector.load %arg9[%c0_270, %c0_271] : memref<1x128xf32, #tpu.memory_space<vmem>>, vector<1x128xf32>
    %363 = vector.broadcast %362 : vector<1x128xf32> to vector<2x128xf32>
    %364 = arith.addf %361, %363 : vector<2x128xf32>
    %c0_272 = arith.constant 0 : index
    %c0_273 = arith.constant 0 : index
    %365 = vector.load %arg10[%c0_272, %c0_273] : memref<2x128xf32, #tpu.memory_space<vmem>>, vector<2x128xf32>
    tpu.vector_store %arg10[%c0_272, %c0_273], %364 {strides = array<i32>} : memref<2x128xf32, #tpu.memory_space<vmem>>, vector<2x128xf32>,
    return
  }
  func.func @transform_0(%arg0: i32) -> (i32, i32, i32) {
    %c0_i32 = arith.constant 0 : i32
    %c0_i32_0 = arith.constant 0 : i32
    %c0_i32_1 = arith.constant 0 : i32
    return %c0_i32, %arg0, %c0_i32_0 : i32, i32, i32
  }
  func.func @transform_1(%arg0: i32) -> (i32, i32) {
    %c0_i32 = arith.constant 0 : i32
    %c0_i32_0 = arith.constant 0 : i32
    %c0_i32_1 = arith.constant 0 : i32
    return %c0_i32, %c0_i32_0 : i32, i32
  }
  func.func @transform_2(%arg0: i32) -> (i32, i32) {
    %c0_i32 = arith.constant 0 : i32
    %c0_i32_0 = arith.constant 0 : i32
    %c0_i32_1 = arith.constant 0 : i32
    return %c0_i32, %c0_i32_0 : i32, i32
  }
  func.func @transform_3(%arg0: i32) -> (i32, i32, i32) {
    %c0_i32 = arith.constant 0 : i32
    %c0_i32_0 = arith.constant 0 : i32
    %c0_i32_1 = arith.constant 0 : i32
    %c0_i32_2 = arith.constant 0 : i32
    return %c0_i32, %c0_i32_0, %c0_i32_1 : i32, i32, i32
  }
  func.func @transform_4(%arg0: i32) -> (i32, i32) {
    %c0_i32 = arith.constant 0 : i32
    %c0_i32_0 = arith.constant 0 : i32
    %c0_i32_1 = arith.constant 0 : i32
    return %c0_i32, %c0_i32_0 : i32, i32
  }
  func.func @transform_5(%arg0: i32) -> (i32, i32, i32) {
    %c0_i32 = arith.constant 0 : i32
    %c0_i32_0 = arith.constant 0 : i32
    %c0_i32_1 = arith.constant 0 : i32
    %c0_i32_2 = arith.constant 0 : i32
    return %c0_i32, %c0_i32_0, %c0_i32_1 : i32, i32, i32
  }
  func.func @transform_6(%arg0: i32) -> (i32, i32) {
    %c0_i32 = arith.constant 0 : i32
    %c0_i32_0 = arith.constant 0 : i32
    %c0_i32_1 = arith.constant 0 : i32
    return %c0_i32, %c0_i32_0 : i32, i32
  }
  func.func @transform_7(%arg0: i32) -> (i32, i32) {
    %c0_i32 = arith.constant 0 : i32
    %c0_i32_0 = arith.constant 0 : i32
    %c0_i32_1 = arith.constant 0 : i32
    return %c0_i32, %c0_i32_0 : i32, i32
  }
  func.func @transform_8(%arg0: i32) -> (i32, i32) {
    %c0_i32 = arith.constant 0 : i32
    %c0_i32_0 = arith.constant 0 : i32
    %c0_i32_1 = arith.constant 0 : i32
    return %c0_i32, %c0_i32_0 : i32, i32
  }
  func.func @transform_9(%arg0: i32) -> (i32, i32) {
    %c0_i32 = arith.constant 0 : i32
    %c0_i32_0 = arith.constant 0 : i32
    return %arg0, %c0_i32 : i32, i32
  }
}

</mosaic_0001>

<llo_original>
// kernel: data_efficient_convnet_forward.1
$region0: #{data_efficient_convnet_forward.1}
  #allocation0 [shape = 'u32[]', space=smem, size = 0x4, offset = 0x4, fixed_abs, tag = 'smem constant byte address 0x4 - core index']
  #allocation1 [shape = 'u32[144,128]{1,0:T(1,128)}', space=vmem, size = 0x12000, scoped, tag = 'internal scratch']
  #allocation2 [shape = 'f32[18,64]{1,0:T(8,128)}', space=vmem, size = 0x3000, scoped, tag = 'scratch operand']
  %s0 = inlined_call_operand.vmem [shape: bf16[25,18,128], index: 0, kind: input, shape index: {}]
  %s1 = inlined_call_operand.vmem [shape: bf16[128,32], index: 1, kind: input, shape index: {}]
  %s2 = inlined_call_operand.vmem [shape: f32[1,32], index: 2, kind: input, shape index: {}]
  %s3 = inlined_call_operand.vmem [shape: bf16[25,32,64], index: 3, kind: input, shape index: {}]
  %s4 = inlined_call_operand.vmem [shape: f32[1,64], index: 4, kind: input, shape index: {}]
  %s5 = inlined_call_operand.vmem [shape: f32[9,64,32], index: 5, kind: input, shape index: {}]
  %s6 = inlined_call_operand.vmem [shape: f32[1,32], index: 6, kind: input, shape index: {}]
  %s7 = inlined_call_operand.vmem [shape: f32[32,128], index: 7, kind: input, shape index: {}]
  %s8 = inlined_call_operand.vmem [shape: f32[1,128], index: 8, kind: input, shape index: {}]
  %s9 = inlined_call_operand.hbm [shape: f32[2,128], index: 9, kind: output, shape index: {}]
  %s10 = sld [smem:[#allocation0]]
  $region46: #{data_efficient_convnet_forward.1} parent=0
    _
  %s12 = ssub.s32 1, %s10
  %s13 = scalar_select 0, %s12, %s10
  $region1: #{data_efficient_convnet_forward.1} parent=0
    #allocation3 [shape = 'u8[1024]{0}', space=vmem, size = 0x400, scoped, tag = 'output window, operand 0, single buffered']
    #allocation4 [shape = 's32[1]{0}', space=sflag, size = 0x4, scoped, tag = 'scoped memory for data_efficient_convnet_forward.1']
    %14 = vsyncpa [#allocation4], 0
    // Predicated region
    $region2: #{data_efficient_convnet_forward.1} parent=1 // pred_check
      _
    $region3: #{data_efficient_convnet_forward.1} parent=1 // pred_check_branch
      %16 = sbr.rel (0) target = $region5
    $region4: #{data_efficient_convnet_forward.1} parent=1 // pred_region
      _
    $region5: #{data_efficient_convnet_forward.1} parent=1 // pred_fallthru
      _
    // Predicated region
    $region6: #{data_efficient_convnet_forward.1} parent=1 // pred_check
      _
    $region7: #{data_efficient_convnet_forward.1} parent=1 // pred_check_branch
      %18 = sbr.rel (0) target = $region9
    $region8: #{data_efficient_convnet_forward.1} parent=1 // pred_region
      _
    $region9: #{data_efficient_convnet_forward.1} parent=1 // pred_fallthru
      _
    // Predicated region
    $region10: #{data_efficient_convnet_forward.1} parent=1 // pred_check
      _
    $region11: #{data_efficient_convnet_forward.1} parent=1 // pred_check_branch
      %20 = sbr.rel (0) target = $region13
    $region12: #{data_efficient_convnet_forward.1} parent=1 // pred_region
      _
    $region13: #{data_efficient_convnet_forward.1} parent=1 // pred_fallthru
      _
    // Predicated region
    $region14: #{data_efficient_convnet_forward.1} parent=1 // pred_check
      _
    $region15: #{data_efficient_convnet_forward.1} parent=1 // pred_check_branch
      %22 = sbr.rel (0) target = $region17
    $region16: #{data_efficient_convnet_forward.1} parent=1 // pred_region
      _
    $region17: #{data_efficient_convnet_forward.1} parent=1 // pred_fallthru
      _
    // Predicated region
    $region18: #{data_efficient_convnet_forward.1} parent=1 // pred_check
      _
    $region19: #{data_efficient_convnet_forward.1} parent=1 // pred_check_branch
      %24 = sbr.rel (0) target = $region21
    $region20: #{data_efficient_convnet_forward.1} parent=1 // pred_region
      _
    $region21: #{data_efficient_convnet_forward.1} parent=1 // pred_fallthru
      _
    // Predicated region
    $region22: #{data_efficient_convnet_forward.1} parent=1 // pred_check
      _
    $region23: #{data_efficient_convnet_forward.1} parent=1 // pred_check_branch
      %26 = sbr.rel (0) target = $region25
    $region24: #{data_efficient_convnet_forward.1} parent=1 // pred_region
      _
    $region25: #{data_efficient_convnet_forward.1} parent=1 // pred_fallthru
      _
    // Predicated region
    $region26: #{data_efficient_convnet_forward.1} parent=1 // pred_check
      _
    $region27: #{data_efficient_convnet_forward.1} parent=1 // pred_check_branch
      %28 = sbr.rel (0) target = $region29
    $region28: #{data_efficient_convnet_forward.1} parent=1 // pred_region
      _
    $region29: #{data_efficient_convnet_forward.1} parent=1 // pred_fallthru
      _
    // Predicated region
    $region30: #{data_efficient_convnet_forward.1} parent=1 // pred_check
      _
    $region31: #{data_efficient_convnet_forward.1} parent=1 // pred_check_branch
      %30 = sbr.rel (0) target = $region33
    $region32: #{data_efficient_convnet_forward.1} parent=1 // pred_region
      _
    $region33: #{data_efficient_convnet_forward.1} parent=1 // pred_fallthru
      _
    // Predicated region
    $region34: #{data_efficient_convnet_forward.1} parent=1 // pred_check
      _
    $region35: #{data_efficient_convnet_forward.1} parent=1 // pred_check_branch
      %32 = sbr.rel (0) target = $region37
    $region36: #{data_efficient_convnet_forward.1} parent=1 // pred_region
      _
    $region37: #{data_efficient_convnet_forward.1} parent=1 // pred_fallthru
      _
    %v34 = vld [vmem:[%s1] sm:$0xf]
    %v35 = vld [vmem:[%s1 + $0x4] sm:$0xf]
    %v36 = vld [vmem:[%s1 + $0x8] sm:$0xf]
    %v37 = vld [vmem:[%s1 + $0xc] sm:$0xf]
    %v38 = vld [vmem:[%s1 + $0x10] sm:$0xf]
    %v39 = vld [vmem:[%s1 + $0x14] sm:$0xf]
    %v40 = vld [vmem:[%s1 + $0x18] sm:$0xf]
    %v41 = vld [vmem:[%s1 + $0x1c] sm:$0xf]
    %v42 = vld [vmem:[%s1 + $0x20] sm:$0xf]
    %v43 = vld [vmem:[%s1 + $0x24] sm:$0xf]
    %v44 = vld [vmem:[%s1 + $0x28] sm:$0xf]
    %v45 = vld [vmem:[%s1 + $0x2c] sm:$0xf]
    %v46 = vld [vmem:[%s1 + $0x30] sm:$0xf]
    %v47 = vld [vmem:[%s1 + $0x34] sm:$0xf]
    %v48 = vld [vmem:[%s1 + $0x38] sm:$0xf]
    %v49 = vld [vmem:[%s1 + $0x3c] sm:$0xf]
    %v50 = vld [vmem:[%s2] sm:$0x1]
    %v51 = vld [vmem:[%s4] sm:$0x1]
    %v52 = vld [vmem:[%s0] sm:$0xf]
    %v53 = vld [vmem:[%s0 + $0x4] sm:$0xf]
    %v54 = vld [vmem:[%s0 + $0x8] sm:$0x1]
    %v56 = vlaneseq
    %v57 = vshrl.u32 %v56, 7
    %v58 = vsub.s32 0, %v57
    %v59 = vrot.slane %v50, %v58
    %v64 = vunpack.c.l.b16 %v52
    %v65 = vunpack.c.l.b16 %v53
    %v66 = vunpack.c.l.b16 %v54
    %v67 = vpack.c.b16 %v65, %v64
    %v68 = vpack.c.b16 %v66, %v66
    %v87 = vunpack.c.l.b16 %v34
    %v88 = vunpack.c.l.b16 %v35
    %v89 = vunpack.c.l.b16 %v36
    %v90 = vunpack.c.l.b16 %v37
    %v91 = vunpack.c.l.b16 %v38
    %v92 = vunpack.c.l.b16 %v39
    %v93 = vunpack.c.l.b16 %v40
    %v94 = vunpack.c.l.b16 %v41
    %v95 = vunpack.c.l.b16 %v42
    %v96 = vunpack.c.l.b16 %v43
    %v97 = vunpack.c.l.b16 %v44
    %v98 = vunpack.c.l.b16 %v45
    %v99 = vunpack.c.l.b16 %v46
    %v100 = vunpack.c.l.b16 %v47
    %v101 = vunpack.c.l.b16 %v48
    %v102 = vunpack.c.l.b16 %v49
    %v103 = vpack.c.b16 %v88, %v87
    %v104 = vpack.c.b16 %v90, %v89
    %v105 = vpack.c.b16 %v92, %v91
    %v106 = vpack.c.b16 %v94, %v93
    %v107 = vpack.c.b16 %v96, %v95
    %v108 = vpack.c.b16 %v98, %v97
    %v109 = vpack.c.b16 %v100, %v99
    %v110 = vpack.c.b16 %v102, %v101
    %119 = vmatprep.subr.bf16.mxu0 0
    %120 = vmatpush1.bf16.msra.mxu0 %v103
    %121 = vmatprep.subr.bf16.mxu0 0
    %122 = vmatpush1.bf16.msra.mxu0 %v104
    %123 = vmatprep.subr.bf16.mxu0 0
    %124 = vmatpush1.bf16.msra.mxu0 %v105
    %125 = vmatprep.subr.bf16.mxu0 0
    %126 = vmatpush1.bf16.msra.mxu0 %v106
    %127 = vmatprep.subr.bf16.mxu0 0
    %128 = vmatpush1.bf16.msra.mxu0 %v107
    %129 = vmatprep.subr.bf16.mxu0 0
    %130 = vmatpush1.bf16.msra.mxu0 %v108
    %131 = vmatprep.subr.bf16.mxu0 0
    %132 = vmatpush1.bf16.msra.mxu0 %v109
    %133 = vmatprep.subr.bf16.mxu0 0
    %134 = vmatpush1.bf16.msra.mxu0 %v110
    %135 = vmatprep.subr.bf16.mxu0 0
    %136 = vmatpush1.bf16.msra.mxu0 0
    %137 = vmatprep.subr.bf16.mxu0 0
    %138 = vmatpush1.bf16.msra.mxu0 0
    %139 = vmatprep.subr.bf16.mxu0 0
    %140 = vmatpush1.bf16.msra.mxu0 0
    %141 = vmatprep.subr.bf16.mxu0 0
    %142 = vmatpush1.bf16.msra.mxu0 0
    %143 = vmatprep.subr.bf16.mxu0 0
    %144 = vmatpush1.bf16.msra.mxu0 0
    %145 = vmatprep.subr.bf16.mxu0 0
    %146 = vmatpush1.bf16.msra.mxu0 0
    %147 = vmatprep.subr.bf16.mxu0 0
    %148 = vmatpush1.bf16.msra.mxu0 0
    %149 = vmatprep.subr.bf16.mxu0 0
    %150 = vmatpush1.bf16.msra.mxu0 0
    %151 = vmatprep.mubr.bf16.mxu0 0
    %152 = vmatmul.mubr.bf16.gmra.mrb[0].mxu0 %v67
    %v153 = vpop.f32.mrb[0].mxu0
    %v154 = vadd.f32 %v59, %v153
    %v155 = vpop.f32.mrb[0].mxu0
    %v156 = vpop.f32.mrb[0].mxu0
    %v157 = vadd.f32 %v59, %v156
    %v158 = vpop.f32.mrb[0].mxu0
    %159 = vmatprep.mubr.bf16.mxu0 0
    %160 = vmatmul.mubr.bf16.gmra.mrb[0].mxu0 %v68
    %v161 = vpop.f32.mrb[0].mxu0
    %v162 = vadd.f32 %v59, %v161
    %v163 = vpop.f32.mrb[0].mxu0
    %v164 = vpop.f32.mrb[0].mxu0
    %v165 = vpop.f32.mrb[0].mxu0
    %166 = vdwg.mxu0
    %v167 = vmax.f32 %v154, 0.0
    %v168 = vmax.f32 %v157, 0.0
    %v169 = vmax.f32 %v162, 0.0
    %v170 = vpack.c.bf16 %v168, %v167
    %v171 = vpack.c.bf16 %v169, %v169
    %v172 = vld [vmem:[%s3] sm:$0xf]
    %v173 = vld [vmem:[%s3 + $0x4] sm:$0xf]
    %v174 = vld [vmem:[%s3 + $0x8] sm:$0xf]
    %v175 = vld [vmem:[%s3 + $0xc] sm:$0xf]
    %s176 = scalar_lea.vmem %s0, 12
    %v177 = vld [vmem:[%s176] sm:$0xf]
    %v178 = vld [vmem:[%s176 + $0x4] sm:$0xf]
    %v179 = vld [vmem:[%s176 + $0x8] sm:$0x1]
    %v183 = vunpack.c.l.b16 %v177
    %v184 = vunpack.c.l.b16 %v178
    %v185 = vunpack.c.l.b16 %v179
    %v186 = vpack.c.b16 %v184, %v183
    %v187 = vpack.c.b16 %v185, %v185
    %190 = vmatprep.subr.bf16.mxu0 0
    %191 = vmatpush1.bf16.msra.mxu0 %v103
    %192 = vmatprep.subr.bf16.mxu0 0
    %193 = vmatpush1.bf16.msra.mxu0 %v104
    %194 = vmatprep.subr.bf16.mxu0 0
    %195 = vmatpush1.bf16.msra.mxu0 %v105
    %196 = vmatprep.subr.bf16.mxu0 0
    %197 = vmatpush1.bf16.msra.mxu0 %v106
    %198 = vmatprep.subr.bf16.mxu0 0
    %199 = vmatpush1.bf16.msra.mxu0 %v107
    %200 = vmatprep.subr.bf16.mxu0 0
    %201 = vmatpush1.bf16.msra.mxu0 %v108
    %202 = vmatprep.subr.bf16.mxu0 0
    %203 = vmatpush1.bf16.msra.mxu0 %v109
    %204 = vmatprep.subr.bf16.mxu0 0
    %205 = vmatpush1.bf16.msra.mxu0 %v110
    %206 = vmatprep.subr.bf16.mxu0 0
    %207 = vmatpush1.bf16.msra.mxu0 0
    %208 = vmatprep.subr.bf16.mxu0 0
    %209 = vmatpush1.bf16.msra.mxu0 0
    %210 = vmatprep.subr.bf16.mxu0 0
    %211 = vmatpush1.bf16.msra.mxu0 0
    %212 = vmatprep.subr.bf16.mxu0 0
    %213 = vmatpush1.bf16.msra.mxu0 0
    %214 = vmatprep.subr.bf16.mxu0 0
    %215 = vmatpush1.bf16.msra.mxu0 0
    %216 = vmatprep.subr.bf16.mxu0 0
    %217 = vmatpush1.bf16.msra.mxu0 0
    %218 = vmatprep.subr.bf16.mxu0 0
    %219 = vmatpush1.bf16.msra.mxu0 0
    %220 = vmatprep.subr.bf16.mxu0 0
    %221 = vmatpush1.bf16.msra.mxu0 0
    %222 = vmatprep.mubr.bf16.mxu0 0
    %223 = vmatmul.mubr.bf16.gmra.mrb[0].mxu0 %v186
    %v224 = vpop.f32.mrb[0].mxu0
    %v225 = vadd.f32 %v59, %v224
    %v226 = vpop.f32.mrb[0].mxu0
    %v227 = vpop.f32.mrb[0].mxu0
    %v228 = vadd.f32 %v59, %v227
    %v229 = vpop.f32.mrb[0].mxu0
    %230 = vmatprep.mubr.bf16.mxu0 0
    %231 = vmatmul.mubr.bf16.gmra.mrb[0].mxu0 %v187
    %v232 = vpop.f32.mrb[0].mxu0
    %v233 = vadd.f32 %v59, %v232
    %v234 = vpop.f32.mrb[0].mxu0
    %v235 = vpop.f32.mrb[0].mxu0
    %v236 = vpop.f32.mrb[0].mxu0
    %237 = vdwg.mxu0
    %v238 = vmax.f32 %v225, 0.0
    %v239 = vmax.f32 %v228, 0.0
    %v240 = vmax.f32 %v233, 0.0
    %v241 = vpack.c.bf16 %v239, %v238
    %v242 = vpack.c.bf16 %v240, %v240
    %s243 = scalar_lea.vmem %s3, 16
    %v244 = vld [vmem:[%s243] sm:$0xf]
    %v245 = vld [vmem:[%s243 + $0x4] sm:$0xf]
    %v246 = vld [vmem:[%s243 + $0x8] sm:$0xf]
    %v247 = vld [vmem:[%s243 + $0xc] sm:$0xf]
    %v252 = vunpack.c.l.b16 %v244
    %v253 = vunpack.c.l.b16 %v245
    %v254 = vunpack.c.l.b16 %v246
    %v255 = vunpack.c.l.b16 %v247
    %v256 = vpack.c.b16 %v253, %v252
    %v257 = vpack.c.b16 %v255, %v254
    %vm260 = vcmask 261120
    %v262 = vsel %vm260, %v241, 0
    %v265 = vsel %vm260, %v242, 0
    %267 = vmatprep.subr.bf16.mxu0 0
    %268 = vmatpush1.bf16.msra.mxu0 %v256
    %269 = vmatprep.subr.bf16.mxu0 0
    %270 = vmatpush1.bf16.msra.mxu0 %v257
    %271 = vmatprep.subr.bf16.mxu0 0
    %272 = vmatpush1.bf16.msra.mxu0 0
    %273 = vmatprep.subr.bf16.mxu0 0
    %274 = vmatpush1.bf16.msra.mxu0 0
    %275 = vmatprep.subr.bf16.mxu0 0
    %276 = vmatpush1.bf16.msra.mxu0 0
    %277 = vmatprep.subr.bf16.mxu0 0
    %278 = vmatpush1.bf16.msra.mxu0 0
    %279 = vmatprep.subr.bf16.mxu0 0
    %280 = vmatpush1.bf16.msra.mxu0 0
    %281 = vmatprep.subr.bf16.mxu0 0
    %282 = vmatpush1.bf16.msra.mxu0 0
    %283 = vmatprep.subr.bf16.mxu0 0
    %284 = vmatpush1.bf16.msra.mxu0 0
    %285 = vmatprep.subr.bf16.mxu0 0
    %286 = vmatpush1.bf16.msra.mxu0 0
    %287 = vmatprep.subr.bf16.mxu0 0
    %288 = vmatpush1.bf16.msra.mxu0 0
    %289 = vmatprep.subr.bf16.mxu0 0
    %290 = vmatpush1.bf16.msra.mxu0 0
    %291 = vmatprep.subr.bf16.mxu0 0
    %292 = vmatpush1.bf16.msra.mxu0 0
    %293 = vmatprep.subr.bf16.mxu0 0
    %294 = vmatpush1.bf16.msra.mxu0 0
    %295 = vmatprep.subr.bf16.mxu0 0
    %296 = vmatpush1.bf16.msra.mxu0 0
    %297 = vmatprep.subr.bf16.mxu0 0
    %298 = vmatpush1.bf16.msra.mxu0 0
    %299 = vmatprep.mubr.bf16.mxu0 0
    %300 = vmatmul.mubr.bf16.gmra.mrb[0].mxu0 %v262
    %v301 = vpop.f32.mrb[0].mxu0
    %v302 = vadd.f32 0.0, %v301
    %v303 = vpop.f32.mrb[0].mxu0
    %v304 = vpop.f32.mrb[0].mxu0
    %v305 = vadd.f32 0.0, %v304
    %v306 = vpop.f32.mrb[0].mxu0
    %307 = vmatprep.mubr.bf16.mxu0 0
    %308 = vmatmul.mubr.bf16.gmra.mrb[0].mxu0 %v265
    %v309 = vpop.f32.mrb[0].mxu0
    %v310 = vadd.f32 0.0, %v309
    %v311 = vpop.f32.mrb[0].mxu0
    %v312 = vpop.f32.mrb[0].mxu0
    %v313 = vpop.f32.mrb[0].mxu0
    %314 = vdwg.mxu0
    %v319 = vunpack.c.l.b16 %v172
    %v320 = vunpack.c.l.b16 %v173
    %v321 = vunpack.c.l.b16 %v174
    %v322 = vunpack.c.l.b16 %v175
    %v323 = vpack.c.b16 %v320, %v319
    %v324 = vpack.c.b16 %v322, %v321
    %v328 = vsel %vm260, %v170, 0
    %v331 = vsel %vm260, %v171, 0
    %333 = vmatprep.subr.bf16.mxu0 0
    %334 = vmatpush1.bf16.msra.mxu0 %v323
    %335 = vmatprep.subr.bf16.mxu0 0
    %336 = vmatpush1.bf16.msra.mxu0 %v324
    %337 = vmatprep.subr.bf16.mxu0 0
    %338 = vmatpush1.bf16.msra.mxu0 0
    %339 = vmatprep.subr.bf16.mxu0 0
    %340 = vmatpush1.bf16.msra.mxu0 0
    %341 = vmatprep.subr.bf16.mxu0 0
    %342 = vmatpush1.bf16.msra.mxu0 0
    %343 = vmatprep.subr.bf16.mxu0 0
    %344 = vmatpush1.bf16.msra.mxu0 0
    %345 = vmatprep.subr.bf16.mxu0 0
    %346 = vmatpush1.bf16.msra.mxu0 0
    %347 = vmatprep.subr.bf16.mxu0 0
    %348 = vmatpush1.bf16.msra.mxu0 0
    %349 = vmatprep.subr.bf16.mxu0 0
    %350 = vmatpush1.bf16.msra.mxu0 0
    %351 = vmatprep.subr.bf16.mxu0 0
    %352 = vmatpush1.bf16.msra.mxu0 0
    %353 = vmatprep.subr.bf16.mxu0 0
    %354 = vmatpush1.bf16.msra.mxu0 0
    %355 = vmatprep.subr.bf16.mxu0 0
    %356 = vmatpush1.bf16.msra.mxu0 0
    %357 = vmatprep.subr.bf16.mxu0 0
    %358 = vmatpush1.bf16.msra.mxu0 0
    %359 = vmatprep.subr.bf16.mxu0 0
    %360 = vmatpush1.bf16.msra.mxu0 0
    %361 = vmatprep.subr.bf16.mxu0 0
    %362 = vmatpush1.bf16.msra.mxu0 0
    %363 = vmatprep.subr.bf16.mxu0 0
    %364 = vmatpush1.bf16.msra.mxu0 0
    %365 = vmatprep.mubr.bf16.mxu0 0
    %366 = vmatmul.mubr.bf16.gmra.mrb[0].mxu0 %v328
    %v367 = vpop.f32.mrb[0].mxu0
    %v368 = vadd.f32 %v302, %v367
    %v369 = vpop.f32.mrb[0].mxu0
    %v370 = vpop.f32.mrb[0].mxu0
    %v371 = vadd.f32 %v305, %v370
    %v372 = vpop.f32.mrb[0].mxu0
    %373 = vmatprep.mubr.bf16.mxu0 0
    %374 = vmatmul.mubr.bf16.gmra.mrb[0].mxu0 %v331
    %v375 = vpop.f32.mrb[0].mxu0
    %v376 = vadd.f32 %v310, %v375
    %v377 = vpop.f32.mrb[0].mxu0
    %v378 = vpop.f32.mrb[0].mxu0
    %v379 = vpop.f32.mrb[0].mxu0
    %380 = vdwg.mxu0
    %s381 = scalar_lea.vmem %s0, 24
    %v382 = vld [vmem:[%s381] sm:$0xf]
    %v383 = vld [vmem:[%s381 + $0x4] sm:$0xf]
    %v384 = vld [vmem:[%s381 + $0x8] sm:$0x1]
    %v388 = vunpack.c.l.b16 %v382
    %v389 = vunpack.c.l.b16 %v383
    %v390 = vunpack.c.l.b16 %v384
    %v391 = vpack.c.b16 %v389, %v388
    %v392 = vpack.c.b16 %v390, %v390
    %395 = vmatprep.subr.bf16.mxu0 0
    %396 = vmatpush1.bf16.msra.mxu0 %v103
    %397 = vmatprep.subr.bf16.mxu0 0
    %398 = vmatpush1.bf16.msra.mxu0 %v104
    %399 = vmatprep.subr.bf16.mxu0 0
    %400 = vmatpush1.bf16.msra.mxu0 %v105
    %401 = vmatprep.subr.bf16.mxu0 0
    %402 = vmatpush1.bf16.msra.mxu0 %v106
    %403 = vmatprep.subr.bf16.mxu0 0
    %404 = vmatpush1.bf16.msra.mxu0 %v107
    %405 = vmatprep.subr.bf16.mxu0 0
    %406 = vmatpush1.bf16.msra.mxu0 %v108
    %407 = vmatprep.subr.bf16.mxu0 0
    %408 = vmatpush1.bf16.msra.mxu0 %v109
    %409 = vmatprep.subr.bf16.mxu0 0
    %410 = vmatpush1.bf16.msra.mxu0 %v110
    %411 = vmatprep.subr.bf16.mxu0 0
    %412 = vmatpush1.bf16.msra.mxu0 0
    %413 = vmatprep.subr.bf16.mxu0 0
    %414 = vmatpush1.bf16.msra.mxu0 0
    %415 = vmatprep.subr.bf16.mxu0 0
    %416 = vmatpush1.bf16.msra.mxu0 0
    %417 = vmatprep.subr.bf16.mxu0 0
    %418 = vmatpush1.bf16.msra.mxu0 0
    %419 = vmatprep.subr.bf16.mxu0 0
    %420 = vmatpush1.bf16.msra.mxu0 0
    %421 = vmatprep.subr.bf16.mxu0 0
    %422 = vmatpush1.bf16.msra.mxu0 0
    %423 = vmatprep.subr.bf16.mxu0 0
    %424 = vmatpush1.bf16.msra.mxu0 0
    %425 = vmatprep.subr.bf16.mxu0 0
    %426 = vmatpush1.bf16.msra.mxu0 0
    %427 = vmatprep.mubr.bf16.mxu0 0
    %428 = vmatmul.mubr.bf16.gmra.mrb[0].mxu0 %v391
    %v429 = vpop.f32.mrb[0].mxu0
    %v430 = vadd.f32 %v59, %v429
    %v431 = vpop.f32.mrb[0].mxu0
    %v432 = vpop.f32.mrb[0].mxu0
    %v433 = vadd.f32 %v59, %v432
    %v434 = vpop.f32.mrb[0].mxu0
    %435 = vmatprep.mubr.bf16.mxu0 0
    %436 = vmatmul.mubr.bf16.gmra.mrb[0].mxu0 %v392
    %v437 = vpop.f32.mrb[0].mxu0
    %v438 = vadd.f32 %v59, %v437
    %v439 = vpop.f32.mrb[0].mxu0
    %v440 = vpop.f32.mrb[0].mxu0
    %v441 = vpop.f32.mrb[0].mxu0
    %442 = vdwg.mxu0
    %v443 = vmax.f32 %v430, 0.0
    %v444 = vmax.f32 %v433, 0.0
    %v445 = vmax.f32 %v438, 0.0
    %v446 = vpack.c.bf16 %v444, %v443
    %v447 = vpack.c.bf16 %v445, %v445
    %s448 = scalar_lea.vmem %s3, 32
    %v449 = vld [vmem:[%s448] sm:$0xf]
    %v450 = vld [vmem:[%s448 + $0x4] sm:$0xf]
    %v451 = vld [vmem:[%s448 + $0x8] sm:$0xf]
    %v452 = vld [vmem:[%s448 + $0xc] sm:$0xf]
    %v457 = vunpack.c.l.b16 %v449
    %v458 = vunpack.c.l.b16 %v450
    %v459 = vunpack.c.l.b16 %v451
    %v460 = vunpack.c.l.b16 %v452
    %v461 = vpack.c.b16 %v458, %v457
    %v462 = vpack.c.b16 %v460, %v459
    %v466 = vsel %vm260, %v446, 0
    %v469 = vsel %vm260, %v447, 0
    %471 = vmatprep.subr.bf16.mxu0 0
    %472 = vmatpush1.bf16.msra.mxu0 %v461
    %473 = vmatprep.subr.bf16.mxu0 0
    %474 = vmatpush1.bf16.msra.mxu0 %v462
    %475 = vmatprep.subr.bf16.mxu0 0
    %476 = vmatpush1.bf16.msra.mxu0 0
    %477 = vmatprep.subr.bf16.mxu0 0
    %478 = vmatpush1.bf16.msra.mxu0 0
    %479 = vmatprep.subr.bf16.mxu0 0
    %480 = vmatpush1.bf16.msra.mxu0 0
    %481 = vmatprep.subr.bf16.mxu0 0
    %482 = vmatpush1.bf16.msra.mxu0 0
    %483 = vmatprep.subr.bf16.mxu0 0
    %484 = vmatpush1.bf16.msra.mxu0 0
    %485 = vmatprep.subr.bf16.mxu0 0
    %486 = vmatpush1.bf16.msra.mxu0 0
    %487 = vmatprep.subr.bf16.mxu0 0
    %488 = vmatpush1.bf16.msra.mxu0 0
    %489 = vmatprep.subr.bf16.mxu0 0
    %490 = vmatpush1.bf16.msra.mxu0 0
    %491 = vmatprep.subr.bf16.mxu0 0
    %492 = vmatpush1.bf16.msra.mxu0 0
    %493 = vmatprep.subr.bf16.mxu0 0
    %494 = vmatpush1.bf16.msra.mxu0 0
    %495 = vmatprep.subr.bf16.mxu0 0
    %496 = vmatpush1.bf16.msra.mxu0 0
    %497 = vmatprep.subr.bf16.mxu0 0
    %498 = vmatpush1.bf16.msra.mxu0 0
    %499 = vmatprep.subr.bf16.mxu0 0
    %500 = vmatpush1.bf16.msra.mxu0 0
    %501 = vmatprep.subr.bf16.mxu0 0
    %502 = vmatpush1.bf16.msra.mxu0 0
    %503 = vmatprep.mubr.bf16.mxu0 0
    %504 = vmatmul.mubr.bf16.gmra.mrb[0].mxu0 %v466
    %v505 = vpop.f32.mrb[0].mxu0
    %v506 = vadd.f32 0.0, %v505
    %v507 = vpop.f32.mrb[0].mxu0
    %v508 = vpop.f32.mrb[0].mxu0
    %v509 = vadd.f32 0.0, %v508
    %v510 = vpop.f32.mrb[0].mxu0
    %511 = vmatprep.mubr.bf16.mxu0 0
    %512 = vmatmul.mubr.bf16.gmra.mrb[0].mxu0 %v469
    %v513 = vpop.f32.mrb[0].mxu0
    %v514 = vadd.f32 0.0, %v513
    %v515 = vpop.f32.mrb[0].mxu0
    %v516 = vpop.f32.mrb[0].mxu0
    %v517 = vpop.f32.mrb[0].mxu0
    %518 = vdwg.mxu0
    %v519 = vadd.f32 %v368, %v506
    %v520 = vadd.f32 %v371, %v509
    %v521 = vadd.f32 %v376, %v514
    %s522 = scalar_lea.vmem %s0, 36
    %v523 = vld [vmem:[%s522] sm:$0xf]
    %v524 = vld [vmem:[%s522 + $0x4] sm:$0xf]
    %v525 = vld [vmem:[%s522 + $0x8] sm:$0x1]
    %v529 = vunpack.c.l.b16 %v523
    %v530 = vunpack.c.l.b16 %v524
    %v531 = vunpack.c.l.b16 %v525
    %v532 = vpack.c.b16 %v530, %v529
    %v533 = vpack.c.b16 %v531, %v531
    %536 = vmatprep.subr.bf16.mxu0 0
    %537 = vmatpush1.bf16.msra.mxu0 %v103
    %538 = vmatprep.subr.bf16.mxu0 0
    %539 = vmatpush1.bf16.msra.mxu0 %v104
    %540 = vmatprep.subr.bf16.mxu0 0
    %541 = vmatpush1.bf16.msra.mxu0 %v105
    %542 = vmatprep.subr.bf16.mxu0 0
    %543 = vmatpush1.bf16.msra.mxu0 %v106
    %544 = vmatprep.subr.bf16.mxu0 0
    %545 = vmatpush1.bf16.msra.mxu0 %v107
    %546 = vmatprep.subr.bf16.mxu0 0
    %547 = vmatpush1.bf16.msra.mxu0 %v108
    %548 = vmatprep.subr.bf16.mxu0 0
    %549 = vmatpush1.bf16.msra.mxu0 %v109
    %550 = vmatprep.subr.bf16.mxu0 0
    %551 = vmatpush1.bf16.msra.mxu0 %v110
    %552 = vmatprep.subr.bf16.mxu0 0
    %553 = vmatpush1.bf16.msra.mxu0 0
    %554 = vmatprep.subr.bf16.mxu0 0
    %555 = vmatpush1.bf16.msra.mxu0 0
    %556 = vmatprep.subr.bf16.mxu0 0
    %557 = vmatpush1.bf16.msra.mxu0 0
    %558 = vmatprep.subr.bf16.mxu0 0
    %559 = vmatpush1.bf16.msra.mxu0 0
    %560 = vmatprep.subr.bf16.mxu0 0
    %561 = vmatpush1.bf16.msra.mxu0 0
    %562 = vmatprep.subr.bf16.mxu0 0
    %563 = vmatpush1.bf16.msra.mxu0 0
    %564 = vmatprep.subr.bf16.mxu0 0
    %565 = vmatpush1.bf16.msra.mxu0 0
    %566 = vmatprep.subr.bf16.mxu0 0
    %567 = vmatpush1.bf16.msra.mxu0 0
    %568 = vmatprep.mubr.bf16.mxu0 0
    %569 = vmatmul.mubr.bf16.gmra.mrb[0].mxu0 %v532
    %v570 = vpop.f32.mrb[0].mxu0
    %v571 = vadd.f32 %v59, %v570
    %v572 = vpop.f32.mrb[0].mxu0
    %v573 = vpop.f32.mrb[0].mxu0
    %v574 = vadd.f32 %v59, %v573
    %v575 = vpop.f32.mrb[0].mxu0
    %576 = vmatprep.mubr.bf16.mxu0 0
    %577 = vmatmul.mubr.bf16.gmra.mrb[0].mxu0 %v533
    %v578 = vpop.f32.mrb[0].mxu0
    %v579 = vadd.f32 %v59, %v578
    %v580 = vpop.f32.mrb[0].mxu0
    %v581 = vpop.f32.mrb[0].mxu0
    %v582 = vpop.f32.mrb[0].mxu0
    %583 = vdwg.mxu0
    %v584 = vmax.f32 %v571, 0.0
    %v585 = vmax.f32 %v574, 0.0
    %v586 = vmax.f32 %v579, 0.0
    %v587 = vpack.c.bf16 %v585, %v584
    %v588 = vpack.c.bf16 %v586, %v586
    %s589 = scalar_lea.vmem %s3, 48
    %v590 = vld [vmem:[%s589] sm:$0xf]
    %v591 = vld [vmem:[%s589 + $0x4] sm:$0xf]
    %v592 = vld [vmem:[%s589 + $0x8] sm:$0xf]
    %v593 = vld [vmem:[%s589 + $0xc] sm:$0xf]
    %v598 = vunpack.c.l.b16 %v590
    %v599 = vunpack.c.l.b16 %v591
    %v600 = vunpack.c.l.b16 %v592
    %v601 = vunpack.c.l.b16 %v593
    %v602 = vpack.c.b16 %v599, %v598
    %v603 = vpack.c.b16 %v601, %v600
    %v607 = vsel %vm260, %v587, 0
    %v610 = vsel %vm260, %v588, 0
    %612 = vmatprep.subr.bf16.mxu0 0
    %613 = vmatpush1.bf16.msra.mxu0 %v602
    %614 = vmatprep.subr.bf16.mxu0 0
    %615 = vmatpush1.bf16.msra.mxu0 %v603
    %616 = vmatprep.subr.bf16.mxu0 0
    %617 = vmatpush1.bf16.msra.mxu0 0
    %618 = vmatprep.subr.bf16.mxu0 0
    %619 = vmatpush1.bf16.msra.mxu0 0
    %620 = vmatprep.subr.bf16.mxu0 0
    %621 = vmatpush1.bf16.msra.mxu0 0
    %622 = vmatprep.subr.bf16.mxu0 0
    %623 = vmatpush1.bf16.msra.mxu0 0
    %624 = vmatprep.subr.bf16.mxu0 0
    %625 = vmatpush1.bf16.msra.mxu0 0
    %626 = vmatprep.subr.bf16.mxu0 0
    %627 = vmatpush1.bf16.msra.mxu0 0
    %628 = vmatprep.subr.bf16.mxu0 0
    %629 = vmatpush1.bf16.msra.mxu0 0
    %630 = vmatprep.subr.bf16.mxu0 0
    %631 = vmatpush1.bf16.msra.mxu0 0
    %632 = vmatprep.subr.bf16.mxu0 0
    %633 = vmatpush1.bf16.msra.mxu0 0
    %634 = vmatprep.subr.bf16.mxu0 0
    %635 = vmatpush1.bf16.msra.mxu0 0
    %636 = vmatprep.subr.bf16.mxu0 0
    %637 = vmatpush1.bf16.msra.mxu0 0
    %638 = vmatprep.subr.bf16.mxu0 0
    %639 = vmatpush1.bf16.msra.mxu0 0
    %640 = vmatprep.subr.bf16.mxu0 0
    %641 = vmatpush1.bf16.msra.mxu0 0
    %642 = vmatprep.subr.bf16.mxu0 0
    %643 = vmatpush1.bf16.msra.mxu0 0
    %644 = vmatprep.mubr.bf16.mxu0 0
    %645 = vmatmul.mubr.bf16.gmra.mrb[0].mxu0 %v607
    %v646 = vpop.f32.mrb[0].mxu0
    %v647 = vadd.f32 0.0, %v646
    %v648 = vpop.f32.mrb[0].mxu0
    %v649 = vpop.f32.mrb[0].mxu0
    %v650 = vadd.f32 0.0, %v649
    %v651 = vpop.f32.mrb[0].mxu0
    %652 = vmatprep.mubr.bf16.mxu0 0
    %653 = vmatmul.mubr.bf16.gmra.mrb[0].mxu0 %v610
    %v654 = vpop.f32.mrb[0].mxu0
    %v655 = vadd.f32 0.0, %v654
    %v656 = vpop.f32.mrb[0].mxu0
    %v657 = vpop.f32.mrb[0].mxu0
    %v658 = vpop.f32.mrb[0].mxu0
    %659 = vdwg.mxu0
    %v660 = vadd.f32 %v519, %v647
    %v661 = vadd.f32 %v520, %v650
    %v662 = vadd.f32 %v521, %v655
    %s663 = scalar_lea.vmem %s0, 48
    %v664 = vld [vmem:[%s663] sm:$0xf]
    %v665 = vld [vmem:[%s663 + $0x4] sm:$0xf]
    %v666 = vld [vmem:[%s663 + $0x8] sm:$0x1]
    %v670 = vunpack.c.l.b16 %v664
    %v671 = vunpack.c.l.b16 %v665
    %v672 = vunpack.c.l.b16 %v666
    %v673 = vpack.c.b16 %v671, %v670
    %v674 = vpack.c.b16 %v672, %v672
    %677 = vmatprep.subr.bf16.mxu0 0
    %678 = vmatpush1.bf16.msra.mxu0 %v103
    %679 = vmatprep.subr.bf16.mxu0 0
    %680 = vmatpush1.bf16.msra.mxu0 %v104
    %681 = vmatprep.subr.bf16.mxu0 0
    %682 = vmatpush1.bf16.msra.mxu0 %v105
    %683 = vmatprep.subr.bf16.mxu0 0
    %684 = vmatpush1.bf16.msra.mxu0 %v106
    %685 = vmatprep.subr.bf16.mxu0 0
    %686 = vmatpush1.bf16.msra.mxu0 %v107
    %687 = vmatprep.subr.bf16.mxu0 0
    %688 = vmatpush1.bf16.msra.mxu0 %v108
    %689 = vmatprep.subr.bf16.mxu0 0
    %690 = vmatpush1.bf16.msra.mxu0 %v109
    %691 = vmatprep.subr.bf16.mxu0 0
    %692 = vmatpush1.bf16.msra.mxu0 %v110
    %693 = vmatprep.subr.bf16.mxu0 0
    %694 = vmatpush1.bf16.msra.mxu0 0
    %695 = vmatprep.subr.bf16.mxu0 0
    %696 = vmatpush1.bf16.msra.mxu0 0
    %697 = vmatprep.subr.bf16.mxu0 0
    %698 = vmatpush1.bf16.msra.mxu0 0
    %699 = vmatprep.subr.bf16.mxu0 0
    %700 = vmatpush1.bf16.msra.mxu0 0
    %701 = vmatprep.subr.bf16.mxu0 0
    %702 = vmatpush1.bf16.msra.mxu0 0
    %703 = vmatprep.subr.bf16.mxu0 0
    %704 = vmatpush1.bf16.msra.mxu0 0
    %705 = vmatprep.subr.bf16.mxu0 0
    %706 = vmatpush1.bf16.msra.mxu0 0
    %707 = vmatprep.subr.bf16.mxu0 0
    %708 = vmatpush1.bf16.msra.mxu0 0
    %709 = vmatprep.mubr.bf16.mxu0 0
    %710 = vmatmul.mubr.bf16.gmra.mrb[0].mxu0 %v673
    %v711 = vpop.f32.mrb[0].mxu0
    %v712 = vadd.f32 %v59, %v711
    %v713 = vpop.f32.mrb[0].mxu0
    %v714 = vpop.f32.mrb[0].mxu0
    %v715 = vadd.f32 %v59, %v714
    %v716 = vpop.f32.mrb[0].mxu0
    %717 = vmatprep.mubr.bf16.mxu0 0
    %718 = vmatmul.mubr.bf16.gmra.mrb[0].mxu0 %v674
    %v719 = vpop.f32.mrb[0].mxu0
    %v720 = vadd.f32 %v59, %v719
    %v721 = vpop.f32.mrb[0].mxu0
    %v722 = vpop.f32.mrb[0].mxu0
    %v723 = vpop.f32.mrb[0].mxu0
    %724 = vdwg.mxu0
    %v725 = vmax.f32 %v712, 0.0
    %v726 = vmax.f32 %v715, 0.0
    %v727 = vmax.f32 %v720, 0.0
    %v728 = vpack.c.bf16 %v726, %v725
    %v729 = vpack.c.bf16 %v727, %v727
    %s730 = scalar_lea.vmem %s3, 64
    %v731 = vld [vmem:[%s730] sm:$0xf]
    %v732 = vld [vmem:[%s730 + $0x4] sm:$0xf]
    %v733 = vld [vmem:[%s730 + $0x8] sm:$0xf]
    %v734 = vld [vmem:[%s730 + $0xc] sm:$0xf]
    %v739 = vunpack.c.l.b16 %v731
    %v740 = vunpack.c.l.b16 %v732
    %v741 = vunpack.c.l.b16 %v733
    %v742 = vunpack.c.l.b16 %v734
    %v743 = vpack.c.b16 %v740, %v739
    %v744 = vpack.c.b16 %v742, %v741
    %v748 = vsel %vm260, %v728, 0
    %v751 = vsel %vm260, %v729, 0
    %753 = vmatprep.subr.bf16.mxu0 0
    %754 = vmatpush1.bf16.msra.mxu0 %v743
    %755 = vmatprep.subr.bf16.mxu0 0
    %756 = vmatpush1.bf16.msra.mxu0 %v744
    %757 = vmatprep.subr.bf16.mxu0 0
    %758 = vmatpush1.bf16.msra.mxu0 0
    %759 = vmatprep.subr.bf16.mxu0 0
    %760 = vmatpush1.bf16.msra.mxu0 0
    %761 = vmatprep.subr.bf16.mxu0 0
    %762 = vmatpush1.bf16.msra.mxu0 0
    %763 = vmatprep.subr.bf16.mxu0 0
    %764 = vmatpush1.bf16.msra.mxu0 0
    %765 = vmatprep.subr.bf16.mxu0 0
    %766 = vmatpush1.bf16.msra.mxu0 0
    %767 = vmatprep.subr.bf16.mxu0 0
    %768 = vmatpush1.bf16.msra.mxu0 0
    %769 = vmatprep.subr.bf16.mxu0 0
    %770 = vmatpush1.bf16.msra.mxu0 0
    %771 = vmatprep.subr.bf16.mxu0 0
    %772 = vmatpush1.bf16.msra.mxu0 0
    %773 = vmatprep.subr.bf16.mxu0 0
    %774 = vmatpush1.bf16.msra.mxu0 0
    %775 = vmatprep.subr.bf16.mxu0 0
    %776 = vmatpush1.bf16.msra.mxu0 0
    %777 = vmatprep.subr.bf16.mxu0 0
    %778 = vmatpush1.bf16.msra.mxu0 0
    %779 = vmatprep.subr.bf16.mxu0 0
    %780 = vmatpush1.bf16.msra.mxu0 0
    %781 = vmatprep.subr.bf16.mxu0 0
    %782 = vmatpush1.bf16.msra.mxu0 0
    %783 = vmatprep.subr.bf16.mxu0 0
    %784 = vmatpush1.bf16.msra.mxu0 0
    %785 = vmatprep.mubr.bf16.mxu0 0
    %786 = vmatmul.mubr.bf16.gmra.mrb[0].mxu0 %v748
    %v787 = vpop.f32.mrb[0].mxu0
    %v788 = vadd.f32 0.0, %v787
    %v789 = vpop.f32.mrb[0].mxu0
    %v790 = vpop.f32.mrb[0].mxu0
    %v791 = vadd.f32 0.0, %v790
    %v792 = vpop.f32.mrb[0].mxu0
    %793 = vmatprep.mubr.bf16.mxu0 0
    %794 = vmatmul.mubr.bf16.gmra.mrb[0].mxu0 %v751
    %v795 = vpop.f32.mrb[0].mxu0
    %v796 = vadd.f32 0.0, %v795
    %v797 = vpop.f32.mrb[0].mxu0
    %v798 = vpop.f32.mrb[0].mxu0
    %v799 = vpop.f32.mrb[0].mxu0
    %800 = vdwg.mxu0
    %v801 = vadd.f32 %v660, %v788
    %v802 = vadd.f32 %v661, %v791
    %v803 = vadd.f32 %v662, %v796
    %s804 = scalar_lea.vmem %s0, 60
    %v805 = vld [vmem:[%s804] sm:$0xf]
    %v806 = vld [vmem:[%s804 + $0x4] sm:$0xf]
    %v807 = vld [vmem:[%s804 + $0x8] sm:$0x1]
    %v811 = vunpack.c.l.b16 %v805
    %v812 = vunpack.c.l.b16 %v806
    %v813 = vunpack.c.l.b16 %v807
    %v814 = vpack.c.b16 %v812, %v811
    %v815 = vpack.c.b16 %v813, %v813
    %818 = vmatprep.subr.bf16.mxu0 0
    %819 = vmatpush1.bf16.msra.mxu0 %v103
    %820 = vmatprep.subr.bf16.mxu0 0
    %821 = vmatpush1.bf16.msra.mxu0 %v104
    %822 = vmatprep.subr.bf16.mxu0 0
    %823 = vmatpush1.bf16.msra.mxu0 %v105
    %824 = vmatprep.subr.bf16.mxu0 0
    %825 = vmatpush1.bf16.msra.mxu0 %v106
    %826 = vmatprep.subr.bf16.mxu0 0
    %827 = vmatpush1.bf16.msra.mxu0 %v107
    %828 = vmatprep.subr.bf16.mxu0 0
    %829 = vmatpush1.bf16.msra.mxu0 %v108
    %830 = vmatprep.subr.bf16.mxu0 0
    %831 = vmatpush1.bf16.msra.mxu0 %v109
    %832 = vmatprep.subr.bf16.mxu0 0
    %833 = vmatpush1.bf16.msra.mxu0 %v110
    %834 = vmatprep.subr.bf16.mxu0 0
    %835 = vmatpush1.bf16.msra.mxu0 0
    %836 = vmatprep.subr.bf16.mxu0 0
    %837 = vmatpush1.bf16.msra.mxu0 0
    %838 = vmatprep.subr.bf16.mxu0 0
    %839 = vmatpush1.bf16.msra.mxu0 0
    %840 = vmatprep.subr.bf16.mxu0 0
    %841 = vmatpush1.bf16.msra.mxu0 0
    %842 = vmatprep.subr.bf16.mxu0 0
    %843 = vmatpush1.bf16.msra.mxu0 0
    %844 = vmatprep.subr.bf16.mxu0 0
    %845 = vmatpush1.bf16.msra.mxu0 0
    %846 = vmatprep.subr.bf16.mxu0 0
    %847 = vmatpush1.bf16.msra.mxu0 0
    %848 = vmatprep.subr.bf16.mxu0 0
    %849 = vmatpush1.bf16.msra.mxu0 0
    %850 = vmatprep.mubr.bf16.mxu0 0
    %851 = vmatmul.mubr.bf16.gmra.mrb[0].mxu0 %v814
    %v852 = vpop.f32.mrb[0].mxu0
    %v853 = vadd.f32 %v59, %v852
    %v854 = vpop.f32.mrb[0].mxu0
    %v855 = vpop.f32.mrb[0].mxu0
    %v856 = vadd.f32 %v59, %v855
    %v857 = vpop.f32.mrb[0].mxu0
    %858 = vmatprep.mubr.bf16.mxu0 0
    %859 = vmatmul.mubr.bf16.gmra.mrb[0].mxu0 %v815
    %v860 = vpop.f32.mrb[0].mxu0
    %v861 = vadd.f32 %v59, %v860
    %v862 = vpop.f32.mrb[0].mxu0
    %v863 = vpop.f32.mrb[0].mxu0
    %v864 = vpop.f32.mrb[0].mxu0
    %865 = vdwg.mxu0
    %v866 = vmax.f32 %v853, 0.0
    %v867 = vmax.f32 %v856, 0.0
    %v868 = vmax.f32 %v861, 0.0
    %v869 = vpack.c.bf16 %v867, %v866
    %v870 = vpack.c.bf16 %v868, %v868
    %s871 = scalar_lea.vmem %s3, 80
    %v872 = vld [vmem:[%s871] sm:$0xf]
    %v873 = vld [vmem:[%s871 + $0x4] sm:$0xf]
    %v874 = vld [vmem:[%s871 + $0x8] sm:$0xf]
    %v875 = vld [vmem:[%s871 + $0xc] sm:$0xf]
    %v880 = vunpack.c.l.b16 %v872
    %v881 = vunpack.c.l.b16 %v873
    %v882 = vunpack.c.l.b16 %v874
    %v883 = vunpack.c.l.b16 %v875
    %v884 = vpack.c.b16 %v881, %v880
    %v885 = vpack.c.b16 %v883, %v882
    %v889 = vsel %vm260, %v869, 0
    %v892 = vsel %vm260, %v870, 0
    %894 = vmatprep.subr.bf16.mxu0 0
    %895 = vmatpush1.bf16.msra.mxu0 %v884
    %896 = vmatprep.subr.bf16.mxu0 0
    %897 = vmatpush1.bf16.msra.mxu0 %v885
    %898 = vmatprep.subr.bf16.mxu0 0
    %899 = vmatpush1.bf16.msra.mxu0 0
    %900 = vmatprep.subr.bf16.mxu0 0
    %901 = vmatpush1.bf16.msra.mxu0 0
    %902 = vmatprep.subr.bf16.mxu0 0
    %903 = vmatpush1.bf16.msra.mxu0 0
    %904 = vmatprep.subr.bf16.mxu0 0
    %905 = vmatpush1.bf16.msra.mxu0 0
    %906 = vmatprep.subr.bf16.mxu0 0
    %907 = vmatpush1.bf16.msra.mxu0 0
    %908 = vmatprep.subr.bf16.mxu0 0
    %909 = vmatpush1.bf16.msra.mxu0 0
    %910 = vmatprep.subr.bf16.mxu0 0
    %911 = vmatpush1.bf16.msra.mxu0 0
    %912 = vmatprep.subr.bf16.mxu0 0
    %913 = vmatpush1.bf16.msra.mxu0 0
    %914 = vmatprep.subr.bf16.mxu0 0
    %915 = vmatpush1.bf16.msra.mxu0 0
    %916 = vmatprep.subr.bf16.mxu0 0
    %917 = vmatpush1.bf16.msra.mxu0 0
    %918 = vmatprep.subr.bf16.mxu0 0
    %919 = vmatpush1.bf16.msra.mxu0 0
    %920 = vmatprep.subr.bf16.mxu0 0
    %921 = vmatpush1.bf16.msra.mxu0 0
    %922 = vmatprep.subr.bf16.mxu0 0
    %923 = vmatpush1.bf16.msra.mxu0 0
    %924 = vmatprep.subr.bf16.mxu0 0
    %925 = vmatpush1.bf16.msra.mxu0 0
    %926 = vmatprep.mubr.bf16.mxu0 0
    %927 = vmatmul.mubr.bf16.gmra.mrb[0].mxu0 %v889
    %v928 = vpop.f32.mrb[0].mxu0
    %v929 = vadd.f32 0.0, %v928
    %v930 = vpop.f32.mrb[0].mxu0
    %v931 = vpop.f32.mrb[0].mxu0
    %v932 = vadd.f32 0.0, %v931
    %v933 = vpop.f32.mrb[0].mxu0
    %934 = vmatprep.mubr.bf16.mxu0 0
    %935 = vmatmul.mubr.bf16.gmra.mrb[0].mxu0 %v892
    %v936 = vpop.f32.mrb[0].mxu0
    %v937 = vadd.f32 0.0, %v936
    %v938 = vpop.f32.mrb[0].mxu0
    %v939 = vpop.f32.mrb[0].mxu0
    %v940 = vpop.f32.mrb[0].mxu0
    %941 = vdwg.mxu0
    %v942 = vadd.f32 %v801, %v929
    %v943 = vadd.f32 %v802, %v932
    %v944 = vadd.f32 %v803, %v937
    %s945 = scalar_lea.vmem %s0, 72
    %v946 = vld [vmem:[%s945] sm:$0xf]
    %v947 = vld [vmem:[%s945 + $0x4] sm:$0xf]
    %v948 = vld [vmem:[%s945 + $0x8] sm:$0x1]
    %v952 = vunpack.c.l.b16 %v946
    %v953 = vunpack.c.l.b16 %v947
    %v954 = vunpack.c.l.b16 %v948
    %v955 = vpack.c.b16 %v953, %v952
    %v956 = vpack.c.b16 %v954, %v954
    %959 = vmatprep.subr.bf16.mxu0 0
    %960 = vmatpush1.bf16.msra.mxu0 %v103
    %961 = vmatprep.subr.bf16.mxu0 0
    %962 = vmatpush1.bf16.msra.mxu0 %v104
    %963 = vmatprep.subr.bf16.mxu0 0
    %964 = vmatpush1.bf16.msra.mxu0 %v105
    %965 = vmatprep.subr.bf16.mxu0 0
    %966 = vmatpush1.bf16.msra.mxu0 %v106
    %967 = vmatprep.subr.bf16.mxu0 0
    %968 = vmatpush1.bf16.msra.mxu0 %v107
    %969 = vmatprep.subr.bf16.mxu0 0
    %970 = vmatpush1.bf16.msra.mxu0 %v108
    %971 = vmatprep.subr.bf16.mxu0 0
    %972 = vmatpush1.bf16.msra.mxu0 %v109
    %973 = vmatprep.subr.bf16.mxu0 0
    %974 = vmatpush1.bf16.msra.mxu0 %v110
    %975 = vmatprep.subr.bf16.mxu0 0
    %976 = vmatpush1.bf16.msra.mxu0 0
    %977 = vmatprep.subr.bf16.mxu0 0
    %978 = vmatpush1.bf16.msra.mxu0 0
    %979 = vmatprep.subr.bf16.mxu0 0
    %980 = vmatpush1.bf16.msra.mxu0 0
    %981 = vmatprep.subr.bf16.mxu0 0
    %982 = vmatpush1.bf16.msra.mxu0 0
    %983 = vmatprep.subr.bf16.mxu0 0
    %984 = vmatpush1.bf16.msra.mxu0 0
    %985 = vmatprep.subr.bf16.mxu0 0
    %986 = vmatpush1.bf16.msra.mxu0 0
    %987 = vmatprep.subr.bf16.mxu0 0
    %988 = vmatpush1.bf16.msra.mxu0 0
    %989 = vmatprep.subr.bf16.mxu0 0
    %990 = vmatpush1.bf16.msra.mxu0 0
    %991 = vmatprep.mubr.bf16.mxu0 0
    %992 = vmatmul.mubr.bf16.gmra.mrb[0].mxu0 %v955
    %v993 = vpop.f32.mrb[0].mxu0
    %v994 = vadd.f32 %v59, %v993
    %v995 = vpop.f32.mrb[0].mxu0
    %v996 = vpop.f32.mrb[0].mxu0
    %v997 = vadd.f32 %v59, %v996
    %v998 = vpop.f32.mrb[0].mxu0
    %999 = vmatprep.mubr.bf16.mxu0 0
    %1000 = vmatmul.mubr.bf16.gmra.mrb[0].mxu0 %v956
    %v1001 = vpop.f32.mrb[0].mxu0
    %v1002 = vadd.f32 %v59, %v1001
    %v1003 = vpop.f32.mrb[0].mxu0
    %v1004 = vpop.f32.mrb[0].mxu0
    %v1005 = vpop.f32.mrb[0].mxu0
    %1006 = vdwg.mxu0
    %v1007 = vmax.f32 %v994, 0.0
    %v1008 = vmax.f32 %v997, 0.0
    %v1009 = vmax.f32 %v1002, 0.0
    %v1010 = vpack.c.bf16 %v1008, %v1007
    %v1011 = vpack.c.bf16 %v1009, %v1009
    %s1012 = scalar_lea.vmem %s3, 96
    %v1013 = vld [vmem:[%s1012] sm:$0xf]
    %v1014 = vld [vmem:[%s1012 + $0x4] sm:$0xf]
    %v1015 = vld [vmem:[%s1012 + $0x8] sm:$0xf]
    %v1016 = vld [vmem:[%s1012 + $0xc] sm:$0xf]
    %v1021 = vunpack.c.l.b16 %v1013
    %v1022 = vunpack.c.l.b16 %v1014
    %v1023 = vunpack.c.l.b16 %v1015
    %v1024 = vunpack.c.l.b16 %v1016
    %v1025 = vpack.c.b16 %v1022, %v1021
    %v1026 = vpack.c.b16 %v1024, %v1023
    %v1030 = vsel %vm260, %v1010, 0
    %v1033 = vsel %vm260, %v1011, 0
    %1035 = vmatprep.subr.bf16.mxu0 0
    %1036 = vmatpush1.bf16.msra.mxu0 %v1025
    %1037 = vmatprep.subr.bf16.mxu0 0
    %1038 = vmatpush1.bf16.msra.mxu0 %v1026
    %1039 = vmatprep.subr.bf16.mxu0 0
    %1040 = vmatpush1.bf16.msra.mxu0 0
    %1041 = vmatprep.subr.bf16.mxu0 0
    %1042 = vmatpush1.bf16.msra.mxu0 0
    %1043 = vmatprep.subr.bf16.mxu0 0
    %1044 = vmatpush1.bf16.msra.mxu0 0
    %1045 = vmatprep.subr.bf16.mxu0 0
    %1046 = vmatpush1.bf16.msra.mxu0 0
    %1047 = vmatprep.subr.bf16.mxu0 0
    %1048 = vmatpush1.bf16.msra.mxu0 0
    %1049 = vmatprep.subr.bf16.mxu0 0
    %1050 = vmatpush1.bf16.msra.mxu0 0
    %1051 = vmatprep.subr.bf16.mxu0 0
    %1052 = vmatpush1.bf16.msra.mxu0 0
    %1053 = vmatprep.subr.bf16.mxu0 0
    %1054 = vmatpush1.bf16.msra.mxu0 0
    %1055 = vmatprep.subr.bf16.mxu0 0
    %1056 = vmatpush1.bf16.msra.mxu0 0
    %1057 = vmatprep.subr.bf16.mxu0 0
    %1058 = vmatpush1.bf16.msra.mxu0 0
    %1059 = vmatprep.subr.bf16.mxu0 0
    %1060 = vmatpush1.bf16.msra.mxu0 0
    %1061 = vmatprep.subr.bf16.mxu0 0
    %1062 = vmatpush1.bf16.msra.mxu0 0
    %1063 = vmatprep.subr.bf16.mxu0 0
    %1064 = vmatpush1.bf16.msra.mxu0 0
    %1065 = vmatprep.subr.bf16.mxu0 0
    %1066 = vmatpush1.bf16.msra.mxu0 0
    %1067 = vmatprep.mubr.bf16.mxu0 0
    %1068 = vmatmul.mubr.bf16.gmra.mrb[0].mxu0 %v1030
    %v1069 = vpop.f32.mrb[0].mxu0
    %v1070 = vadd.f32 0.0, %v1069
    %v1071 = vpop.f32.mrb[0].mxu0
    %v1072 = vpop.f32.mrb[0].mxu0
    %v1073 = vadd.f32 0.0, %v1072
    %v1074 = vpop.f32.mrb[0].mxu0
    %1075 = vmatprep.mubr.bf16.mxu0 0
    %1076 = vmatmul.mubr.bf16.gmra.mrb[0].mxu0 %v1033
    %v1077 = vpop.f32.mrb[0].mxu0
    %v1078 = vadd.f32 0.0, %v1077
    %v1079 = vpop.f32.mrb[0].mxu0
    %v1080 = vpop.f32.mrb[0].mxu0
    %v1081 = vpop.f32.mrb[0].mxu0
    %1082 = vdwg.mxu0
    %v1083 = vadd.f32 %v942, %v1070
    %v1084 = vadd.f32 %v943, %v1073
    %v1085 = vadd.f32 %v944, %v1078
    %s1086 = scalar_lea.vmem %s0, 84
    %v1087 = vld [vmem:[%s1086] sm:$0xf]
    %v1088 = vld [vmem:[%s1086 + $0x4] sm:$0xf]
    %v1089 = vld [vmem:[%s1086 + $0x8] sm:$0x1]
    %v1093 = vunpack.c.l.b16 %v1087
    %v1094 = vunpack.c.l.b16 %v1088
    %v1095 = vunpack.c.l.b16 %v1089
    %v1096 = vpack.c.b16 %v1094, %v1093
    %v1097 = vpack.c.b16 %v1095, %v1095
    %1100 = vmatprep.subr.bf16.mxu0 0
    %1101 = vmatpush1.bf16.msra.mxu0 %v103
    %1102 = vmatprep.subr.bf16.mxu0 0
    %1103 = vmatpush1.bf16.msra.mxu0 %v104
    %1104 = vmatprep.subr.bf16.mxu0 0
    %1105 = vmatpush1.bf16.msra.mxu0 %v105
    %1106 = vmatprep.subr.bf16.mxu0 0
    %1107 = vmatpush1.bf16.msra.mxu0 %v106
    %1108 = vmatprep.subr.bf16.mxu0 0
    %1109 = vmatpush1.bf16.msra.mxu0 %v107
    %1110 = vmatprep.subr.bf16.mxu0 0
    %1111 = vmatpush1.bf16.msra.mxu0 %v108
    %1112 = vmatprep.subr.bf16.mxu0 0
    %1113 = vmatpush1.bf16.msra.mxu0 %v109
    %1114 = vmatprep.subr.bf16.mxu0 0
    %1115 = vmatpush1.bf16.msra.mxu0 %v110
    %1116 = vmatprep.subr.bf16.mxu0 0
    %1117 = vmatpush1.bf16.msra.mxu0 0
    %1118 = vmatprep.subr.bf16.mxu0 0
    %1119 = vmatpush1.bf16.msra.mxu0 0
    %1120 = vmatprep.subr.bf16.mxu0 0
    %1121 = vmatpush1.bf16.msra.mxu0 0
    %1122 = vmatprep.subr.bf16.mxu0 0
    %1123 = vmatpush1.bf16.msra.mxu0 0
    %1124 = vmatprep.subr.bf16.mxu0 0
    %1125 = vmatpush1.bf16.msra.mxu0 0
    %1126 = vmatprep.subr.bf16.mxu0 0
    %1127 = vmatpush1.bf16.msra.mxu0 0
    %1128 = vmatprep.subr.bf16.mxu0 0
    %1129 = vmatpush1.bf16.msra.mxu0 0
    %1130 = vmatprep.subr.bf16.mxu0 0
    %1131 = vmatpush1.bf16.msra.mxu0 0
    %1132 = vmatprep.mubr.bf16.mxu0 0
    %1133 = vmatmul.mubr.bf16.gmra.mrb[0].mxu0 %v1096
    %v1134 = vpop.f32.mrb[0].mxu0
    %v1135 = vadd.f32 %v59, %v1134
    %v1136 = vpop.f32.mrb[0].mxu0
    %v1137 = vpop.f32.mrb[0].mxu0
    %v1138 = vadd.f32 %v59, %v1137
    %v1139 = vpop.f32.mrb[0].mxu0
    %1140 = vmatprep.mubr.bf16.mxu0 0
    %1141 = vmatmul.mubr.bf16.gmra.mrb[0].mxu0 %v1097
    %v1142 = vpop.f32.mrb[0].mxu0
    %v1143 = vadd.f32 %v59, %v1142
    %v1144 = vpop.f32.mrb[0].mxu0
    %v1145 = vpop.f32.mrb[0].mxu0
    %v1146 = vpop.f32.mrb[0].mxu0
    %1147 = vdwg.mxu0
    %v1148 = vmax.f32 %v1135, 0.0
    %v1149 = vmax.f32 %v1138, 0.0
    %v1150 = vmax.f32 %v1143, 0.0
    %v1151 = vpack.c.bf16 %v1149, %v1148
    %v1152 = vpack.c.bf16 %v1150, %v1150
    %s1153 = scalar_lea.vmem %s3, 112
    %v1154 = vld [vmem:[%s1153] sm:$0xf]
    %v1155 = vld [vmem:[%s1153 + $0x4] sm:$0xf]
    %v1156 = vld [vmem:[%s1153 + $0x8] sm:$0xf]
    %v1157 = vld [vmem:[%s1153 + $0xc] sm:$0xf]
    %v1162 = vunpack.c.l.b16 %v1154
    %v1163 = vunpack.c.l.b16 %v1155
    %v1164 = vunpack.c.l.b16 %v1156
    %v1165 = vunpack.c.l.b16 %v1157
    %v1166 = vpack.c.b16 %v1163, %v1162
    %v1167 = vpack.c.b16 %v1165, %v1164
    %v1171 = vsel %vm260, %v1151, 0
    %v1174 = vsel %vm260, %v1152, 0
    %1176 = vmatprep.subr.bf16.mxu0 0
    %1177 = vmatpush1.bf16.msra.mxu0 %v1166
    %1178 = vmatprep.subr.bf16.mxu0 0
    %1179 = vmatpush1.bf16.msra.mxu0 %v1167
    %1180 = vmatprep.subr.bf16.mxu0 0
    %1181 = vmatpush1.bf16.msra.mxu0 0
    %1182 = vmatprep.subr.bf16.mxu0 0
    %1183 = vmatpush1.bf16.msra.mxu0 0
    %1184 = vmatprep.subr.bf16.mxu0 0
    %1185 = vmatpush1.bf16.msra.mxu0 0
    %1186 = vmatprep.subr.bf16.mxu0 0
    %1187 = vmatpush1.bf16.msra.mxu0 0
    %1188 = vmatprep.subr.bf16.mxu0 0
    %1189 = vmatpush1.bf16.msra.mxu0 0
    %1190 = vmatprep.subr.bf16.mxu0 0
    %1191 = vmatpush1.bf16.msra.mxu0 0
    %1192 = vmatprep.subr.bf16.mxu0 0
    %1193 = vmatpush1.bf16.msra.mxu0 0
    %1194 = vmatprep.subr.bf16.mxu0 0
    %1195 = vmatpush1.bf16.msra.mxu0 0
    %1196 = vmatprep.subr.bf16.mxu0 0
    %1197 = vmatpush1.bf16.msra.mxu0 0
    %1198 = vmatprep.subr.bf16.mxu0 0
    %1199 = vmatpush1.bf16.msra.mxu0 0
    %1200 = vmatprep.subr.bf16.mxu0 0
    %1201 = vmatpush1.bf16.msra.mxu0 0
    %1202 = vmatprep.subr.bf16.mxu0 0
    %1203 = vmatpush1.bf16.msra.mxu0 0
    %1204 = vmatprep.subr.bf16.mxu0 0
    %1205 = vmatpush1.bf16.msra.mxu0 0
    %1206 = vmatprep.subr.bf16.mxu0 0
    %1207 = vmatpush1.bf16.msra.mxu0 0
    %1208 = vmatprep.mubr.bf16.mxu0 0
    %1209 = vmatmul.mubr.bf16.gmra.mrb[0].mxu0 %v1171
    %v1210 = vpop.f32.mrb[0].mxu0
    %v1211 = vadd.f32 0.0, %v1210
    %v1212 = vpop.f32.mrb[0].mxu0
    %v1213 = vpop.f32.mrb[0].mxu0
    %v1214 = vadd.f32 0.0, %v1213
    %v1215 = vpop.f32.mrb[0].mxu0
    %1216 = vmatprep.mubr.bf16.mxu0 0
    %1217 = vmatmul.mubr.bf16.gmra.mrb[0].mxu0 %v1174
    %v1218 = vpop.f32.mrb[0].mxu0
    %v1219 = vadd.f32 0.0, %v1218
    %v1220 = vpop.f32.mrb[0].mxu0
    %v1221 = vpop.f32.mrb[0].mxu0
    %v1222 = vpop.f32.mrb[0].mxu0
    %1223 = vdwg.mxu0
    %v1224 = vadd.f32 %v1083, %v1211
    %v1225 = vadd.f32 %v1084, %v1214
    %v1226 = vadd.f32 %v1085, %v1219
    %s1227 = scalar_lea.vmem %s0, 96
    %v1228 = vld [vmem:[%s1227] sm:$0xf]
    %v1229 = vld [vmem:[%s1227 + $0x4] sm:$0xf]
    %v1230 = vld [vmem:[%s1227 + $0x8] sm:$0x1]
    %v1234 = vunpack.c.l.b16 %v1228
    %v1235 = vunpack.c.l.b16 %v1229
    %v1236 = vunpack.c.l.b16 %v1230
    %v1237 = vpack.c.b16 %v1235, %v1234
    %v1238 = vpack.c.b16 %v1236, %v1236
    %1241 = vmatprep.subr.bf16.mxu0 0
    %1242 = vmatpush1.bf16.msra.mxu0 %v103
    %1243 = vmatprep.subr.bf16.mxu0 0
    %1244 = vmatpush1.bf16.msra.mxu0 %v104
    %1245 = vmatprep.subr.bf16.mxu0 0
    %1246 = vmatpush1.bf16.msra.mxu0 %v105
    %1247 = vmatprep.subr.bf16.mxu0 0
    %1248 = vmatpush1.bf16.msra.mxu0 %v106
    %1249 = vmatprep.subr.bf16.mxu0 0
    %1250 = vmatpush1.bf16.msra.mxu0 %v107
    %1251 = vmatprep.subr.bf16.mxu0 0
    %1252 = vmatpush1.bf16.msra.mxu0 %v108
    %1253 = vmatprep.subr.bf16.mxu0 0
    %1254 = vmatpush1.bf16.msra.mxu0 %v109
    %1255 = vmatprep.subr.bf16.mxu0 0
    %1256 = vmatpush1.bf16.msra.mxu0 %v110
    %1257 = vmatprep.subr.bf16.mxu0 0
    %1258 = vmatpush1.bf16.msra.mxu0 0
    %1259 = vmatprep.subr.bf16.mxu0 0
    %1260 = vmatpush1.bf16.msra.mxu0 0
    %1261 = vmatprep.subr.bf16.mxu0 0
    %1262 = vmatpush1.bf16.msra.mxu0 0
    %1263 = vmatprep.subr.bf16.mxu0 0
    %1264 = vmatpush1.bf16.msra.mxu0 0
    %1265 = vmatprep.subr.bf16.mxu0 0
    %1266 = vmatpush1.bf16.msra.mxu0 0
    %1267 = vmatprep.subr.bf16.mxu0 0
    %1268 = vmatpush1.bf16.msra.mxu0 0
    %1269 = vmatprep.subr.bf16.mxu0 0
    %1270 = vmatpush1.bf16.msra.mxu0 0
    %1271 = vmatprep.subr.bf16.mxu0 0
    %1272 = vmatpush1.bf16.msra.mxu0 0
    %1273 = vmatprep.mubr.bf16.mxu0 0
    %1274 = vmatmul.mubr.bf16.gmra.mrb[0].mxu0 %v1237
    %v1275 = vpop.f32.mrb[0].mxu0
    %v1276 = vadd.f32 %v59, %v1275
    %v1277 = vpop.f32.mrb[0].mxu0
    %v1278 = vpop.f32.mrb[0].mxu0
    %v1279 = vadd.f32 %v59, %v1278
    %v1280 = vpop.f32.mrb[0].mxu0
    %1281 = vmatprep.mubr.bf16.mxu0 0
    %1282 = vmatmul.mubr.bf16.gmra.mrb[0].mxu0 %v1238
    %v1283 = vpop.f32.mrb[0].mxu0
    %v1284 = vadd.f32 %v59, %v1283
    %v1285 = vpop.f32.mrb[0].mxu0
    %v1286 = vpop.f32.mrb[0].mxu0
    %v1287 = vpop.f32.mrb[0].mxu0
    %1288 = vdwg.mxu0
    %v1289 = vmax.f32 %v1276, 0.0
    %v1290 = vmax.f32 %v1279, 0.0
    %v1291 = vmax.f32 %v1284, 0.0
    %v1292 = vpack.c.bf16 %v1290, %v1289
    %v1293 = vpack.c.bf16 %v1291, %v1291
    %s1294 = scalar_lea.vmem %s3, 128
    %v1295 = vld [vmem:[%s1294] sm:$0xf]
    %v1296 = vld [vmem:[%s1294 + $0x4] sm:$0xf]
    %v1297 = vld [vmem:[%s1294 + $0x8] sm:$0xf]
    %v1298 = vld [vmem:[%s1294 + $0xc] sm:$0xf]
    %v1303 = vunpack.c.l.b16 %v1295
    %v1304 = vunpack.c.l.b16 %v1296
    %v1305 = vunpack.c.l.b16 %v1297
    %v1306 = vunpack.c.l.b16 %v1298
    %v1307 = vpack.c.b16 %v1304, %v1303
    %v1308 = vpack.c.b16 %v1306, %v1305
    %v1312 = vsel %vm260, %v1292, 0
    %v1315 = vsel %vm260, %v1293, 0
    %1317 = vmatprep.subr.bf16.mxu0 0
    %1318 = vmatpush1.bf16.msra.mxu0 %v1307
    %1319 = vmatprep.subr.bf16.mxu0 0
    %1320 = vmatpush1.bf16.msra.mxu0 %v1308
    %1321 = vmatprep.subr.bf16.mxu0 0
    %1322 = vmatpush1.bf16.msra.mxu0 0
    %1323 = vmatprep.subr.bf16.mxu0 0
    %1324 = vmatpush1.bf16.msra.mxu0 0
    %1325 = vmatprep.subr.bf16.mxu0 0
    %1326 = vmatpush1.bf16.msra.mxu0 0
    %1327 = vmatprep.subr.bf16.mxu0 0
    %1328 = vmatpush1.bf16.msra.mxu0 0
    %1329 = vmatprep.subr.bf16.mxu0 0
    %1330 = vmatpush1.bf16.msra.mxu0 0
    %1331 = vmatprep.subr.bf16.mxu0 0
    %1332 = vmatpush1.bf16.msra.mxu0 0
    %1333 = vmatprep.subr.bf16.mxu0 0
    %1334 = vmatpush1.bf16.msra.mxu0 0
    %1335 = vmatprep.subr.bf16.mxu0 0
    %1336 = vmatpush1.bf16.msra.mxu0 0
    %1337 = vmatprep.subr.bf16.mxu0 0
    %1338 = vmatpush1.bf16.msra.mxu0 0
    %1339 = vmatprep.subr.bf16.mxu0 0
    %1340 = vmatpush1.bf16.msra.mxu0 0
    %1341 = vmatprep.subr.bf16.mxu0 0
    %1342 = vmatpush1.bf16.msra.mxu0 0
    %1343 = vmatprep.subr.bf16.mxu0 0
    %1344 = vmatpush1.bf16.msra.mxu0 0
    %1345 = vmatprep.subr.bf16.mxu0 0
    %1346 = vmatpush1.bf16.msra.mxu0 0
    %1347 = vmatprep.subr.bf16.mxu0 0
    %1348 = vmatpush1.bf16.msra.mxu0 0
    %1349 = vmatprep.mubr.bf16.mxu0 0
    %1350 = vmatmul.mubr.bf16.gmra.mrb[0].mxu0 %v1312
    %v1351 = vpop.f32.mrb[0].mxu0
    %v1352 = vadd.f32 0.0, %v1351
    %v1353 = vpop.f32.mrb[0].mxu0
    %v1354 = vpop.f32.mrb[0].mxu0
    %v1355 = vadd.f32 0.0, %v1354
    %v1356 = vpop.f32.mrb[0].mxu0
    %1357 = vmatprep.mubr.bf16.mxu0 0
    %1358 = vmatmul.mubr.bf16.gmra.mrb[0].mxu0 %v1315
    %v1359 = vpop.f32.mrb[0].mxu0
    %v1360 = vadd.f32 0.0, %v1359
    %v1361 = vpop.f32.mrb[0].mxu0
    %v1362 = vpop.f32.mrb[0].mxu0
    %v1363 = vpop.f32.mrb[0].mxu0
    %1364 = vdwg.mxu0
    %v1365 = vadd.f32 %v1224, %v1352
    %v1366 = vadd.f32 %v1225, %v1355
    %v1367 = vadd.f32 %v1226, %v1360
    %s1368 = scalar_lea.vmem %s0, 108
    %v1369 = vld [vmem:[%s1368] sm:$0xf]
    %v1370 = vld [vmem:[%s1368 + $0x4] sm:$0xf]
    %v1371 = vld [vmem:[%s1368 + $0x8] sm:$0x1]
    %v1375 = vunpack.c.l.b16 %v1369
    %v1376 = vunpack.c.l.b16 %v1370
    %v1377 = vunpack.c.l.b16 %v1371
    %v1378 = vpack.c.b16 %v1376, %v1375
    %v1379 = vpack.c.b16 %v1377, %v1377
    %1382 = vmatprep.subr.bf16.mxu0 0
    %1383 = vmatpush1.bf16.msra.mxu0 %v103
    %1384 = vmatprep.subr.bf16.mxu0 0
    %1385 = vmatpush1.bf16.msra.mxu0 %v104
    %1386 = vmatprep.subr.bf16.mxu0 0
    %1387 = vmatpush1.bf16.msra.mxu0 %v105
    %1388 = vmatprep.subr.bf16.mxu0 0
    %1389 = vmatpush1.bf16.msra.mxu0 %v106
    %1390 = vmatprep.subr.bf16.mxu0 0
    %1391 = vmatpush1.bf16.msra.mxu0 %v107
    %1392 = vmatprep.subr.bf16.mxu0 0
    %1393 = vmatpush1.bf16.msra.mxu0 %v108
    %1394 = vmatprep.subr.bf16.mxu0 0
    %1395 = vmatpush1.bf16.msra.mxu0 %v109
    %1396 = vmatprep.subr.bf16.mxu0 0
    %1397 = vmatpush1.bf16.msra.mxu0 %v110
    %1398 = vmatprep.subr.bf16.mxu0 0
    %1399 = vmatpush1.bf16.msra.mxu0 0
    %1400 = vmatprep.subr.bf16.mxu0 0
    %1401 = vmatpush1.bf16.msra.mxu0 0
    %1402 = vmatprep.subr.bf16.mxu0 0
    %1403 = vmatpush1.bf16.msra.mxu0 0
    %1404 = vmatprep.subr.bf16.mxu0 0
    %1405 = vmatpush1.bf16.msra.mxu0 0
    %1406 = vmatprep.subr.bf16.mxu0 0
    %1407 = vmatpush1.bf16.msra.mxu0 0
    %1408 = vmatprep.subr.bf16.mxu0 0
    %1409 = vmatpush1.bf16.msra.mxu0 0
    %1410 = vmatprep.subr.bf16.mxu0 0
    %1411 = vmatpush1.bf16.msra.mxu0 0
    %1412 = vmatprep.subr.bf16.mxu0 0
    %1413 = vmatpush1.bf16.msra.mxu0 0
    %1414 = vmatprep.mubr.bf16.mxu0 0
    %1415 = vmatmul.mubr.bf16.gmra.mrb[0].mxu0 %v1378
    %v1416 = vpop.f32.mrb[0].mxu0
    %v1417 = vadd.f32 %v59, %v1416
    %v1418 = vpop.f32.mrb[0].mxu0
    %v1419 = vpop.f32.mrb[0].mxu0
    %v1420 = vadd.f32 %v59, %v1419
    %v1421 = vpop.f32.mrb[0].mxu0
    %1422 = vmatprep.mubr.bf16.mxu0 0
    %1423 = vmatmul.mubr.bf16.gmra.mrb[0].mxu0 %v1379
    %v1424 = vpop.f32.mrb[0].mxu0
    %v1425 = vadd.f32 %v59, %v1424
    %v1426 = vpop.f32.mrb[0].mxu0
    %v1427 = vpop.f32.mrb[0].mxu0
    %v1428 = vpop.f32.mrb[0].mxu0
    %1429 = vdwg.mxu0
    %v1430 = vmax.f32 %v1417, 0.0
    %v1431 = vmax.f32 %v1420, 0.0
    %v1432 = vmax.f32 %v1425, 0.0
    %v1433 = vpack.c.bf16 %v1431, %v1430
    %v1434 = vpack.c.bf16 %v1432, %v1432
    %s1435 = scalar_lea.vmem %s3, 144
    %v1436 = vld [vmem:[%s1435] sm:$0xf]
    %v1437 = vld [vmem:[%s1435 + $0x4] sm:$0xf]
    %v1438 = vld [vmem:[%s1435 + $0x8] sm:$0xf]
    %v1439 = vld [vmem:[%s1435 + $0xc] sm:$0xf]
    %v1444 = vunpack.c.l.b16 %v1436
    %v1445 = vunpack.c.l.b16 %v1437
    %v1446 = vunpack.c.l.b16 %v1438
    %v1447 = vunpack.c.l.b16 %v1439
    %v1448 = vpack.c.b16 %v1445, %v1444
    %v1449 = vpack.c.b16 %v1447, %v1446
    %v1453 = vsel %vm260, %v1433, 0
    %v1456 = vsel %vm260, %v1434, 0
    %1458 = vmatprep.subr.bf16.mxu0 0
    %1459 = vmatpush1.bf16.msra.mxu0 %v1448
    %1460 = vmatprep.subr.bf16.mxu0 0
    %1461 = vmatpush1.bf16.msra.mxu0 %v1449
    %1462 = vmatprep.subr.bf16.mxu0 0
    %1463 = vmatpush1.bf16.msra.mxu0 0
    %1464 = vmatprep.subr.bf16.mxu0 0
    %1465 = vmatpush1.bf16.msra.mxu0 0
    %1466 = vmatprep.subr.bf16.mxu0 0
    %1467 = vmatpush1.bf16.msra.mxu0 0
    %1468 = vmatprep.subr.bf16.mxu0 0
    %1469 = vmatpush1.bf16.msra.mxu0 0
    %1470 = vmatprep.subr.bf16.mxu0 0
    %1471 = vmatpush1.bf16.msra.mxu0 0
    %1472 = vmatprep.subr.bf16.mxu0 0
    %1473 = vmatpush1.bf16.msra.mxu0 0
    %1474 = vmatprep.subr.bf16.mxu0 0
    %1475 = vmatpush1.bf16.msra.mxu0 0
    %1476 = vmatprep.subr.bf16.mxu0 0
    %1477 = vmatpush1.bf16.msra.mxu0 0
    %1478 = vmatprep.subr.bf16.mxu0 0
    %1479 = vmatpush1.bf16.msra.mxu0 0
    %1480 = vmatprep.subr.bf16.mxu0 0
    %1481 = vmatpush1.bf16.msra.mxu0 0
    %1482 = vmatprep.subr.bf16.mxu0 0
    %1483 = vmatpush1.bf16.msra.mxu0 0
    %1484 = vmatprep.subr.bf16.mxu0 0
    %1485 = vmatpush1.bf16.msra.mxu0 0
    %1486 = vmatprep.subr.bf16.mxu0 0
    %1487 = vmatpush1.bf16.msra.mxu0 0
    %1488 = vmatprep.subr.bf16.mxu0 0
    %1489 = vmatpush1.bf16.msra.mxu0 0
    %1490 = vmatprep.mubr.bf16.mxu0 0
    %1491 = vmatmul.mubr.bf16.gmra.mrb[0].mxu0 %v1453
    %v1492 = vpop.f32.mrb[0].mxu0
    %v1493 = vadd.f32 0.0, %v1492
    %v1494 = vpop.f32.mrb[0].mxu0
    %v1495 = vpop.f32.mrb[0].mxu0
    %v1496 = vadd.f32 0.0, %v1495
    %v1497 = vpop.f32.mrb[0].mxu0
    %1498 = vmatprep.mubr.bf16.mxu0 0
    %1499 = vmatmul.mubr.bf16.gmra.mrb[0].mxu0 %v1456
    %v1500 = vpop.f32.mrb[0].mxu0
    %v1501 = vadd.f32 0.0, %v1500
    %v1502 = vpop.f32.mrb[0].mxu0
    %v1503 = vpop.f32.mrb[0].mxu0
    %v1504 = vpop.f32.mrb[0].mxu0
    %1505 = vdwg.mxu0
    %v1506 = vadd.f32 %v1365, %v1493
    %v1507 = vadd.f32 %v1366, %v1496
    %v1508 = vadd.f32 %v1367, %v1501
    %s1509 = scalar_lea.vmem %s0, 120
    %v1510 = vld [vmem:[%s1509] sm:$0xf]
    %v1511 = vld [vmem:[%s1509 + $0x4] sm:$0xf]
    %v1512 = vld [vmem:[%s1509 + $0x8] sm:$0x1]
    %v1516 = vunpack.c.l.b16 %v1510
    %v1517 = vunpack.c.l.b16 %v1511
    %v1518 = vunpack.c.l.b16 %v1512
    %v1519 = vpack.c.b16 %v1517, %v1516
    %v1520 = vpack.c.b16 %v1518, %v1518
    %1523 = vmatprep.subr.bf16.mxu0 0
    %1524 = vmatpush1.bf16.msra.mxu0 %v103
    %1525 = vmatprep.subr.bf16.mxu0 0
    %1526 = vmatpush1.bf16.msra.mxu0 %v104
    %1527 = vmatprep.subr.bf16.mxu0 0
    %1528 = vmatpush1.bf16.msra.mxu0 %v105
    %1529 = vmatprep.subr.bf16.mxu0 0
    %1530 = vmatpush1.bf16.msra.mxu0 %v106
    %1531 = vmatprep.subr.bf16.mxu0 0
    %1532 = vmatpush1.bf16.msra.mxu0 %v107
    %1533 = vmatprep.subr.bf16.mxu0 0
    %1534 = vmatpush1.bf16.msra.mxu0 %v108
    %1535 = vmatprep.subr.bf16.mxu0 0
    %1536 = vmatpush1.bf16.msra.mxu0 %v109
    %1537 = vmatprep.subr.bf16.mxu0 0
    %1538 = vmatpush1.bf16.msra.mxu0 %v110
    %1539 = vmatprep.subr.bf16.mxu0 0
    %1540 = vmatpush1.bf16.msra.mxu0 0
    %1541 = vmatprep.subr.bf16.mxu0 0
    %1542 = vmatpush1.bf16.msra.mxu0 0
    %1543 = vmatprep.subr.bf16.mxu0 0
    %1544 = vmatpush1.bf16.msra.mxu0 0
    %1545 = vmatprep.subr.bf16.mxu0 0
    %1546 = vmatpush1.bf16.msra.mxu0 0
    %1547 = vmatprep.subr.bf16.mxu0 0
    %1548 = vmatpush1.bf16.msra.mxu0 0
    %1549 = vmatprep.subr.bf16.mxu0 0
    %1550 = vmatpush1.bf16.msra.mxu0 0
    %1551 = vmatprep.subr.bf16.mxu0 0
    %1552 = vmatpush1.bf16.msra.mxu0 0
    %1553 = vmatprep.subr.bf16.mxu0 0
    %1554 = vmatpush1.bf16.msra.mxu0 0
    %1555 = vmatprep.mubr.bf16.mxu0 0
    %1556 = vmatmul.mubr.bf16.gmra.mrb[0].mxu0 %v1519
    %v1557 = vpop.f32.mrb[0].mxu0
    %v1558 = vadd.f32 %v59, %v1557
    %v1559 = vpop.f32.mrb[0].mxu0
    %v1560 = vpop.f32.mrb[0].mxu0
    %v1561 = vadd.f32 %v59, %v1560
    %v1562 = vpop.f32.mrb[0].mxu0
    %1563 = vmatprep.mubr.bf16.mxu0 0
    %1564 = vmatmul.mubr.bf16.gmra.mrb[0].mxu0 %v1520
    %v1565 = vpop.f32.mrb[0].mxu0
    %v1566 = vadd.f32 %v59, %v1565
    %v1567 = vpop.f32.mrb[0].mxu0
    %v1568 = vpop.f32.mrb[0].mxu0
    %v1569 = vpop.f32.mrb[0].mxu0
    %1570 = vdwg.mxu0
    %v1571 = vmax.f32 %v1558, 0.0
    %v1572 = vmax.f32 %v1561, 0.0
    %v1573 = vmax.f32 %v1566, 0.0
    %v1574 = vpack.c.bf16 %v1572, %v1571
    %v1575 = vpack.c.bf16 %v1573, %v1573
    %s1576 = scalar_lea.vmem %s3, 160
    %v1577 = vld [vmem:[%s1576] sm:$0xf]
    %v1578 = vld [vmem:[%s1576 + $0x4] sm:$0xf]
    %v1579 = vld [vmem:[%s1576 + $0x8] sm:$0xf]
    %v1580 = vld [vmem:[%s1576 + $0xc] sm:$0xf]
    %v1585 = vunpack.c.l.b16 %v1577
    %v1586 = vunpack.c.l.b16 %v1578
    %v1587 = vunpack.c.l.b16 %v1579
    %v1588 = vunpack.c.l.b16 %v1580
    %v1589 = vpack.c.b16 %v1586, %v1585
    %v1590 = vpack.c.b16 %v1588, %v1587
    %v1594 = vsel %vm260, %v1574, 0
    %v1597 = vsel %vm260, %v1575, 0
    %1599 = vmatprep.subr.bf16.mxu0 0
    %1600 = vmatpush1.bf16.msra.mxu0 %v1589
    %1601 = vmatprep.subr.bf16.mxu0 0
    %1602 = vmatpush1.bf16.msra.mxu0 %v1590
    %1603 = vmatprep.subr.bf16.mxu0 0
    %1604 = vmatpush1.bf16.msra.mxu0 0
    %1605 = vmatprep.subr.bf16.mxu0 0
    %1606 = vmatpush1.bf16.msra.mxu0 0
    %1607 = vmatprep.subr.bf16.mxu0 0
    %1608 = vmatpush1.bf16.msra.mxu0 0
    %1609 = vmatprep.subr.bf16.mxu0 0
    %1610 = vmatpush1.bf16.msra.mxu0 0
    %1611 = vmatprep.subr.bf16.mxu0 0
    %1612 = vmatpush1.bf16.msra.mxu0 0
    %1613 = vmatprep.subr.bf16.mxu0 0
    %1614 = vmatpush1.bf16.msra.mxu0 0
    %1615 = vmatprep.subr.bf16.mxu0 0
    %1616 = vmatpush1.bf16.msra.mxu0 0
    %1617 = vmatprep.subr.bf16.mxu0 0
    %1618 = vmatpush1.bf16.msra.mxu0 0
    %1619 = vmatprep.subr.bf16.mxu0 0
    %1620 = vmatpush1.bf16.msra.mxu0 0
    %1621 = vmatprep.subr.bf16.mxu0 0
    %1622 = vmatpush1.bf16.msra.mxu0 0
    %1623 = vmatprep.subr.bf16.mxu0 0
    %1624 = vmatpush1.bf16.msra.mxu0 0
    %1625 = vmatprep.subr.bf16.mxu0 0
    %1626 = vmatpush1.bf16.msra.mxu0 0
    %1627 = vmatprep.subr.bf16.mxu0 0
    %1628 = vmatpush1.bf16.msra.mxu0 0
    %1629 = vmatprep.subr.bf16.mxu0 0
    %1630 = vmatpush1.bf16.msra.mxu0 0
    %1631 = vmatprep.mubr.bf16.mxu0 0
    %1632 = vmatmul.mubr.bf16.gmra.mrb[0].mxu0 %v1594
    %v1633 = vpop.f32.mrb[0].mxu0
    %v1634 = vadd.f32 0.0, %v1633
    %v1635 = vpop.f32.mrb[0].mxu0
    %v1636 = vpop.f32.mrb[0].mxu0
    %v1637 = vadd.f32 0.0, %v1636
    %v1638 = vpop.f32.mrb[0].mxu0
    %1639 = vmatprep.mubr.bf16.mxu0 0
    %1640 = vmatmul.mubr.bf16.gmra.mrb[0].mxu0 %v1597
    %v1641 = vpop.f32.mrb[0].mxu0
    %v1642 = vadd.f32 0.0, %v1641
    %v1643 = vpop.f32.mrb[0].mxu0
    %v1644 = vpop.f32.mrb[0].mxu0
    %v1645 = vpop.f32.mrb[0].mxu0
    %1646 = vdwg.mxu0
    %v1647 = vadd.f32 %v1506, %v1634
    %v1648 = vadd.f32 %v1507, %v1637
    %v1649 = vadd.f32 %v1508, %v1642
    %s1650 = scalar_lea.vmem %s0, 132
    %v1651 = vld [vmem:[%s1650] sm:$0xf]
    %v1652 = vld [vmem:[%s1650 + $0x4] sm:$0xf]
    %v1653 = vld [vmem:[%s1650 + $0x8] sm:$0x1]
    %v1657 = vunpack.c.l.b16 %v1651
    %v1658 = vunpack.c.l.b16 %v1652
    %v1659 = vunpack.c.l.b16 %v1653
    %v1660 = vpack.c.b16 %v1658, %v1657
    %v1661 = vpack.c.b16 %v1659, %v1659
    %1664 = vmatprep.subr.bf16.mxu0 0
    %1665 = vmatpush1.bf16.msra.mxu0 %v103
    %1666 = vmatprep.subr.bf16.mxu0 0
    %1667 = vmatpush1.bf16.msra.mxu0 %v104
    %1668 = vmatprep.subr.bf16.mxu0 0
    %1669 = vmatpush1.bf16.msra.mxu0 %v105
    %1670 = vmatprep.subr.bf16.mxu0 0
    %1671 = vmatpush1.bf16.msra.mxu0 %v106
    %1672 = vmatprep.subr.bf16.mxu0 0
    %1673 = vmatpush1.bf16.msra.mxu0 %v107
    %1674 = vmatprep.subr.bf16.mxu0 0
    %1675 = vmatpush1.bf16.msra.mxu0 %v108
    %1676 = vmatprep.subr.bf16.mxu0 0
    %1677 = vmatpush1.bf16.msra.mxu0 %v109
    %1678 = vmatprep.subr.bf16.mxu0 0
    %1679 = vmatpush1.bf16.msra.mxu0 %v110
    %1680 = vmatprep.subr.bf16.mxu0 0
    %1681 = vmatpush1.bf16.msra.mxu0 0
    %1682 = vmatprep.subr.bf16.mxu0 0
    %1683 = vmatpush1.bf16.msra.mxu0 0
    %1684 = vmatprep.subr.bf16.mxu0 0
    %1685 = vmatpush1.bf16.msra.mxu0 0
    %1686 = vmatprep.subr.bf16.mxu0 0
    %1687 = vmatpush1.bf16.msra.mxu0 0
    %1688 = vmatprep.subr.bf16.mxu0 0
    %1689 = vmatpush1.bf16.msra.mxu0 0
    %1690 = vmatprep.subr.bf16.mxu0 0
    %1691 = vmatpush1.bf16.msra.mxu0 0
    %1692 = vmatprep.subr.bf16.mxu0 0
    %1693 = vmatpush1.bf16.msra.mxu0 0
    %1694 = vmatprep.subr.bf16.mxu0 0
    %1695 = vmatpush1.bf16.msra.mxu0 0
    %1696 = vmatprep.mubr.bf16.mxu0 0
    %1697 = vmatmul.mubr.bf16.gmra.mrb[0].mxu0 %v1660
    %v1698 = vpop.f32.mrb[0].mxu0
    %v1699 = vadd.f32 %v59, %v1698
    %v1700 = vpop.f32.mrb[0].mxu0
    %v1701 = vpop.f32.mrb[0].mxu0
    %v1702 = vadd.f32 %v59, %v1701
    %v1703 = vpop.f32.mrb[0].mxu0
    %1704 = vmatprep.mubr.bf16.mxu0 0
    %1705 = vmatmul.mubr.bf16.gmra.mrb[0].mxu0 %v1661
    %v1706 = vpop.f32.mrb[0].mxu0
    %v1707 = vadd.f32 %v59, %v1706
    %v1708 = vpop.f32.mrb[0].mxu0
    %v1709 = vpop.f32.mrb[0].mxu0
    %v1710 = vpop.f32.mrb[0].mxu0
    %1711 = vdwg.mxu0
    %v1712 = vmax.f32 %v1699, 0.0
    %v1713 = vmax.f32 %v1702, 0.0
    %v1714 = vmax.f32 %v1707, 0.0
    %v1715 = vpack.c.bf16 %v1713, %v1712
    %v1716 = vpack.c.bf16 %v1714, %v1714
    %s1717 = scalar_lea.vmem %s3, 176
    %v1718 = vld [vmem:[%s1717] sm:$0xf]
    %v1719 = vld [vmem:[%s1717 + $0x4] sm:$0xf]
    %v1720 = vld [vmem:[%s1717 + $0x8] sm:$0xf]
    %v1721 = vld [vmem:[%s1717 + $0xc] sm:$0xf]
    %v1726 = vunpack.c.l.b16 %v1718
    %v1727 = vunpack.c.l.b16 %v1719
    %v1728 = vunpack.c.l.b16 %v1720
    %v1729 = vunpack.c.l.b16 %v1721
    %v1730 = vpack.c.b16 %v1727, %v1726
    %v1731 = vpack.c.b16 %v1729, %v1728
    %v1735 = vsel %vm260, %v1715, 0
    %v1738 = vsel %vm260, %v1716, 0
    %1740 = vmatprep.subr.bf16.mxu0 0
    %1741 = vmatpush1.bf16.msra.mxu0 %v1730
    %1742 = vmatprep.subr.bf16.mxu0 0
    %1743 = vmatpush1.bf16.msra.mxu0 %v1731
    %1744 = vmatprep.subr.bf16.mxu0 0
    %1745 = vmatpush1.bf16.msra.mxu0 0
    %1746 = vmatprep.subr.bf16.mxu0 0
    %1747 = vmatpush1.bf16.msra.mxu0 0
    %1748 = vmatprep.subr.bf16.mxu0 0
    %1749 = vmatpush1.bf16.msra.mxu0 0
    %1750 = vmatprep.subr.bf16.mxu0 0
    %1751 = vmatpush1.bf16.msra.mxu0 0
    %1752 = vmatprep.subr.bf16.mxu0 0
    %1753 = vmatpush1.bf16.msra.mxu0 0
    %1754 = vmatprep.subr.bf16.mxu0 0
    %1755 = vmatpush1.bf16.msra.mxu0 0
    %1756 = vmatprep.subr.bf16.mxu0 0
    %1757 = vmatpush1.bf16.msra.mxu0 0
    %1758 = vmatprep.subr.bf16.mxu0 0
    %1759 = vmatpush1.bf16.msra.mxu0 0
    %1760 = vmatprep.subr.bf16.mxu0 0
    %1761 = vmatpush1.bf16.msra.mxu0 0
    %1762 = vmatprep.subr.bf16.mxu0 0
    %1763 = vmatpush1.bf16.msra.mxu0 0
    %1764 = vmatprep.subr.bf16.mxu0 0
    %1765 = vmatpush1.bf16.msra.mxu0 0
    %1766 = vmatprep.subr.bf16.mxu0 0
    %1767 = vmatpush1.bf16.msra.mxu0 0
    %1768 = vmatprep.subr.bf16.mxu0 0
    %1769 = vmatpush1.bf16.msra.mxu0 0
    %1770 = vmatprep.subr.bf16.mxu0 0
    %1771 = vmatpush1.bf16.msra.mxu0 0
    %1772 = vmatprep.mubr.bf16.mxu0 0
    %1773 = vmatmul.mubr.bf16.gmra.mrb[0].mxu0 %v1735
    %v1774 = vpop.f32.mrb[0].mxu0
    %v1775 = vadd.f32 0.0, %v1774
    %v1776 = vpop.f32.mrb[0].mxu0
    %v1777 = vpop.f32.mrb[0].mxu0
    %v1778 = vadd.f32 0.0, %v1777
    %v1779 = vpop.f32.mrb[0].mxu0
    %1780 = vmatprep.mubr.bf16.mxu0 0
    %1781 = vmatmul.mubr.bf16.gmra.mrb[0].mxu0 %v1738
    %v1782 = vpop.f32.mrb[0].mxu0
    %v1783 = vadd.f32 0.0, %v1782
    %v1784 = vpop.f32.mrb[0].mxu0
    %v1785 = vpop.f32.mrb[0].mxu0
    %v1786 = vpop.f32.mrb[0].mxu0
    %1787 = vdwg.mxu0
    %v1788 = vadd.f32 %v1647, %v1775
    %v1789 = vadd.f32 %v1648, %v1778
    %v1790 = vadd.f32 %v1649, %v1783
    %s1791 = scalar_lea.vmem %s0, 144
    %v1792 = vld [vmem:[%s1791] sm:$0xf]
    %v1793 = vld [vmem:[%s1791 + $0x4] sm:$0xf]
    %v1794 = vld [vmem:[%s1791 + $0x8] sm:$0x1]
    %v1798 = vunpack.c.l.b16 %v1792
    %v1799 = vunpack.c.l.b16 %v1793
    %v1800 = vunpack.c.l.b16 %v1794
    %v1801 = vpack.c.b16 %v1799, %v1798
    %v1802 = vpack.c.b16 %v1800, %v1800
    %1805 = vmatprep.subr.bf16.mxu0 0
    %1806 = vmatpush1.bf16.msra.mxu0 %v103
    %1807 = vmatprep.subr.bf16.mxu0 0
    %1808 = vmatpush1.bf16.msra.mxu0 %v104
    %1809 = vmatprep.subr.bf16.mxu0 0
    %1810 = vmatpush1.bf16.msra.mxu0 %v105
    %1811 = vmatprep.subr.bf16.mxu0 0
    %1812 = vmatpush1.bf16.msra.mxu0 %v106
    %1813 = vmatprep.subr.bf16.mxu0 0
    %1814 = vmatpush1.bf16.msra.mxu0 %v107
    %1815 = vmatprep.subr.bf16.mxu0 0
    %1816 = vmatpush1.bf16.msra.mxu0 %v108
    %1817 = vmatprep.subr.bf16.mxu0 0
    %1818 = vmatpush1.bf16.msra.mxu0 %v109
    %1819 = vmatprep.subr.bf16.mxu0 0
    %1820 = vmatpush1.bf16.msra.mxu0 %v110
    %1821 = vmatprep.subr.bf16.mxu0 0
    %1822 = vmatpush1.bf16.msra.mxu0 0
    %1823 = vmatprep.subr.bf16.mxu0 0
    %1824 = vmatpush1.bf16.msra.mxu0 0
    %1825 = vmatprep.subr.bf16.mxu0 0
    %1826 = vmatpush1.bf16.msra.mxu0 0
    %1827 = vmatprep.subr.bf16.mxu0 0
    %1828 = vmatpush1.bf16.msra.mxu0 0
    %1829 = vmatprep.subr.bf16.mxu0 0
    %1830 = vmatpush1.bf16.msra.mxu0 0
    %1831 = vmatprep.subr.bf16.mxu0 0
    %1832 = vmatpush1.bf16.msra.mxu0 0
    %1833 = vmatprep.subr.bf16.mxu0 0
    %1834 = vmatpush1.bf16.msra.mxu0 0
    %1835 = vmatprep.subr.bf16.mxu0 0
    %1836 = vmatpush1.bf16.msra.mxu0 0
    %1837 = vmatprep.mubr.bf16.mxu0 0
    %1838 = vmatmul.mubr.bf16.gmra.mrb[0].mxu0 %v1801
    %v1839 = vpop.f32.mrb[0].mxu0
    %v1840 = vadd.f32 %v59, %v1839
    %v1841 = vpop.f32.mrb[0].mxu0
    %v1842 = vpop.f32.mrb[0].mxu0
    %v1843 = vadd.f32 %v59, %v1842
    %v1844 = vpop.f32.mrb[0].mxu0
    %1845 = vmatprep.mubr.bf16.mxu0 0
    %1846 = vmatmul.mubr.bf16.gmra.mrb[0].mxu0 %v1802
    %v1847 = vpop.f32.mrb[0].mxu0
    %v1848 = vadd.f32 %v59, %v1847
    %v1849 = vpop.f32.mrb[0].mxu0
    %v1850 = vpop.f32.mrb[0].mxu0
    %v1851 = vpop.f32.mrb[0].mxu0
    %1852 = vdwg.mxu0
    %v1853 = vmax.f32 %v1840, 0.0
    %v1854 = vmax.f32 %v1843, 0.0
    %v1855 = vmax.f32 %v1848, 0.0
    %v1856 = vpack.c.bf16 %v1854, %v1853
    %v1857 = vpack.c.bf16 %v1855, %v1855
    %s1858 = scalar_lea.vmem %s3, 192
    %v1859 = vld [vmem:[%s1858] sm:$0xf]
    %v1860 = vld [vmem:[%s1858 + $0x4] sm:$0xf]
    %v1861 = vld [vmem:[%s1858 + $0x8] sm:$0xf]
    %v1862 = vld [vmem:[%s1858 + $0xc] sm:$0xf]
    %v1867 = vunpack.c.l.b16 %v1859
    %v1868 = vunpack.c.l.b16 %v1860
    %v1869 = vunpack.c.l.b16 %v1861
    %v1870 = vunpack.c.l.b16 %v1862
    %v1871 = vpack.c.b16 %v1868, %v1867
    %v1872 = vpack.c.b16 %v1870, %v1869
    %v1876 = vsel %vm260, %v1856, 0
    %v1879 = vsel %vm260, %v1857, 0
    %1881 = vmatprep.subr.bf16.mxu0 0
    %1882 = vmatpush1.bf16.msra.mxu0 %v1871
    %1883 = vmatprep.subr.bf16.mxu0 0
    %1884 = vmatpush1.bf16.msra.mxu0 %v1872
    %1885 = vmatprep.subr.bf16.mxu0 0
    %1886 = vmatpush1.bf16.msra.mxu0 0
    %1887 = vmatprep.subr.bf16.mxu0 0
    %1888 = vmatpush1.bf16.msra.mxu0 0
    %1889 = vmatprep.subr.bf16.mxu0 0
    %1890 = vmatpush1.bf16.msra.mxu0 0
    %1891 = vmatprep.subr.bf16.mxu0 0
    %1892 = vmatpush1.bf16.msra.mxu0 0
    %1893 = vmatprep.subr.bf16.mxu0 0
    %1894 = vmatpush1.bf16.msra.mxu0 0
    %1895 = vmatprep.subr.bf16.mxu0 0
    %1896 = vmatpush1.bf16.msra.mxu0 0
    %1897 = vmatprep.subr.bf16.mxu0 0
    %1898 = vmatpush1.bf16.msra.mxu0 0
    %1899 = vmatprep.subr.bf16.mxu0 0
    %1900 = vmatpush1.bf16.msra.mxu0 0
    %1901 = vmatprep.subr.bf16.mxu0 0
    %1902 = vmatpush1.bf16.msra.mxu0 0
    %1903 = vmatprep.subr.bf16.mxu0 0
    %1904 = vmatpush1.bf16.msra.mxu0 0
    %1905 = vmatprep.subr.bf16.mxu0 0
    %1906 = vmatpush1.bf16.msra.mxu0 0
    %1907 = vmatprep.subr.bf16.mxu0 0
    %1908 = vmatpush1.bf16.msra.mxu0 0
    %1909 = vmatprep.subr.bf16.mxu0 0
    %1910 = vmatpush1.bf16.msra.mxu0 0
    %1911 = vmatprep.subr.bf16.mxu0 0
    %1912 = vmatpush1.bf16.msra.mxu0 0
    %1913 = vmatprep.mubr.bf16.mxu0 0
    %1914 = vmatmul.mubr.bf16.gmra.mrb[0].mxu0 %v1876
    %v1915 = vpop.f32.mrb[0].mxu0
    %v1916 = vadd.f32 0.0, %v1915
    %v1917 = vpop.f32.mrb[0].mxu0
    %v1918 = vpop.f32.mrb[0].mxu0
    %v1919 = vadd.f32 0.0, %v1918
    %v1920 = vpop.f32.mrb[0].mxu0
    %1921 = vmatprep.mubr.bf16.mxu0 0
    %1922 = vmatmul.mubr.bf16.gmra.mrb[0].mxu0 %v1879
    %v1923 = vpop.f32.mrb[0].mxu0
    %v1924 = vadd.f32 0.0, %v1923
    %v1925 = vpop.f32.mrb[0].mxu0
    %v1926 = vpop.f32.mrb[0].mxu0
    %v1927 = vpop.f32.mrb[0].mxu0
    %1928 = vdwg.mxu0
    %v1929 = vadd.f32 %v1788, %v1916
    %v1930 = vadd.f32 %v1789, %v1919
    %v1931 = vadd.f32 %v1790, %v1924
    %s1932 = scalar_lea.vmem %s0, 156
    %v1933 = vld [vmem:[%s1932] sm:$0xf]
    %v1934 = vld [vmem:[%s1932 + $0x4] sm:$0xf]
    %v1935 = vld [vmem:[%s1932 + $0x8] sm:$0x1]
    %v1939 = vunpack.c.l.b16 %v1933
    %v1940 = vunpack.c.l.b16 %v1934
    %v1941 = vunpack.c.l.b16 %v1935
    %v1942 = vpack.c.b16 %v1940, %v1939
    %v1943 = vpack.c.b16 %v1941, %v1941
    %1946 = vmatprep.subr.bf16.mxu0 0
    %1947 = vmatpush1.bf16.msra.mxu0 %v103
    %1948 = vmatprep.subr.bf16.mxu0 0
    %1949 = vmatpush1.bf16.msra.mxu0 %v104
    %1950 = vmatprep.subr.bf16.mxu0 0
    %1951 = vmatpush1.bf16.msra.mxu0 %v105
    %1952 = vmatprep.subr.bf16.mxu0 0
    %1953 = vmatpush1.bf16.msra.mxu0 %v106
    %1954 = vmatprep.subr.bf16.mxu0 0
    %1955 = vmatpush1.bf16.msra.mxu0 %v107
    %1956 = vmatprep.subr.bf16.mxu0 0
    %1957 = vmatpush1.bf16.msra.mxu0 %v108
    %1958 = vmatprep.subr.bf16.mxu0 0
    %1959 = vmatpush1.bf16.msra.mxu0 %v109
    %1960 = vmatprep.subr.bf16.mxu0 0
    %1961 = vmatpush1.bf16.msra.mxu0 %v110
    %1962 = vmatprep.subr.bf16.mxu0 0
    %1963 = vmatpush1.bf16.msra.mxu0 0
    %1964 = vmatprep.subr.bf16.mxu0 0
    %1965 = vmatpush1.bf16.msra.mxu0 0
    %1966 = vmatprep.subr.bf16.mxu0 0
    %1967 = vmatpush1.bf16.msra.mxu0 0
    %1968 = vmatprep.subr.bf16.mxu0 0
    %1969 = vmatpush1.bf16.msra.mxu0 0
    %1970 = vmatprep.subr.bf16.mxu0 0
    %1971 = vmatpush1.bf16.msra.mxu0 0
    %1972 = vmatprep.subr.bf16.mxu0 0
    %1973 = vmatpush1.bf16.msra.mxu0 0
    %1974 = vmatprep.subr.bf16.mxu0 0
    %1975 = vmatpush1.bf16.msra.mxu0 0
    %1976 = vmatprep.subr.bf16.mxu0 0
    %1977 = vmatpush1.bf16.msra.mxu0 0
    %1978 = vmatprep.mubr.bf16.mxu0 0
    %1979 = vmatmul.mubr.bf16.gmra.mrb[0].mxu0 %v1942
    %v1980 = vpop.f32.mrb[0].mxu0
    %v1981 = vadd.f32 %v59, %v1980
    %v1982 = vpop.f32.mrb[0].mxu0
    %v1983 = vpop.f32.mrb[0].mxu0
    %v1984 = vadd.f32 %v59, %v1983
    %v1985 = vpop.f32.mrb[0].mxu0
    %1986 = vmatprep.mubr.bf16.mxu0 0
    %1987 = vmatmul.mubr.bf16.gmra.mrb[0].mxu0 %v1943
    %v1988 = vpop.f32.mrb[0].mxu0
    %v1989 = vadd.f32 %v59, %v1988
    %v1990 = vpop.f32.mrb[0].mxu0
    %v1991 = vpop.f32.mrb[0].mxu0
    %v1992 = vpop.f32.mrb[0].mxu0
    %1993 = vdwg.mxu0
    %v1994 = vmax.f32 %v1981, 0.0
    %v1995 = vmax.f32 %v1984, 0.0
    %v1996 = vmax.f32 %v1989, 0.0
    %v1997 = vpack.c.bf16 %v1995, %v1994
    %v1998 = vpack.c.bf16 %v1996, %v1996
    %s1999 = scalar_lea.vmem %s3, 208
    %v2000 = vld [vmem:[%s1999] sm:$0xf]
    %v2001 = vld [vmem:[%s1999 + $0x4] sm:$0xf]
    %v2002 = vld [vmem:[%s1999 + $0x8] sm:$0xf]
    %v2003 = vld [vmem:[%s1999 + $0xc] sm:$0xf]
    %v2008 = vunpack.c.l.b16 %v2000
    %v2009 = vunpack.c.l.b16 %v2001
    %v2010 = vunpack.c.l.b16 %v2002
    %v2011 = vunpack.c.l.b16 %v2003
    %v2012 = vpack.c.b16 %v2009, %v2008
    %v2013 = vpack.c.b16 %v2011, %v2010
    %v2017 = vsel %vm260, %v1997, 0
    %v2020 = vsel %vm260, %v1998, 0
    %2022 = vmatprep.subr.bf16.mxu0 0
    %2023 = vmatpush1.bf16.msra.mxu0 %v2012
    %2024 = vmatprep.subr.bf16.mxu0 0
    %2025 = vmatpush1.bf16.msra.mxu0 %v2013
    %2026 = vmatprep.subr.bf16.mxu0 0
    %2027 = vmatpush1.bf16.msra.mxu0 0
    %2028 = vmatprep.subr.bf16.mxu0 0
    %2029 = vmatpush1.bf16.msra.mxu0 0
    %2030 = vmatprep.subr.bf16.mxu0 0
    %2031 = vmatpush1.bf16.msra.mxu0 0
    %2032 = vmatprep.subr.bf16.mxu0 0
    %2033 = vmatpush1.bf16.msra.mxu0 0
    %2034 = vmatprep.subr.bf16.mxu0 0
    %2035 = vmatpush1.bf16.msra.mxu0 0
    %2036 = vmatprep.subr.bf16.mxu0 0
    %2037 = vmatpush1.bf16.msra.mxu0 0
    %2038 = vmatprep.subr.bf16.mxu0 0
    %2039 = vmatpush1.bf16.msra.mxu0 0
    %2040 = vmatprep.subr.bf16.mxu0 0
    %2041 = vmatpush1.bf16.msra.mxu0 0
    %2042 = vmatprep.subr.bf16.mxu0 0
    %2043 = vmatpush1.bf16.msra.mxu0 0
    %2044 = vmatprep.subr.bf16.mxu0 0
    %2045 = vmatpush1.bf16.msra.mxu0 0
    %2046 = vmatprep.subr.bf16.mxu0 0
    %2047 = vmatpush1.bf16.msra.mxu0 0
    %2048 = vmatprep.subr.bf16.mxu0 0
    %2049 = vmatpush1.bf16.msra.mxu0 0
    %2050 = vmatprep.subr.bf16.mxu0 0
    %2051 = vmatpush1.bf16.msra.mxu0 0
    %2052 = vmatprep.subr.bf16.mxu0 0
    %2053 = vmatpush1.bf16.msra.mxu0 0
    %2054 = vmatprep.mubr.bf16.mxu0 0
    %2055 = vmatmul.mubr.bf16.gmra.mrb[0].mxu0 %v2017
    %v2056 = vpop.f32.mrb[0].mxu0
    %v2057 = vadd.f32 0.0, %v2056
    %v2058 = vpop.f32.mrb[0].mxu0
    %v2059 = vpop.f32.mrb[0].mxu0
    %v2060 = vadd.f32 0.0, %v2059
    %v2061 = vpop.f32.mrb[0].mxu0
    %2062 = vmatprep.mubr.bf16.mxu0 0
    %2063 = vmatmul.mubr.bf16.gmra.mrb[0].mxu0 %v2020
    %v2064 = vpop.f32.mrb[0].mxu0
    %v2065 = vadd.f32 0.0, %v2064
    %v2066 = vpop.f32.mrb[0].mxu0
    %v2067 = vpop.f32.mrb[0].mxu0
    %v2068 = vpop.f32.mrb[0].mxu0
    %2069 = vdwg.mxu0
    %v2070 = vadd.f32 %v1929, %v2057
    %v2071 = vadd.f32 %v1930, %v2060
    %v2072 = vadd.f32 %v1931, %v2065
    %s2073 = scalar_lea.vmem %s0, 168
    %v2074 = vld [vmem:[%s2073] sm:$0xf]
    %v2075 = vld [vmem:[%s2073 + $0x4] sm:$0xf]
    %v2076 = vld [vmem:[%s2073 + $0x8] sm:$0x1]
    %v2080 = vunpack.c.l.b16 %v2074
    %v2081 = vunpack.c.l.b16 %v2075
    %v2082 = vunpack.c.l.b16 %v2076
    %v2083 = vpack.c.b16 %v2081, %v2080
    %v2084 = vpack.c.b16 %v2082, %v2082
    %2087 = vmatprep.subr.bf16.mxu0 0
    %2088 = vmatpush1.bf16.msra.mxu0 %v103
    %2089 = vmatprep.subr.bf16.mxu0 0
    %2090 = vmatpush1.bf16.msra.mxu0 %v104
    %2091 = vmatprep.subr.bf16.mxu0 0
    %2092 = vmatpush1.bf16.msra.mxu0 %v105
    %2093 = vmatprep.subr.bf16.mxu0 0
    %2094 = vmatpush1.bf16.msra.mxu0 %v106
    %2095 = vmatprep.subr.bf16.mxu0 0
    %2096 = vmatpush1.bf16.msra.mxu0 %v107
    %2097 = vmatprep.subr.bf16.mxu0 0
    %2098 = vmatpush1.bf16.msra.mxu0 %v108
    %2099 = vmatprep.subr.bf16.mxu0 0
    %2100 = vmatpush1.bf16.msra.mxu0 %v109
    %2101 = vmatprep.subr.bf16.mxu0 0
    %2102 = vmatpush1.bf16.msra.mxu0 %v110
    %2103 = vmatprep.subr.bf16.mxu0 0
    %2104 = vmatpush1.bf16.msra.mxu0 0
    %2105 = vmatprep.subr.bf16.mxu0 0
    %2106 = vmatpush1.bf16.msra.mxu0 0
    %2107 = vmatprep.subr.bf16.mxu0 0
    %2108 = vmatpush1.bf16.msra.mxu0 0
    %2109 = vmatprep.subr.bf16.mxu0 0
    %2110 = vmatpush1.bf16.msra.mxu0 0
    %2111 = vmatprep.subr.bf16.mxu0 0
    %2112 = vmatpush1.bf16.msra.mxu0 0
    %2113 = vmatprep.subr.bf16.mxu0 0
    %2114 = vmatpush1.bf16.msra.mxu0 0
    %2115 = vmatprep.subr.bf16.mxu0 0
    %2116 = vmatpush1.bf16.msra.mxu0 0
    %2117 = vmatprep.subr.bf16.mxu0 0
    %2118 = vmatpush1.bf16.msra.mxu0 0
    %2119 = vmatprep.mubr.bf16.mxu0 0
    %2120 = vmatmul.mubr.bf16.gmra.mrb[0].mxu0 %v2083
    %v2121 = vpop.f32.mrb[0].mxu0
    %v2122 = vadd.f32 %v59, %v2121
    %v2123 = vpop.f32.mrb[0].mxu0
    %v2124 = vpop.f32.mrb[0].mxu0
    %v2125 = vadd.f32 %v59, %v2124
    %v2126 = vpop.f32.mrb[0].mxu0
    %2127 = vmatprep.mubr.bf16.mxu0 0
    %2128 = vmatmul.mubr.bf16.gmra.mrb[0].mxu0 %v2084
    %v2129 = vpop.f32.mrb[0].mxu0
    %v2130 = vadd.f32 %v59, %v2129
    %v2131 = vpop.f32.mrb[0].mxu0
    %v2132 = vpop.f32.mrb[0].mxu0
    %v2133 = vpop.f32.mrb[0].mxu0
    %2134 = vdwg.mxu0
    %v2135 = vmax.f32 %v2122, 0.0
    %v2136 = vmax.f32 %v2125, 0.0
    %v2137 = vmax.f32 %v2130, 0.0
    %v2138 = vpack.c.bf16 %v2136, %v2135
    %v2139 = vpack.c.bf16 %v2137, %v2137
    %s2140 = scalar_lea.vmem %s3, 224
    %v2141 = vld [vmem:[%s2140] sm:$0xf]
    %v2142 = vld [vmem:[%s2140 + $0x4] sm:$0xf]
    %v2143 = vld [vmem:[%s2140 + $0x8] sm:$0xf]
    %v2144 = vld [vmem:[%s2140 + $0xc] sm:$0xf]
    %v2149 = vunpack.c.l.b16 %v2141
    %v2150 = vunpack.c.l.b16 %v2142
    %v2151 = vunpack.c.l.b16 %v2143
    %v2152 = vunpack.c.l.b16 %v2144
    %v2153 = vpack.c.b16 %v2150, %v2149
    %v2154 = vpack.c.b16 %v2152, %v2151
    %v2158 = vsel %vm260, %v2138, 0
    %v2161 = vsel %vm260, %v2139, 0
    %2163 = vmatprep.subr.bf16.mxu0 0
    %2164 = vmatpush1.bf16.msra.mxu0 %v2153
    %2165 = vmatprep.subr.bf16.mxu0 0
    %2166 = vmatpush1.bf16.msra.mxu0 %v2154
    %2167 = vmatprep.subr.bf16.mxu0 0
    %2168 = vmatpush1.bf16.msra.mxu0 0
    %2169 = vmatprep.subr.bf16.mxu0 0
    %2170 = vmatpush1.bf16.msra.mxu0 0
    %2171 = vmatprep.subr.bf16.mxu0 0
    %2172 = vmatpush1.bf16.msra.mxu0 0
    %2173 = vmatprep.subr.bf16.mxu0 0
    %2174 = vmatpush1.bf16.msra.mxu0 0
    %2175 = vmatprep.subr.bf16.mxu0 0
    %2176 = vmatpush1.bf16.msra.mxu0 0
    %2177 = vmatprep.subr.bf16.mxu0 0
    %2178 = vmatpush1.bf16.msra.mxu0 0
    %2179 = vmatprep.subr.bf16.mxu0 0
    %2180 = vmatpush1.bf16.msra.mxu0 0
    %2181 = vmatprep.subr.bf16.mxu0 0
    %2182 = vmatpush1.bf16.msra.mxu0 0
    %2183 = vmatprep.subr.bf16.mxu0 0
    %2184 = vmatpush1.bf16.msra.mxu0 0
    %2185 = vmatprep.subr.bf16.mxu0 0
    %2186 = vmatpush1.bf16.msra.mxu0 0
    %2187 = vmatprep.subr.bf16.mxu0 0
    %2188 = vmatpush1.bf16.msra.mxu0 0
    %2189 = vmatprep.subr.bf16.mxu0 0
    %2190 = vmatpush1.bf16.msra.mxu0 0
    %2191 = vmatprep.subr.bf16.mxu0 0
    %2192 = vmatpush1.bf16.msra.mxu0 0
    %2193 = vmatprep.subr.bf16.mxu0 0
    %2194 = vmatpush1.bf16.msra.mxu0 0
    %2195 = vmatprep.mubr.bf16.mxu0 0
    %2196 = vmatmul.mubr.bf16.gmra.mrb[0].mxu0 %v2158
    %v2197 = vpop.f32.mrb[0].mxu0
    %v2198 = vadd.f32 0.0, %v2197
    %v2199 = vpop.f32.mrb[0].mxu0
    %v2200 = vpop.f32.mrb[0].mxu0
    %v2201 = vadd.f32 0.0, %v2200
    %v2202 = vpop.f32.mrb[0].mxu0
    %2203 = vmatprep.mubr.bf16.mxu0 0
    %2204 = vmatmul.mubr.bf16.gmra.mrb[0].mxu0 %v2161
    %v2205 = vpop.f32.mrb[0].mxu0
    %v2206 = vadd.f32 0.0, %v2205
    %v2207 = vpop.f32.mrb[0].mxu0
    %v2208 = vpop.f32.mrb[0].mxu0
    %v2209 = vpop.f32.mrb[0].mxu0
    %2210 = vdwg.mxu0
    %v2211 = vadd.f32 %v2070, %v2198
    %v2212 = vadd.f32 %v2071, %v2201
    %v2213 = vadd.f32 %v2072, %v2206
    %s2214 = scalar_lea.vmem %s0, 180
    %v2215 = vld [vmem:[%s2214] sm:$0xf]
    %v2216 = vld [vmem:[%s2214 + $0x4] sm:$0xf]
    %v2217 = vld [vmem:[%s2214 + $0x8] sm:$0x1]
    %v2221 = vunpack.c.l.b16 %v2215
    %v2222 = vunpack.c.l.b16 %v2216
    %v2223 = vunpack.c.l.b16 %v2217
    %v2224 = vpack.c.b16 %v2222, %v2221
    %v2225 = vpack.c.b16 %v2223, %v2223
    %2228 = vmatprep.subr.bf16.mxu0 0
    %2229 = vmatpush1.bf16.msra.mxu0 %v103
    %2230 = vmatprep.subr.bf16.mxu0 0
    %2231 = vmatpush1.bf16.msra.mxu0 %v104
    %2232 = vmatprep.subr.bf16.mxu0 0
    %2233 = vmatpush1.bf16.msra.mxu0 %v105
    %2234 = vmatprep.subr.bf16.mxu0 0
    %2235 = vmatpush1.bf16.msra.mxu0 %v106
    %2236 = vmatprep.subr.bf16.mxu0 0
    %2237 = vmatpush1.bf16.msra.mxu0 %v107
    %2238 = vmatprep.subr.bf16.mxu0 0
    %2239 = vmatpush1.bf16.msra.mxu0 %v108
    %2240 = vmatprep.subr.bf16.mxu0 0
    %2241 = vmatpush1.bf16.msra.mxu0 %v109
    %2242 = vmatprep.subr.bf16.mxu0 0
    %2243 = vmatpush1.bf16.msra.mxu0 %v110
    %2244 = vmatprep.subr.bf16.mxu0 0
    %2245 = vmatpush1.bf16.msra.mxu0 0
    %2246 = vmatprep.subr.bf16.mxu0 0
    %2247 = vmatpush1.bf16.msra.mxu0 0
    %2248 = vmatprep.subr.bf16.mxu0 0
    %2249 = vmatpush1.bf16.msra.mxu0 0
    %2250 = vmatprep.subr.bf16.mxu0 0
    %2251 = vmatpush1.bf16.msra.mxu0 0
    %2252 = vmatprep.subr.bf16.mxu0 0
    %2253 = vmatpush1.bf16.msra.mxu0 0
    %2254 = vmatprep.subr.bf16.mxu0 0
    %2255 = vmatpush1.bf16.msra.mxu0 0
    %2256 = vmatprep.subr.bf16.mxu0 0
    %2257 = vmatpush1.bf16.msra.mxu0 0
    %2258 = vmatprep.subr.bf16.mxu0 0
    %2259 = vmatpush1.bf16.msra.mxu0 0
    %2260 = vmatprep.mubr.bf16.mxu0 0
    %2261 = vmatmul.mubr.bf16.gmra.mrb[0].mxu0 %v2224
    %v2262 = vpop.f32.mrb[0].mxu0
    %v2263 = vadd.f32 %v59, %v2262
    %v2264 = vpop.f32.mrb[0].mxu0
    %v2265 = vpop.f32.mrb[0].mxu0
    %v2266 = vadd.f32 %v59, %v2265
    %v2267 = vpop.f32.mrb[0].mxu0
    %2268 = vmatprep.mubr.bf16.mxu0 0
    %2269 = vmatmul.mubr.bf16.gmra.mrb[0].mxu0 %v2225
    %v2270 = vpop.f32.mrb[0].mxu0
    %v2271 = vadd.f32 %v59, %v2270
    %v2272 = vpop.f32.mrb[0].mxu0
    %v2273 = vpop.f32.mrb[0].mxu0
    %v2274 = vpop.f32.mrb[0].mxu0
    %2275 = vdwg.mxu0
    %v2276 = vmax.f32 %v2263, 0.0
    %v2277 = vmax.f32 %v2266, 0.0
    %v2278 = vmax.f32 %v2271, 0.0
    %v2279 = vpack.c.bf16 %v2277, %v2276
    %v2280 = vpack.c.bf16 %v2278, %v2278
    %s2281 = scalar_lea.vmem %s3, 240
    %v2282 = vld [vmem:[%s2281] sm:$0xf]
    %v2283 = vld [vmem:[%s2281 + $0x4] sm:$0xf]
    %v2284 = vld [vmem:[%s2281 + $0x8] sm:$0xf]
    %v2285 = vld [vmem:[%s2281 + $0xc] sm:$0xf]
    %v2290 = vunpack.c.l.b16 %v2282
    %v2291 = vunpack.c.l.b16 %v2283
    %v2292 = vunpack.c.l.b16 %v2284
    %v2293 = vunpack.c.l.b16 %v2285
    %v2294 = vpack.c.b16 %v2291, %v2290
    %v2295 = vpack.c.b16 %v2293, %v2292
    %v2299 = vsel %vm260, %v2279, 0
    %v2302 = vsel %vm260, %v2280, 0
    %2304 = vmatprep.subr.bf16.mxu0 0
    %2305 = vmatpush1.bf16.msra.mxu0 %v2294
    %2306 = vmatprep.subr.bf16.mxu0 0
    %2307 = vmatpush1.bf16.msra.mxu0 %v2295
    %2308 = vmatprep.subr.bf16.mxu0 0
    %2309 = vmatpush1.bf16.msra.mxu0 0
    %2310 = vmatprep.subr.bf16.mxu0 0
    %2311 = vmatpush1.bf16.msra.mxu0 0
    %2312 = vmatprep.subr.bf16.mxu0 0
    %2313 = vmatpush1.bf16.msra.mxu0 0
    %2314 = vmatprep.subr.bf16.mxu0 0
    %2315 = vmatpush1.bf16.msra.mxu0 0
    %2316 = vmatprep.subr.bf16.mxu0 0
    %2317 = vmatpush1.bf16.msra.mxu0 0
    %2318 = vmatprep.subr.bf16.mxu0 0
    %2319 = vmatpush1.bf16.msra.mxu0 0
    %2320 = vmatprep.subr.bf16.mxu0 0
    %2321 = vmatpush1.bf16.msra.mxu0 0
    %2322 = vmatprep.subr.bf16.mxu0 0
    %2323 = vmatpush1.bf16.msra.mxu0 0
    %2324 = vmatprep.subr.bf16.mxu0 0
    %2325 = vmatpush1.bf16.msra.mxu0 0
    %2326 = vmatprep.subr.bf16.mxu0 0
    %2327 = vmatpush1.bf16.msra.mxu0 0
    %2328 = vmatprep.subr.bf16.mxu0 0
    %2329 = vmatpush1.bf16.msra.mxu0 0
    %2330 = vmatprep.subr.bf16.mxu0 0
    %2331 = vmatpush1.bf16.msra.mxu0 0
    %2332 = vmatprep.subr.bf16.mxu0 0
    %2333 = vmatpush1.bf16.msra.mxu0 0
    %2334 = vmatprep.subr.bf16.mxu0 0
    %2335 = vmatpush1.bf16.msra.mxu0 0
    %2336 = vmatprep.mubr.bf16.mxu0 0
    %2337 = vmatmul.mubr.bf16.gmra.mrb[0].mxu0 %v2299
    %v2338 = vpop.f32.mrb[0].mxu0
    %v2339 = vadd.f32 0.0, %v2338
    %v2340 = vpop.f32.mrb[0].mxu0
    %v2341 = vpop.f32.mrb[0].mxu0
    %v2342 = vadd.f32 0.0, %v2341
    %v2343 = vpop.f32.mrb[0].mxu0
    %2344 = vmatprep.mubr.bf16.mxu0 0
    %2345 = vmatmul.mubr.bf16.gmra.mrb[0].mxu0 %v2302
    %v2346 = vpop.f32.mrb[0].mxu0
    %v2347 = vadd.f32 0.0, %v2346
    %v2348 = vpop.f32.mrb[0].mxu0
    %v2349 = vpop.f32.mrb[0].mxu0
    %v2350 = vpop.f32.mrb[0].mxu0
    %2351 = vdwg.mxu0
    %v2352 = vadd.f32 %v2211, %v2339
    %v2353 = vadd.f32 %v2212, %v2342
    %v2354 = vadd.f32 %v2213, %v2347
    %s2355 = scalar_lea.vmem %s0, 192
    %v2356 = vld [vmem:[%s2355] sm:$0xf]
    %v2357 = vld [vmem:[%s2355 + $0x4] sm:$0xf]
    %v2358 = vld [vmem:[%s2355 + $0x8] sm:$0x1]
    %v2362 = vunpack.c.l.b16 %v2356
    %v2363 = vunpack.c.l.b16 %v2357
    %v2364 = vunpack.c.l.b16 %v2358
    %v2365 = vpack.c.b16 %v2363, %v2362
    %v2366 = vpack.c.b16 %v2364, %v2364
    %2369 = vmatprep.subr.bf16.mxu0 0
    %2370 = vmatpush1.bf16.msra.mxu0 %v103
    %2371 = vmatprep.subr.bf16.mxu0 0
    %2372 = vmatpush1.bf16.msra.mxu0 %v104
    %2373 = vmatprep.subr.bf16.mxu0 0
    %2374 = vmatpush1.bf16.msra.mxu0 %v105
    %2375 = vmatprep.subr.bf16.mxu0 0
    %2376 = vmatpush1.bf16.msra.mxu0 %v106
    %2377 = vmatprep.subr.bf16.mxu0 0
    %2378 = vmatpush1.bf16.msra.mxu0 %v107
    %2379 = vmatprep.subr.bf16.mxu0 0
    %2380 = vmatpush1.bf16.msra.mxu0 %v108
    %2381 = vmatprep.subr.bf16.mxu0 0
    %2382 = vmatpush1.bf16.msra.mxu0 %v109
    %2383 = vmatprep.subr.bf16.mxu0 0
    %2384 = vmatpush1.bf16.msra.mxu0 %v110
    %2385 = vmatprep.subr.bf16.mxu0 0
    %2386 = vmatpush1.bf16.msra.mxu0 0
    %2387 = vmatprep.subr.bf16.mxu0 0
    %2388 = vmatpush1.bf16.msra.mxu0 0
    %2389 = vmatprep.subr.bf16.mxu0 0
    %2390 = vmatpush1.bf16.msra.mxu0 0
    %2391 = vmatprep.subr.bf16.mxu0 0
    %2392 = vmatpush1.bf16.msra.mxu0 0
    %2393 = vmatprep.subr.bf16.mxu0 0
    %2394 = vmatpush1.bf16.msra.mxu0 0
    %2395 = vmatprep.subr.bf16.mxu0 0
    %2396 = vmatpush1.bf16.msra.mxu0 0
    %2397 = vmatprep.subr.bf16.mxu0 0
    %2398 = vmatpush1.bf16.msra.mxu0 0
    %2399 = vmatprep.subr.bf16.mxu0 0
    %2400 = vmatpush1.bf16.msra.mxu0 0
    %2401 = vmatprep.mubr.bf16.mxu0 0
    %2402 = vmatmul.mubr.bf16.gmra.mrb[0].mxu0 %v2365
    %v2403 = vpop.f32.mrb[0].mxu0
    %v2404 = vadd.f32 %v59, %v2403
    %v2405 = vpop.f32.mrb[0].mxu0
    %v2406 = vpop.f32.mrb[0].mxu0
    %v2407 = vadd.f32 %v59, %v2406
    %v2408 = vpop.f32.mrb[0].mxu0
    %2409 = vmatprep.mubr.bf16.mxu0 0
    %2410 = vmatmul.mubr.bf16.gmra.mrb[0].mxu0 %v2366
    %v2411 = vpop.f32.mrb[0].mxu0
    %v2412 = vadd.f32 %v59, %v2411
    %v2413 = vpop.f32.mrb[0].mxu0
    %v2414 = vpop.f32.mrb[0].mxu0
    %v2415 = vpop.f32.mrb[0].mxu0
    %2416 = vdwg.mxu0
    %v2417 = vmax.f32 %v2404, 0.0
    %v2418 = vmax.f32 %v2407, 0.0
    %v2419 = vmax.f32 %v2412, 0.0
    %v2420 = vpack.c.bf16 %v2418, %v2417
    %v2421 = vpack.c.bf16 %v2419, %v2419
    %s2422 = scalar_lea.vmem %s3, 256
    %v2423 = vld [vmem:[%s2422] sm:$0xf]
    %v2424 = vld [vmem:[%s2422 + $0x4] sm:$0xf]
    %v2425 = vld [vmem:[%s2422 + $0x8] sm:$0xf]
    %v2426 = vld [vmem:[%s2422 + $0xc] sm:$0xf]
    %v2431 = vunpack.c.l.b16 %v2423
    %v2432 = vunpack.c.l.b16 %v2424
    %v2433 = vunpack.c.l.b16 %v2425
    %v2434 = vunpack.c.l.b16 %v2426
    %v2435 = vpack.c.b16 %v2432, %v2431
    %v2436 = vpack.c.b16 %v2434, %v2433
    %v2440 = vsel %vm260, %v2420, 0
    %v2443 = vsel %vm260, %v2421, 0
    %2445 = vmatprep.subr.bf16.mxu0 0
    %2446 = vmatpush1.bf16.msra.mxu0 %v2435
    %2447 = vmatprep.subr.bf16.mxu0 0
    %2448 = vmatpush1.bf16.msra.mxu0 %v2436
    %2449 = vmatprep.subr.bf16.mxu0 0
    %2450 = vmatpush1.bf16.msra.mxu0 0
    %2451 = vmatprep.subr.bf16.mxu0 0
    %2452 = vmatpush1.bf16.msra.mxu0 0
    %2453 = vmatprep.subr.bf16.mxu0 0
    %2454 = vmatpush1.bf16.msra.mxu0 0
    %2455 = vmatprep.subr.bf16.mxu0 0
    %2456 = vmatpush1.bf16.msra.mxu0 0
    %2457 = vmatprep.subr.bf16.mxu0 0
    %2458 = vmatpush1.bf16.msra.mxu0 0
    %2459 = vmatprep.subr.bf16.mxu0 0
    %2460 = vmatpush1.bf16.msra.mxu0 0
    %2461 = vmatprep.subr.bf16.mxu0 0
    %2462 = vmatpush1.bf16.msra.mxu0 0
    %2463 = vmatprep.subr.bf16.mxu0 0
    %2464 = vmatpush1.bf16.msra.mxu0 0
    %2465 = vmatprep.subr.bf16.mxu0 0
    %2466 = vmatpush1.bf16.msra.mxu0 0
    %2467 = vmatprep.subr.bf16.mxu0 0
    %2468 = vmatpush1.bf16.msra.mxu0 0
    %2469 = vmatprep.subr.bf16.mxu0 0
    %2470 = vmatpush1.bf16.msra.mxu0 0
    %2471 = vmatprep.subr.bf16.mxu0 0
    %2472 = vmatpush1.bf16.msra.mxu0 0
    %2473 = vmatprep.subr.bf16.mxu0 0
    %2474 = vmatpush1.bf16.msra.mxu0 0
    %2475 = vmatprep.subr.bf16.mxu0 0
    %2476 = vmatpush1.bf16.msra.mxu0 0
    %2477 = vmatprep.mubr.bf16.mxu0 0
    %2478 = vmatmul.mubr.bf16.gmra.mrb[0].mxu0 %v2440
    %v2479 = vpop.f32.mrb[0].mxu0
    %v2480 = vadd.f32 0.0, %v2479
    %v2481 = vpop.f32.mrb[0].mxu0
    %v2482 = vpop.f32.mrb[0].mxu0
    %v2483 = vadd.f32 0.0, %v2482
    %v2484 = vpop.f32.mrb[0].mxu0
    %2485 = vmatprep.mubr.bf16.mxu0 0
    %2486 = vmatmul.mubr.bf16.gmra.mrb[0].mxu0 %v2443
    %v2487 = vpop.f32.mrb[0].mxu0
    %v2488 = vadd.f32 0.0, %v2487
    %v2489 = vpop.f32.mrb[0].mxu0
    %v2490 = vpop.f32.mrb[0].mxu0
    %v2491 = vpop.f32.mrb[0].mxu0
    %2492 = vdwg.mxu0
    %v2493 = vadd.f32 %v2352, %v2480
    %v2494 = vadd.f32 %v2353, %v2483
    %v2495 = vadd.f32 %v2354, %v2488
    %s2496 = scalar_lea.vmem %s0, 204
    %v2497 = vld [vmem:[%s2496] sm:$0xf]
    %v2498 = vld [vmem:[%s2496 + $0x4] sm:$0xf]
    %v2499 = vld [vmem:[%s2496 + $0x8] sm:$0x1]
    %v2503 = vunpack.c.l.b16 %v2497
    %v2504 = vunpack.c.l.b16 %v2498
    %v2505 = vunpack.c.l.b16 %v2499
    %v2506 = vpack.c.b16 %v2504, %v2503
    %v2507 = vpack.c.b16 %v2505, %v2505
    %2510 = vmatprep.subr.bf16.mxu0 0
    %2511 = vmatpush1.bf16.msra.mxu0 %v103
    %2512 = vmatprep.subr.bf16.mxu0 0
    %2513 = vmatpush1.bf16.msra.mxu0 %v104
    %2514 = vmatprep.subr.bf16.mxu0 0
    %2515 = vmatpush1.bf16.msra.mxu0 %v105
    %2516 = vmatprep.subr.bf16.mxu0 0
    %2517 = vmatpush1.bf16.msra.mxu0 %v106
    %2518 = vmatprep.subr.bf16.mxu0 0
    %2519 = vmatpush1.bf16.msra.mxu0 %v107
    %2520 = vmatprep.subr.bf16.mxu0 0
    %2521 = vmatpush1.bf16.msra.mxu0 %v108
    %2522 = vmatprep.subr.bf16.mxu0 0
    %2523 = vmatpush1.bf16.msra.mxu0 %v109
    %2524 = vmatprep.subr.bf16.mxu0 0
    %2525 = vmatpush1.bf16.msra.mxu0 %v110
    %2526 = vmatprep.subr.bf16.mxu0 0
    %2527 = vmatpush1.bf16.msra.mxu0 0
    %2528 = vmatprep.subr.bf16.mxu0 0
    %2529 = vmatpush1.bf16.msra.mxu0 0
    %2530 = vmatprep.subr.bf16.mxu0 0
    %2531 = vmatpush1.bf16.msra.mxu0 0
    %2532 = vmatprep.subr.bf16.mxu0 0
    %2533 = vmatpush1.bf16.msra.mxu0 0
    %2534 = vmatprep.subr.bf16.mxu0 0
    %2535 = vmatpush1.bf16.msra.mxu0 0
    %2536 = vmatprep.subr.bf16.mxu0 0
    %2537 = vmatpush1.bf16.msra.mxu0 0
    %2538 = vmatprep.subr.bf16.mxu0 0
    %2539 = vmatpush1.bf16.msra.mxu0 0
    %2540 = vmatprep.subr.bf16.mxu0 0
    %2541 = vmatpush1.bf16.msra.mxu0 0
    %2542 = vmatprep.mubr.bf16.mxu0 0
    %2543 = vmatmul.mubr.bf16.gmra.mrb[0].mxu0 %v2506
    %v2544 = vpop.f32.mrb[0].mxu0
    %v2545 = vadd.f32 %v59, %v2544
    %v2546 = vpop.f32.mrb[0].mxu0
    %v2547 = vpop.f32.mrb[0].mxu0
    %v2548 = vadd.f32 %v59, %v2547
    %v2549 = vpop.f32.mrb[0].mxu0
    %2550 = vmatprep.mubr.bf16.mxu0 0
    %2551 = vmatmul.mubr.bf16.gmra.mrb[0].mxu0 %v2507
    %v2552 = vpop.f32.mrb[0].mxu0
    %v2553 = vadd.f32 %v59, %v2552
    %v2554 = vpop.f32.mrb[0].mxu0
    %v2555 = vpop.f32.mrb[0].mxu0
    %v2556 = vpop.f32.mrb[0].mxu0
    %2557 = vdwg.mxu0
    %v2558 = vmax.f32 %v2545, 0.0
    %v2559 = vmax.f32 %v2548, 0.0
    %v2560 = vmax.f32 %v2553, 0.0
    %v2561 = vpack.c.bf16 %v2559, %v2558
    %v2562 = vpack.c.bf16 %v2560, %v2560
    %s2563 = scalar_lea.vmem %s3, 272
    %v2564 = vld [vmem:[%s2563] sm:$0xf]
    %v2565 = vld [vmem:[%s2563 + $0x4] sm:$0xf]
    %v2566 = vld [vmem:[%s2563 + $0x8] sm:$0xf]
    %v2567 = vld [vmem:[%s2563 + $0xc] sm:$0xf]
    %v2572 = vunpack.c.l.b16 %v2564
    %v2573 = vunpack.c.l.b16 %v2565
    %v2574 = vunpack.c.l.b16 %v2566
    %v2575 = vunpack.c.l.b16 %v2567
    %v2576 = vpack.c.b16 %v2573, %v2572
    %v2577 = vpack.c.b16 %v2575, %v2574
    %v2581 = vsel %vm260, %v2561, 0
    %v2584 = vsel %vm260, %v2562, 0
    %2586 = vmatprep.subr.bf16.mxu0 0
    %2587 = vmatpush1.bf16.msra.mxu0 %v2576
    %2588 = vmatprep.subr.bf16.mxu0 0
    %2589 = vmatpush1.bf16.msra.mxu0 %v2577
    %2590 = vmatprep.subr.bf16.mxu0 0
    %2591 = vmatpush1.bf16.msra.mxu0 0
    %2592 = vmatprep.subr.bf16.mxu0 0
    %2593 = vmatpush1.bf16.msra.mxu0 0
    %2594 = vmatprep.subr.bf16.mxu0 0
    %2595 = vmatpush1.bf16.msra.mxu0 0
    %2596 = vmatprep.subr.bf16.mxu0 0
    %2597 = vmatpush1.bf16.msra.mxu0 0
    %2598 = vmatprep.subr.bf16.mxu0 0
    %2599 = vmatpush1.bf16.msra.mxu0 0
    %2600 = vmatprep.subr.bf16.mxu0 0
    %2601 = vmatpush1.bf16.msra.mxu0 0
    %2602 = vmatprep.subr.bf16.mxu0 0
    %2603 = vmatpush1.bf16.msra.mxu0 0
    %2604 = vmatprep.subr.bf16.mxu0 0
    %2605 = vmatpush1.bf16.msra.mxu0 0
    %2606 = vmatprep.subr.bf16.mxu0 0
    %2607 = vmatpush1.bf16.msra.mxu0 0
    %2608 = vmatprep.subr.bf16.mxu0 0
    %2609 = vmatpush1.bf16.msra.mxu0 0
    %2610 = vmatprep.subr.bf16.mxu0 0
    %2611 = vmatpush1.bf16.msra.mxu0 0
    %2612 = vmatprep.subr.bf16.mxu0 0
    %2613 = vmatpush1.bf16.msra.mxu0 0
    %2614 = vmatprep.subr.bf16.mxu0 0
    %2615 = vmatpush1.bf16.msra.mxu0 0
    %2616 = vmatprep.subr.bf16.mxu0 0
    %2617 = vmatpush1.bf16.msra.mxu0 0
    %2618 = vmatprep.mubr.bf16.mxu0 0
    %2619 = vmatmul.mubr.bf16.gmra.mrb[0].mxu0 %v2581
    %v2620 = vpop.f32.mrb[0].mxu0
    %v2621 = vadd.f32 0.0, %v2620
    %v2622 = vpop.f32.mrb[0].mxu0
    %v2623 = vpop.f32.mrb[0].mxu0
    %v2624 = vadd.f32 0.0, %v2623
    %v2625 = vpop.f32.mrb[0].mxu0
    %2626 = vmatprep.mubr.bf16.mxu0 0
    %2627 = vmatmul.mubr.bf16.gmra.mrb[0].mxu0 %v2584
    %v2628 = vpop.f32.mrb[0].mxu0
    %v2629 = vadd.f32 0.0, %v2628
    %v2630 = vpop.f32.mrb[0].mxu0
    %v2631 = vpop.f32.mrb[0].mxu0
    %v2632 = vpop.f32.mrb[0].mxu0
    %2633 = vdwg.mxu0
    %v2634 = vadd.f32 %v2493, %v2621
    %v2635 = vadd.f32 %v2494, %v2624
    %v2636 = vadd.f32 %v2495, %v2629
    %s2637 = scalar_lea.vmem %s0, 216
    %v2638 = vld [vmem:[%s2637] sm:$0xf]
    %v2639 = vld [vmem:[%s2637 + $0x4] sm:$0xf]
    %v2640 = vld [vmem:[%s2637 + $0x8] sm:$0x1]
    %v2644 = vunpack.c.l.b16 %v2638
    %v2645 = vunpack.c.l.b16 %v2639
    %v2646 = vunpack.c.l.b16 %v2640
    %v2647 = vpack.c.b16 %v2645, %v2644
    %v2648 = vpack.c.b16 %v2646, %v2646
    %2651 = vmatprep.subr.bf16.mxu0 0
    %2652 = vmatpush1.bf16.msra.mxu0 %v103
    %2653 = vmatprep.subr.bf16.mxu0 0
    %2654 = vmatpush1.bf16.msra.mxu0 %v104
    %2655 = vmatprep.subr.bf16.mxu0 0
    %2656 = vmatpush1.bf16.msra.mxu0 %v105
    %2657 = vmatprep.subr.bf16.mxu0 0
    %2658 = vmatpush1.bf16.msra.mxu0 %v106
    %2659 = vmatprep.subr.bf16.mxu0 0
    %2660 = vmatpush1.bf16.msra.mxu0 %v107
    %2661 = vmatprep.subr.bf16.mxu0 0
    %2662 = vmatpush1.bf16.msra.mxu0 %v108
    %2663 = vmatprep.subr.bf16.mxu0 0
    %2664 = vmatpush1.bf16.msra.mxu0 %v109
    %2665 = vmatprep.subr.bf16.mxu0 0
    %2666 = vmatpush1.bf16.msra.mxu0 %v110
    %2667 = vmatprep.subr.bf16.mxu0 0
    %2668 = vmatpush1.bf16.msra.mxu0 0
    %2669 = vmatprep.subr.bf16.mxu0 0
    %2670 = vmatpush1.bf16.msra.mxu0 0
    %2671 = vmatprep.subr.bf16.mxu0 0
    %2672 = vmatpush1.bf16.msra.mxu0 0
    %2673 = vmatprep.subr.bf16.mxu0 0
    %2674 = vmatpush1.bf16.msra.mxu0 0
    %2675 = vmatprep.subr.bf16.mxu0 0
    %2676 = vmatpush1.bf16.msra.mxu0 0
    %2677 = vmatprep.subr.bf16.mxu0 0
    %2678 = vmatpush1.bf16.msra.mxu0 0
    %2679 = vmatprep.subr.bf16.mxu0 0
    %2680 = vmatpush1.bf16.msra.mxu0 0
    %2681 = vmatprep.subr.bf16.mxu0 0
    %2682 = vmatpush1.bf16.msra.mxu0 0
    %2683 = vmatprep.mubr.bf16.mxu0 0
    %2684 = vmatmul.mubr.bf16.gmra.mrb[0].mxu0 %v2647
    %v2685 = vpop.f32.mrb[0].mxu0
    %v2686 = vadd.f32 %v59, %v2685
    %v2687 = vpop.f32.mrb[0].mxu0
    %v2688 = vpop.f32.mrb[0].mxu0
    %v2689 = vadd.f32 %v59, %v2688
    %v2690 = vpop.f32.mrb[0].mxu0
    %2691 = vmatprep.mubr.bf16.mxu0 0
    %2692 = vmatmul.mubr.bf16.gmra.mrb[0].mxu0 %v2648
    %v2693 = vpop.f32.mrb[0].mxu0
    %v2694 = vadd.f32 %v59, %v2693
    %v2695 = vpop.f32.mrb[0].mxu0
    %v2696 = vpop.f32.mrb[0].mxu0
    %v2697 = vpop.f32.mrb[0].mxu0
    %2698 = vdwg.mxu0
    %v2699 = vmax.f32 %v2686, 0.0
    %v2700 = vmax.f32 %v2689, 0.0
    %v2701 = vmax.f32 %v2694, 0.0
    %v2702 = vpack.c.bf16 %v2700, %v2699
    %v2703 = vpack.c.bf16 %v2701, %v2701
    %s2704 = scalar_lea.vmem %s3, 288
    %v2705 = vld [vmem:[%s2704] sm:$0xf]
    %v2706 = vld [vmem:[%s2704 + $0x4] sm:$0xf]
    %v2707 = vld [vmem:[%s2704 + $0x8] sm:$0xf]
    %v2708 = vld [vmem:[%s2704 + $0xc] sm:$0xf]
    %v2713 = vunpack.c.l.b16 %v2705
    %v2714 = vunpack.c.l.b16 %v2706
    %v2715 = vunpack.c.l.b16 %v2707
    %v2716 = vunpack.c.l.b16 %v2708
    %v2717 = vpack.c.b16 %v2714, %v2713
    %v2718 = vpack.c.b16 %v2716, %v2715
    %v2722 = vsel %vm260, %v2702, 0
    %v2725 = vsel %vm260, %v2703, 0
    %2727 = vmatprep.subr.bf16.mxu0 0
    %2728 = vmatpush1.bf16.msra.mxu0 %v2717
    %2729 = vmatprep.subr.bf16.mxu0 0
    %2730 = vmatpush1.bf16.msra.mxu0 %v2718
    %2731 = vmatprep.subr.bf16.mxu0 0
    %2732 = vmatpush1.bf16.msra.mxu0 0
    %2733 = vmatprep.subr.bf16.mxu0 0
    %2734 = vmatpush1.bf16.msra.mxu0 0
    %2735 = vmatprep.subr.bf16.mxu0 0
    %2736 = vmatpush1.bf16.msra.mxu0 0
    %2737 = vmatprep.subr.bf16.mxu0 0
    %2738 = vmatpush1.bf16.msra.mxu0 0
    %2739 = vmatprep.subr.bf16.mxu0 0
    %2740 = vmatpush1.bf16.msra.mxu0 0
    %2741 = vmatprep.subr.bf16.mxu0 0
    %2742 = vmatpush1.bf16.msra.mxu0 0
    %2743 = vmatprep.subr.bf16.mxu0 0
    %2744 = vmatpush1.bf16.msra.mxu0 0
    %2745 = vmatprep.subr.bf16.mxu0 0
    %2746 = vmatpush1.bf16.msra.mxu0 0
    %2747 = vmatprep.subr.bf16.mxu0 0
    %2748 = vmatpush1.bf16.msra.mxu0 0
    %2749 = vmatprep.subr.bf16.mxu0 0
    %2750 = vmatpush1.bf16.msra.mxu0 0
    %2751 = vmatprep.subr.bf16.mxu0 0
    %2752 = vmatpush1.bf16.msra.mxu0 0
    %2753 = vmatprep.subr.bf16.mxu0 0
    %2754 = vmatpush1.bf16.msra.mxu0 0
    %2755 = vmatprep.subr.bf16.mxu0 0
    %2756 = vmatpush1.bf16.msra.mxu0 0
    %2757 = vmatprep.subr.bf16.mxu0 0
    %2758 = vmatpush1.bf16.msra.mxu0 0
    %2759 = vmatprep.mubr.bf16.mxu0 0
    %2760 = vmatmul.mubr.bf16.gmra.mrb[0].mxu0 %v2722
    %v2761 = vpop.f32.mrb[0].mxu0
    %v2762 = vadd.f32 0.0, %v2761
    %v2763 = vpop.f32.mrb[0].mxu0
    %v2764 = vpop.f32.mrb[0].mxu0
    %v2765 = vadd.f32 0.0, %v2764
    %v2766 = vpop.f32.mrb[0].mxu0
    %2767 = vmatprep.mubr.bf16.mxu0 0
    %2768 = vmatmul.mubr.bf16.gmra.mrb[0].mxu0 %v2725
    %v2769 = vpop.f32.mrb[0].mxu0
    %v2770 = vadd.f32 0.0, %v2769
    %v2771 = vpop.f32.mrb[0].mxu0
    %v2772 = vpop.f32.mrb[0].mxu0
    %v2773 = vpop.f32.mrb[0].mxu0
    %2774 = vdwg.mxu0
    %v2775 = vadd.f32 %v2634, %v2762
    %v2776 = vadd.f32 %v2635, %v2765
    %v2777 = vadd.f32 %v2636, %v2770
    %s2778 = scalar_lea.vmem %s0, 228
    %v2779 = vld [vmem:[%s2778] sm:$0xf]
    %v2780 = vld [vmem:[%s2778 + $0x4] sm:$0xf]
    %v2781 = vld [vmem:[%s2778 + $0x8] sm:$0x1]
    %v2785 = vunpack.c.l.b16 %v2779
    %v2786 = vunpack.c.l.b16 %v2780
    %v2787 = vunpack.c.l.b16 %v2781
    %v2788 = vpack.c.b16 %v2786, %v2785
    %v2789 = vpack.c.b16 %v2787, %v2787
    %2792 = vmatprep.subr.bf16.mxu0 0
    %2793 = vmatpush1.bf16.msra.mxu0 %v103
    %2794 = vmatprep.subr.bf16.mxu0 0
    %2795 = vmatpush1.bf16.msra.mxu0 %v104
    %2796 = vmatprep.subr.bf16.mxu0 0
    %2797 = vmatpush1.bf16.msra.mxu0 %v105
    %2798 = vmatprep.subr.bf16.mxu0 0
    %2799 = vmatpush1.bf16.msra.mxu0 %v106
    %2800 = vmatprep.subr.bf16.mxu0 0
    %2801 = vmatpush1.bf16.msra.mxu0 %v107
    %2802 = vmatprep.subr.bf16.mxu0 0
    %2803 = vmatpush1.bf16.msra.mxu0 %v108
    %2804 = vmatprep.subr.bf16.mxu0 0
    %2805 = vmatpush1.bf16.msra.mxu0 %v109
    %2806 = vmatprep.subr.bf16.mxu0 0
    %2807 = vmatpush1.bf16.msra.mxu0 %v110
    %2808 = vmatprep.subr.bf16.mxu0 0
    %2809 = vmatpush1.bf16.msra.mxu0 0
    %2810 = vmatprep.subr.bf16.mxu0 0
    %2811 = vmatpush1.bf16.msra.mxu0 0
    %2812 = vmatprep.subr.bf16.mxu0 0
    %2813 = vmatpush1.bf16.msra.mxu0 0
    %2814 = vmatprep.subr.bf16.mxu0 0
    %2815 = vmatpush1.bf16.msra.mxu0 0
    %2816 = vmatprep.subr.bf16.mxu0 0
    %2817 = vmatpush1.bf16.msra.mxu0 0
    %2818 = vmatprep.subr.bf16.mxu0 0
    %2819 = vmatpush1.bf16.msra.mxu0 0
    %2820 = vmatprep.subr.bf16.mxu0 0
    %2821 = vmatpush1.bf16.msra.mxu0 0
    %2822 = vmatprep.subr.bf16.mxu0 0
    %2823 = vmatpush1.bf16.msra.mxu0 0
    %2824 = vmatprep.mubr.bf16.mxu0 0
    %2825 = vmatmul.mubr.bf16.gmra.mrb[0].mxu0 %v2788
    %v2826 = vpop.f32.mrb[0].mxu0
    %v2827 = vadd.f32 %v59, %v2826
    %v2828 = vpop.f32.mrb[0].mxu0
    %v2829 = vpop.f32.mrb[0].mxu0
    %v2830 = vadd.f32 %v59, %v2829
    %v2831 = vpop.f32.mrb[0].mxu0
    %2832 = vmatprep.mubr.bf16.mxu0 0
    %2833 = vmatmul.mubr.bf16.gmra.mrb[0].mxu0 %v2789
    %v2834 = vpop.f32.mrb[0].mxu0
    %v2835 = vadd.f32 %v59, %v2834
    %v2836 = vpop.f32.mrb[0].mxu0
    %v2837 = vpop.f32.mrb[0].mxu0
    %v2838 = vpop.f32.mrb[0].mxu0
    %2839 = vdwg.mxu0
    %v2840 = vmax.f32 %v2827, 0.0
    %v2841 = vmax.f32 %v2830, 0.0
    %v2842 = vmax.f32 %v2835, 0.0
    %v2843 = vpack.c.bf16 %v2841, %v2840
    %v2844 = vpack.c.bf16 %v2842, %v2842
    %s2845 = scalar_lea.vmem %s3, 304
    %v2846 = vld [vmem:[%s2845] sm:$0xf]
    %v2847 = vld [vmem:[%s2845 + $0x4] sm:$0xf]
    %v2848 = vld [vmem:[%s2845 + $0x8] sm:$0xf]
    %v2849 = vld [vmem:[%s2845 + $0xc] sm:$0xf]
    %v2854 = vunpack.c.l.b16 %v2846
    %v2855 = vunpack.c.l.b16 %v2847
    %v2856 = vunpack.c.l.b16 %v2848
    %v2857 = vunpack.c.l.b16 %v2849
    %v2858 = vpack.c.b16 %v2855, %v2854
    %v2859 = vpack.c.b16 %v2857, %v2856
    %v2863 = vsel %vm260, %v2843, 0
    %v2866 = vsel %vm260, %v2844, 0
    %2868 = vmatprep.subr.bf16.mxu0 0
    %2869 = vmatpush1.bf16.msra.mxu0 %v2858
    %2870 = vmatprep.subr.bf16.mxu0 0
    %2871 = vmatpush1.bf16.msra.mxu0 %v2859
    %2872 = vmatprep.subr.bf16.mxu0 0
    %2873 = vmatpush1.bf16.msra.mxu0 0
    %2874 = vmatprep.subr.bf16.mxu0 0
    %2875 = vmatpush1.bf16.msra.mxu0 0
    %2876 = vmatprep.subr.bf16.mxu0 0
    %2877 = vmatpush1.bf16.msra.mxu0 0
    %2878 = vmatprep.subr.bf16.mxu0 0
    %2879 = vmatpush1.bf16.msra.mxu0 0
    %2880 = vmatprep.subr.bf16.mxu0 0
    %2881 = vmatpush1.bf16.msra.mxu0 0
    %2882 = vmatprep.subr.bf16.mxu0 0
    %2883 = vmatpush1.bf16.msra.mxu0 0
    %2884 = vmatprep.subr.bf16.mxu0 0
    %2885 = vmatpush1.bf16.msra.mxu0 0
    %2886 = vmatprep.subr.bf16.mxu0 0
    %2887 = vmatpush1.bf16.msra.mxu0 0
    %2888 = vmatprep.subr.bf16.mxu0 0
    %2889 = vmatpush1.bf16.msra.mxu0 0
    %2890 = vmatprep.subr.bf16.mxu0 0
    %2891 = vmatpush1.bf16.msra.mxu0 0
    %2892 = vmatprep.subr.bf16.mxu0 0
    %2893 = vmatpush1.bf16.msra.mxu0 0
    %2894 = vmatprep.subr.bf16.mxu0 0
    %2895 = vmatpush1.bf16.msra.mxu0 0
    %2896 = vmatprep.subr.bf16.mxu0 0
    %2897 = vmatpush1.bf16.msra.mxu0 0
    %2898 = vmatprep.subr.bf16.mxu0 0
    %2899 = vmatpush1.bf16.msra.mxu0 0
    %2900 = vmatprep.mubr.bf16.mxu0 0
    %2901 = vmatmul.mubr.bf16.gmra.mrb[0].mxu0 %v2863
    %v2902 = vpop.f32.mrb[0].mxu0
    %v2903 = vadd.f32 0.0, %v2902
    %v2904 = vpop.f32.mrb[0].mxu0
    %v2905 = vpop.f32.mrb[0].mxu0
    %v2906 = vadd.f32 0.0, %v2905
    %v2907 = vpop.f32.mrb[0].mxu0
    %2908 = vmatprep.mubr.bf16.mxu0 0
    %2909 = vmatmul.mubr.bf16.gmra.mrb[0].mxu0 %v2866
    %v2910 = vpop.f32.mrb[0].mxu0
    %v2911 = vadd.f32 0.0, %v2910
    %v2912 = vpop.f32.mrb[0].mxu0
    %v2913 = vpop.f32.mrb[0].mxu0
    %v2914 = vpop.f32.mrb[0].mxu0
    %2915 = vdwg.mxu0
    %v2916 = vadd.f32 %v2775, %v2903
    %v2917 = vadd.f32 %v2776, %v2906
    %v2918 = vadd.f32 %v2777, %v2911
    %s2919 = scalar_lea.vmem %s0, 240
    %v2920 = vld [vmem:[%s2919] sm:$0xf]
    %v2921 = vld [vmem:[%s2919 + $0x4] sm:$0xf]
    %v2922 = vld [vmem:[%s2919 + $0x8] sm:$0x1]
    %v2926 = vunpack.c.l.b16 %v2920
    %v2927 = vunpack.c.l.b16 %v2921
    %v2928 = vunpack.c.l.b16 %v2922
    %v2929 = vpack.c.b16 %v2927, %v2926
    %v2930 = vpack.c.b16 %v2928, %v2928
    %2933 = vmatprep.subr.bf16.mxu0 0
    %2934 = vmatpush1.bf16.msra.mxu0 %v103
    %2935 = vmatprep.subr.bf16.mxu0 0
    %2936 = vmatpush1.bf16.msra.mxu0 %v104
    %2937 = vmatprep.subr.bf16.mxu0 0
    %2938 = vmatpush1.bf16.msra.mxu0 %v105
    %2939 = vmatprep.subr.bf16.mxu0 0
    %2940 = vmatpush1.bf16.msra.mxu0 %v106
    %2941 = vmatprep.subr.bf16.mxu0 0
    %2942 = vmatpush1.bf16.msra.mxu0 %v107
    %2943 = vmatprep.subr.bf16.mxu0 0
    %2944 = vmatpush1.bf16.msra.mxu0 %v108
    %2945 = vmatprep.subr.bf16.mxu0 0
    %2946 = vmatpush1.bf16.msra.mxu0 %v109
    %2947 = vmatprep.subr.bf16.mxu0 0
    %2948 = vmatpush1.bf16.msra.mxu0 %v110
    %2949 = vmatprep.subr.bf16.mxu0 0
    %2950 = vmatpush1.bf16.msra.mxu0 0
    %2951 = vmatprep.subr.bf16.mxu0 0
    %2952 = vmatpush1.bf16.msra.mxu0 0
    %2953 = vmatprep.subr.bf16.mxu0 0
    %2954 = vmatpush1.bf16.msra.mxu0 0
    %2955 = vmatprep.subr.bf16.mxu0 0
    %2956 = vmatpush1.bf16.msra.mxu0 0
    %2957 = vmatprep.subr.bf16.mxu0 0
    %2958 = vmatpush1.bf16.msra.mxu0 0
    %2959 = vmatprep.subr.bf16.mxu0 0
    %2960 = vmatpush1.bf16.msra.mxu0 0
    %2961 = vmatprep.subr.bf16.mxu0 0
    %2962 = vmatpush1.bf16.msra.mxu0 0
    %2963 = vmatprep.subr.bf16.mxu0 0
    %2964 = vmatpush1.bf16.msra.mxu0 0
    %2965 = vmatprep.mubr.bf16.mxu0 0
    %2966 = vmatmul.mubr.bf16.gmra.mrb[0].mxu0 %v2929
    %v2967 = vpop.f32.mrb[0].mxu0
    %v2968 = vadd.f32 %v59, %v2967
    %v2969 = vpop.f32.mrb[0].mxu0
    %v2970 = vpop.f32.mrb[0].mxu0
    %v2971 = vadd.f32 %v59, %v2970
    %v2972 = vpop.f32.mrb[0].mxu0
    %2973 = vmatprep.mubr.bf16.mxu0 0
    %2974 = vmatmul.mubr.bf16.gmra.mrb[0].mxu0 %v2930
    %v2975 = vpop.f32.mrb[0].mxu0
    %v2976 = vadd.f32 %v59, %v2975
    %v2977 = vpop.f32.mrb[0].mxu0
    %v2978 = vpop.f32.mrb[0].mxu0
    %v2979 = vpop.f32.mrb[0].mxu0
    %2980 = vdwg.mxu0
    %v2981 = vmax.f32 %v2968, 0.0
    %v2982 = vmax.f32 %v2971, 0.0
    %v2983 = vmax.f32 %v2976, 0.0
    %v2984 = vpack.c.bf16 %v2982, %v2981
    %v2985 = vpack.c.bf16 %v2983, %v2983
    %s2986 = scalar_lea.vmem %s3, 320
    %v2987 = vld [vmem:[%s2986] sm:$0xf]
    %v2988 = vld [vmem:[%s2986 + $0x4] sm:$0xf]
    %v2989 = vld [vmem:[%s2986 + $0x8] sm:$0xf]
    %v2990 = vld [vmem:[%s2986 + $0xc] sm:$0xf]
    %v2995 = vunpack.c.l.b16 %v2987
    %v2996 = vunpack.c.l.b16 %v2988
    %v2997 = vunpack.c.l.b16 %v2989
    %v2998 = vunpack.c.l.b16 %v2990
    %v2999 = vpack.c.b16 %v2996, %v2995
    %v3000 = vpack.c.b16 %v2998, %v2997
    %v3004 = vsel %vm260, %v2984, 0
    %v3007 = vsel %vm260, %v2985, 0
    %3009 = vmatprep.subr.bf16.mxu0 0
    %3010 = vmatpush1.bf16.msra.mxu0 %v2999
    %3011 = vmatprep.subr.bf16.mxu0 0
    %3012 = vmatpush1.bf16.msra.mxu0 %v3000
    %3013 = vmatprep.subr.bf16.mxu0 0
    %3014 = vmatpush1.bf16.msra.mxu0 0
    %3015 = vmatprep.subr.bf16.mxu0 0
    %3016 = vmatpush1.bf16.msra.mxu0 0
    %3017 = vmatprep.subr.bf16.mxu0 0
    %3018 = vmatpush1.bf16.msra.mxu0 0
    %3019 = vmatprep.subr.bf16.mxu0 0
    %3020 = vmatpush1.bf16.msra.mxu0 0
    %3021 = vmatprep.subr.bf16.mxu0 0
    %3022 = vmatpush1.bf16.msra.mxu0 0
    %3023 = vmatprep.subr.bf16.mxu0 0
    %3024 = vmatpush1.bf16.msra.mxu0 0
    %3025 = vmatprep.subr.bf16.mxu0 0
    %3026 = vmatpush1.bf16.msra.mxu0 0
    %3027 = vmatprep.subr.bf16.mxu0 0
    %3028 = vmatpush1.bf16.msra.mxu0 0
    %3029 = vmatprep.subr.bf16.mxu0 0
    %3030 = vmatpush1.bf16.msra.mxu0 0
    %3031 = vmatprep.subr.bf16.mxu0 0
    %3032 = vmatpush1.bf16.msra.mxu0 0
    %3033 = vmatprep.subr.bf16.mxu0 0
    %3034 = vmatpush1.bf16.msra.mxu0 0
    %3035 = vmatprep.subr.bf16.mxu0 0
    %3036 = vmatpush1.bf16.msra.mxu0 0
    %3037 = vmatprep.subr.bf16.mxu0 0
    %3038 = vmatpush1.bf16.msra.mxu0 0
    %3039 = vmatprep.subr.bf16.mxu0 0
    %3040 = vmatpush1.bf16.msra.mxu0 0
    %3041 = vmatprep.mubr.bf16.mxu0 0
    %3042 = vmatmul.mubr.bf16.gmra.mrb[0].mxu0 %v3004
    %v3043 = vpop.f32.mrb[0].mxu0
    %v3044 = vadd.f32 0.0, %v3043
    %v3045 = vpop.f32.mrb[0].mxu0
    %v3046 = vpop.f32.mrb[0].mxu0
    %v3047 = vadd.f32 0.0, %v3046
    %v3048 = vpop.f32.mrb[0].mxu0
    %3049 = vmatprep.mubr.bf16.mxu0 0
    %3050 = vmatmul.mubr.bf16.gmra.mrb[0].mxu0 %v3007
    %v3051 = vpop.f32.mrb[0].mxu0
    %v3052 = vadd.f32 0.0, %v3051
    %v3053 = vpop.f32.mrb[0].mxu0
    %v3054 = vpop.f32.mrb[0].mxu0
    %v3055 = vpop.f32.mrb[0].mxu0
    %3056 = vdwg.mxu0
    %v3057 = vadd.f32 %v2916, %v3044
    %v3058 = vadd.f32 %v2917, %v3047
    %v3059 = vadd.f32 %v2918, %v3052
    %s3060 = scalar_lea.vmem %s0, 252
    %v3061 = vld [vmem:[%s3060] sm:$0xf]
    %v3062 = vld [vmem:[%s3060 + $0x4] sm:$0xf]
    %v3063 = vld [vmem:[%s3060 + $0x8] sm:$0x1]
    %v3067 = vunpack.c.l.b16 %v3061
    %v3068 = vunpack.c.l.b16 %v3062
    %v3069 = vunpack.c.l.b16 %v3063
    %v3070 = vpack.c.b16 %v3068, %v3067
    %v3071 = vpack.c.b16 %v3069, %v3069
    %3074 = vmatprep.subr.bf16.mxu0 0
    %3075 = vmatpush1.bf16.msra.mxu0 %v103
    %3076 = vmatprep.subr.bf16.mxu0 0
    %3077 = vmatpush1.bf16.msra.mxu0 %v104
    %3078 = vmatprep.subr.bf16.mxu0 0
    %3079 = vmatpush1.bf16.msra.mxu0 %v105
    %3080 = vmatprep.subr.bf16.mxu0 0
    %3081 = vmatpush1.bf16.msra.mxu0 %v106
    %3082 = vmatprep.subr.bf16.mxu0 0
    %3083 = vmatpush1.bf16.msra.mxu0 %v107
    %3084 = vmatprep.subr.bf16.mxu0 0
    %3085 = vmatpush1.bf16.msra.mxu0 %v108
    %3086 = vmatprep.subr.bf16.mxu0 0
    %3087 = vmatpush1.bf16.msra.mxu0 %v109
    %3088 = vmatprep.subr.bf16.mxu0 0
    %3089 = vmatpush1.bf16.msra.mxu0 %v110
    %3090 = vmatprep.subr.bf16.mxu0 0
    %3091 = vmatpush1.bf16.msra.mxu0 0
    %3092 = vmatprep.subr.bf16.mxu0 0
    %3093 = vmatpush1.bf16.msra.mxu0 0
    %3094 = vmatprep.subr.bf16.mxu0 0
    %3095 = vmatpush1.bf16.msra.mxu0 0
    %3096 = vmatprep.subr.bf16.mxu0 0
    %3097 = vmatpush1.bf16.msra.mxu0 0
    %3098 = vmatprep.subr.bf16.mxu0 0
    %3099 = vmatpush1.bf16.msra.mxu0 0
    %3100 = vmatprep.subr.bf16.mxu0 0
    %3101 = vmatpush1.bf16.msra.mxu0 0
    %3102 = vmatprep.subr.bf16.mxu0 0
    %3103 = vmatpush1.bf16.msra.mxu0 0
    %3104 = vmatprep.subr.bf16.mxu0 0
    %3105 = vmatpush1.bf16.msra.mxu0 0
    %3106 = vmatprep.mubr.bf16.mxu0 0
    %3107 = vmatmul.mubr.bf16.gmra.mrb[0].mxu0 %v3070
    %v3108 = vpop.f32.mrb[0].mxu0
    %v3109 = vadd.f32 %v59, %v3108
    %v3110 = vpop.f32.mrb[0].mxu0
    %v3111 = vpop.f32.mrb[0].mxu0
    %v3112 = vadd.f32 %v59, %v3111
    %v3113 = vpop.f32.mrb[0].mxu0
    %3114 = vmatprep.mubr.bf16.mxu0 0
    %3115 = vmatmul.mubr.bf16.gmra.mrb[0].mxu0 %v3071
    %v3116 = vpop.f32.mrb[0].mxu0
    %v3117 = vadd.f32 %v59, %v3116
    %v3118 = vpop.f32.mrb[0].mxu0
    %v3119 = vpop.f32.mrb[0].mxu0
    %v3120 = vpop.f32.mrb[0].mxu0
    %3121 = vdwg.mxu0
    %v3122 = vmax.f32 %v3109, 0.0
    %v3123 = vmax.f32 %v3112, 0.0
    %v3124 = vmax.f32 %v3117, 0.0
    %v3125 = vpack.c.bf16 %v3123, %v3122
    %v3126 = vpack.c.bf16 %v3124, %v3124
    %s3127 = scalar_lea.vmem %s3, 336
    %v3128 = vld [vmem:[%s3127] sm:$0xf]
    %v3129 = vld [vmem:[%s3127 + $0x4] sm:$0xf]
    %v3130 = vld [vmem:[%s3127 + $0x8] sm:$0xf]
    %v3131 = vld [vmem:[%s3127 + $0xc] sm:$0xf]
    %v3136 = vunpack.c.l.b16 %v3128
    %v3137 = vunpack.c.l.b16 %v3129
    %v3138 = vunpack.c.l.b16 %v3130
    %v3139 = vunpack.c.l.b16 %v3131
    %v3140 = vpack.c.b16 %v3137, %v3136
    %v3141 = vpack.c.b16 %v3139, %v3138
    %v3145 = vsel %vm260, %v3125, 0
    %v3148 = vsel %vm260, %v3126, 0
    %3150 = vmatprep.subr.bf16.mxu0 0
    %3151 = vmatpush1.bf16.msra.mxu0 %v3140
    %3152 = vmatprep.subr.bf16.mxu0 0
    %3153 = vmatpush1.bf16.msra.mxu0 %v3141
    %3154 = vmatprep.subr.bf16.mxu0 0
    %3155 = vmatpush1.bf16.msra.mxu0 0
    %3156 = vmatprep.subr.bf16.mxu0 0
    %3157 = vmatpush1.bf16.msra.mxu0 0
    %3158 = vmatprep.subr.bf16.mxu0 0
    %3159 = vmatpush1.bf16.msra.mxu0 0
    %3160 = vmatprep.subr.bf16.mxu0 0
    %3161 = vmatpush1.bf16.msra.mxu0 0
    %3162 = vmatprep.subr.bf16.mxu0 0
    %3163 = vmatpush1.bf16.msra.mxu0 0
    %3164 = vmatprep.subr.bf16.mxu0 0
    %3165 = vmatpush1.bf16.msra.mxu0 0
    %3166 = vmatprep.subr.bf16.mxu0 0
    %3167 = vmatpush1.bf16.msra.mxu0 0
    %3168 = vmatprep.subr.bf16.mxu0 0
    %3169 = vmatpush1.bf16.msra.mxu0 0
    %3170 = vmatprep.subr.bf16.mxu0 0
    %3171 = vmatpush1.bf16.msra.mxu0 0
    %3172 = vmatprep.subr.bf16.mxu0 0
    %3173 = vmatpush1.bf16.msra.mxu0 0
    %3174 = vmatprep.subr.bf16.mxu0 0
    %3175 = vmatpush1.bf16.msra.mxu0 0
    %3176 = vmatprep.subr.bf16.mxu0 0
    %3177 = vmatpush1.bf16.msra.mxu0 0
    %3178 = vmatprep.subr.bf16.mxu0 0
    %3179 = vmatpush1.bf16.msra.mxu0 0
    %3180 = vmatprep.subr.bf16.mxu0 0
    %3181 = vmatpush1.bf16.msra.mxu0 0
    %3182 = vmatprep.mubr.bf16.mxu0 0
    %3183 = vmatmul.mubr.bf16.gmra.mrb[0].mxu0 %v3145
    %v3184 = vpop.f32.mrb[0].mxu0
    %v3185 = vadd.f32 0.0, %v3184
    %v3186 = vpop.f32.mrb[0].mxu0
    %v3187 = vpop.f32.mrb[0].mxu0
    %v3188 = vadd.f32 0.0, %v3187
    %v3189 = vpop.f32.mrb[0].mxu0
    %3190 = vmatprep.mubr.bf16.mxu0 0
    %3191 = vmatmul.mubr.bf16.gmra.mrb[0].mxu0 %v3148
    %v3192 = vpop.f32.mrb[0].mxu0
    %v3193 = vadd.f32 0.0, %v3192
    %v3194 = vpop.f32.mrb[0].mxu0
    %v3195 = vpop.f32.mrb[0].mxu0
    %v3196 = vpop.f32.mrb[0].mxu0
    %3197 = vdwg.mxu0
    %v3198 = vadd.f32 %v3057, %v3185
    %v3199 = vadd.f32 %v3058, %v3188
    %v3200 = vadd.f32 %v3059, %v3193
    %s3201 = scalar_lea.vmem %s0, 264
    %v3202 = vld [vmem:[%s3201] sm:$0xf]
    %v3203 = vld [vmem:[%s3201 + $0x4] sm:$0xf]
    %v3204 = vld [vmem:[%s3201 + $0x8] sm:$0x1]
    %v3208 = vunpack.c.l.b16 %v3202
    %v3209 = vunpack.c.l.b16 %v3203
    %v3210 = vunpack.c.l.b16 %v3204
    %v3211 = vpack.c.b16 %v3209, %v3208
    %v3212 = vpack.c.b16 %v3210, %v3210
    %3215 = vmatprep.subr.bf16.mxu0 0
    %3216 = vmatpush1.bf16.msra.mxu0 %v103
    %3217 = vmatprep.subr.bf16.mxu0 0
    %3218 = vmatpush1.bf16.msra.mxu0 %v104
    %3219 = vmatprep.subr.bf16.mxu0 0
    %3220 = vmatpush1.bf16.msra.mxu0 %v105
    %3221 = vmatprep.subr.bf16.mxu0 0
    %3222 = vmatpush1.bf16.msra.mxu0 %v106
    %3223 = vmatprep.subr.bf16.mxu0 0
    %3224 = vmatpush1.bf16.msra.mxu0 %v107
    %3225 = vmatprep.subr.bf16.mxu0 0
    %3226 = vmatpush1.bf16.msra.mxu0 %v108
    %3227 = vmatprep.subr.bf16.mxu0 0
    %3228 = vmatpush1.bf16.msra.mxu0 %v109
    %3229 = vmatprep.subr.bf16.mxu0 0
    %3230 = vmatpush1.bf16.msra.mxu0 %v110
    %3231 = vmatprep.subr.bf16.mxu0 0
    %3232 = vmatpush1.bf16.msra.mxu0 0
    %3233 = vmatprep.subr.bf16.mxu0 0
    %3234 = vmatpush1.bf16.msra.mxu0 0
    %3235 = vmatprep.subr.bf16.mxu0 0
    %3236 = vmatpush1.bf16.msra.mxu0 0
    %3237 = vmatprep.subr.bf16.mxu0 0
    %3238 = vmatpush1.bf16.msra.mxu0 0
    %3239 = vmatprep.subr.bf16.mxu0 0
    %3240 = vmatpush1.bf16.msra.mxu0 0
    %3241 = vmatprep.subr.bf16.mxu0 0
    %3242 = vmatpush1.bf16.msra.mxu0 0
    %3243 = vmatprep.subr.bf16.mxu0 0
    %3244 = vmatpush1.bf16.msra.mxu0 0
    %3245 = vmatprep.subr.bf16.mxu0 0
    %3246 = vmatpush1.bf16.msra.mxu0 0
    %3247 = vmatprep.mubr.bf16.mxu0 0
    %3248 = vmatmul.mubr.bf16.gmra.mrb[0].mxu0 %v3211
    %v3249 = vpop.f32.mrb[0].mxu0
    %v3250 = vadd.f32 %v59, %v3249
    %v3251 = vpop.f32.mrb[0].mxu0
    %v3252 = vpop.f32.mrb[0].mxu0
    %v3253 = vadd.f32 %v59, %v3252
    %v3254 = vpop.f32.mrb[0].mxu0
    %3255 = vmatprep.mubr.bf16.mxu0 0
    %3256 = vmatmul.mubr.bf16.gmra.mrb[0].mxu0 %v3212
    %v3257 = vpop.f32.mrb[0].mxu0
    %v3258 = vadd.f32 %v59, %v3257
    %v3259 = vpop.f32.mrb[0].mxu0
    %v3260 = vpop.f32.mrb[0].mxu0
    %v3261 = vpop.f32.mrb[0].mxu0
    %3262 = vdwg.mxu0
    %v3263 = vmax.f32 %v3250, 0.0
    %v3264 = vmax.f32 %v3253, 0.0
    %v3265 = vmax.f32 %v3258, 0.0
    %v3266 = vpack.c.bf16 %v3264, %v3263
    %v3267 = vpack.c.bf16 %v3265, %v3265
    %s3268 = scalar_lea.vmem %s3, 352
    %v3269 = vld [vmem:[%s3268] sm:$0xf]
    %v3270 = vld [vmem:[%s3268 + $0x4] sm:$0xf]
    %v3271 = vld [vmem:[%s3268 + $0x8] sm:$0xf]
    %v3272 = vld [vmem:[%s3268 + $0xc] sm:$0xf]
    %v3277 = vunpack.c.l.b16 %v3269
    %v3278 = vunpack.c.l.b16 %v3270
    %v3279 = vunpack.c.l.b16 %v3271
    %v3280 = vunpack.c.l.b16 %v3272
    %v3281 = vpack.c.b16 %v3278, %v3277
    %v3282 = vpack.c.b16 %v3280, %v3279
    %v3286 = vsel %vm260, %v3266, 0
    %v3289 = vsel %vm260, %v3267, 0
    %3291 = vmatprep.subr.bf16.mxu0 0
    %3292 = vmatpush1.bf16.msra.mxu0 %v3281
    %3293 = vmatprep.subr.bf16.mxu0 0
    %3294 = vmatpush1.bf16.msra.mxu0 %v3282
    %3295 = vmatprep.subr.bf16.mxu0 0
    %3296 = vmatpush1.bf16.msra.mxu0 0
    %3297 = vmatprep.subr.bf16.mxu0 0
    %3298 = vmatpush1.bf16.msra.mxu0 0
    %3299 = vmatprep.subr.bf16.mxu0 0
    %3300 = vmatpush1.bf16.msra.mxu0 0
    %3301 = vmatprep.subr.bf16.mxu0 0
    %3302 = vmatpush1.bf16.msra.mxu0 0
    %3303 = vmatprep.subr.bf16.mxu0 0
    %3304 = vmatpush1.bf16.msra.mxu0 0
    %3305 = vmatprep.subr.bf16.mxu0 0
    %3306 = vmatpush1.bf16.msra.mxu0 0
    %3307 = vmatprep.subr.bf16.mxu0 0
    %3308 = vmatpush1.bf16.msra.mxu0 0
    %3309 = vmatprep.subr.bf16.mxu0 0
    %3310 = vmatpush1.bf16.msra.mxu0 0
    %3311 = vmatprep.subr.bf16.mxu0 0
    %3312 = vmatpush1.bf16.msra.mxu0 0
    %3313 = vmatprep.subr.bf16.mxu0 0
    %3314 = vmatpush1.bf16.msra.mxu0 0
    %3315 = vmatprep.subr.bf16.mxu0 0
    %3316 = vmatpush1.bf16.msra.mxu0 0
    %3317 = vmatprep.subr.bf16.mxu0 0
    %3318 = vmatpush1.bf16.msra.mxu0 0
    %3319 = vmatprep.subr.bf16.mxu0 0
    %3320 = vmatpush1.bf16.msra.mxu0 0
    %3321 = vmatprep.subr.bf16.mxu0 0
    %3322 = vmatpush1.bf16.msra.mxu0 0
    %3323 = vmatprep.mubr.bf16.mxu0 0
    %3324 = vmatmul.mubr.bf16.gmra.mrb[0].mxu0 %v3286
    %v3325 = vpop.f32.mrb[0].mxu0
    %v3326 = vadd.f32 0.0, %v3325
    %v3327 = vpop.f32.mrb[0].mxu0
    %v3328 = vpop.f32.mrb[0].mxu0
    %v3329 = vadd.f32 0.0, %v3328
    %v3330 = vpop.f32.mrb[0].mxu0
    %3331 = vmatprep.mubr.bf16.mxu0 0
    %3332 = vmatmul.mubr.bf16.gmra.mrb[0].mxu0 %v3289
    %v3333 = vpop.f32.mrb[0].mxu0
    %v3334 = vadd.f32 0.0, %v3333
    %v3335 = vpop.f32.mrb[0].mxu0
    %v3336 = vpop.f32.mrb[0].mxu0
    %v3337 = vpop.f32.mrb[0].mxu0
    %3338 = vdwg.mxu0
    %v3339 = vadd.f32 %v3198, %v3326
    %v3340 = vadd.f32 %v3199, %v3329
    %v3341 = vadd.f32 %v3200, %v3334
    %s3342 = scalar_lea.vmem %s0, 276
    %v3343 = vld [vmem:[%s3342] sm:$0xf]
    %v3344 = vld [vmem:[%s3342 + $0x4] sm:$0xf]
    %v3345 = vld [vmem:[%s3342 + $0x8] sm:$0x1]
    %v3349 = vunpack.c.l.b16 %v3343
    %v3350 = vunpack.c.l.b16 %v3344
    %v3351 = vunpack.c.l.b16 %v3345
    %v3352 = vpack.c.b16 %v3350, %v3349
    %v3353 = vpack.c.b16 %v3351, %v3351
    %3356 = vmatprep.subr.bf16.mxu0 0
    %3357 = vmatpush1.bf16.msra.mxu0 %v103
    %3358 = vmatprep.subr.bf16.mxu0 0
    %3359 = vmatpush1.bf16.msra.mxu0 %v104
    %3360 = vmatprep.subr.bf16.mxu0 0
    %3361 = vmatpush1.bf16.msra.mxu0 %v105
    %3362 = vmatprep.subr.bf16.mxu0 0
    %3363 = vmatpush1.bf16.msra.mxu0 %v106
    %3364 = vmatprep.subr.bf16.mxu0 0
    %3365 = vmatpush1.bf16.msra.mxu0 %v107
    %3366 = vmatprep.subr.bf16.mxu0 0
    %3367 = vmatpush1.bf16.msra.mxu0 %v108
    %3368 = vmatprep.subr.bf16.mxu0 0
    %3369 = vmatpush1.bf16.msra.mxu0 %v109
    %3370 = vmatprep.subr.bf16.mxu0 0
    %3371 = vmatpush1.bf16.msra.mxu0 %v110
    %3372 = vmatprep.subr.bf16.mxu0 0
    %3373 = vmatpush1.bf16.msra.mxu0 0
    %3374 = vmatprep.subr.bf16.mxu0 0
    %3375 = vmatpush1.bf16.msra.mxu0 0
    %3376 = vmatprep.subr.bf16.mxu0 0
    %3377 = vmatpush1.bf16.msra.mxu0 0
    %3378 = vmatprep.subr.bf16.mxu0 0
    %3379 = vmatpush1.bf16.msra.mxu0 0
    %3380 = vmatprep.subr.bf16.mxu0 0
    %3381 = vmatpush1.bf16.msra.mxu0 0
    %3382 = vmatprep.subr.bf16.mxu0 0
    %3383 = vmatpush1.bf16.msra.mxu0 0
    %3384 = vmatprep.subr.bf16.mxu0 0
    %3385 = vmatpush1.bf16.msra.mxu0 0
    %3386 = vmatprep.subr.bf16.mxu0 0
    %3387 = vmatpush1.bf16.msra.mxu0 0
    %3388 = vmatprep.mubr.bf16.mxu0 0
    %3389 = vmatmul.mubr.bf16.gmra.mrb[0].mxu0 %v3352
    %v3390 = vpop.f32.mrb[0].mxu0
    %v3391 = vadd.f32 %v59, %v3390
    %v3392 = vpop.f32.mrb[0].mxu0
    %v3393 = vpop.f32.mrb[0].mxu0
    %v3394 = vadd.f32 %v59, %v3393
    %v3395 = vpop.f32.mrb[0].mxu0
    %3396 = vmatprep.mubr.bf16.mxu0 0
    %3397 = vmatmul.mubr.bf16.gmra.mrb[0].mxu0 %v3353
    %v3398 = vpop.f32.mrb[0].mxu0
    %v3399 = vadd.f32 %v59, %v3398
    %v3400 = vpop.f32.mrb[0].mxu0
    %v3401 = vpop.f32.mrb[0].mxu0
    %v3402 = vpop.f32.mrb[0].mxu0
    %3403 = vdwg.mxu0
    %v3404 = vmax.f32 %v3391, 0.0
    %v3405 = vmax.f32 %v3394, 0.0
    %v3406 = vmax.f32 %v3399, 0.0
    %v3407 = vpack.c.bf16 %v3405, %v3404
    %v3408 = vpack.c.bf16 %v3406, %v3406
    %s3409 = scalar_lea.vmem %s3, 368
    %v3410 = vld [vmem:[%s3409] sm:$0xf]
    %v3411 = vld [vmem:[%s3409 + $0x4] sm:$0xf]
    %v3412 = vld [vmem:[%s3409 + $0x8] sm:$0xf]
    %v3413 = vld [vmem:[%s3409 + $0xc] sm:$0xf]
    %v3418 = vunpack.c.l.b16 %v3410
    %v3419 = vunpack.c.l.b16 %v3411
    %v3420 = vunpack.c.l.b16 %v3412
    %v3421 = vunpack.c.l.b16 %v3413
    %v3422 = vpack.c.b16 %v3419, %v3418
    %v3423 = vpack.c.b16 %v3421, %v3420
    %v3427 = vsel %vm260, %v3407, 0
    %v3430 = vsel %vm260, %v3408, 0
    %3432 = vmatprep.subr.bf16.mxu0 0
    %3433 = vmatpush1.bf16.msra.mxu0 %v3422
    %3434 = vmatprep.subr.bf16.mxu0 0
    %3435 = vmatpush1.bf16.msra.mxu0 %v3423
    %3436 = vmatprep.subr.bf16.mxu0 0
    %3437 = vmatpush1.bf16.msra.mxu0 0
    %3438 = vmatprep.subr.bf16.mxu0 0
    %3439 = vmatpush1.bf16.msra.mxu0 0
    %3440 = vmatprep.subr.bf16.mxu0 0
    %3441 = vmatpush1.bf16.msra.mxu0 0
    %3442 = vmatprep.subr.bf16.mxu0 0
    %3443 = vmatpush1.bf16.msra.mxu0 0
    %3444 = vmatprep.subr.bf16.mxu0 0
    %3445 = vmatpush1.bf16.msra.mxu0 0
    %3446 = vmatprep.subr.bf16.mxu0 0
    %3447 = vmatpush1.bf16.msra.mxu0 0
    %3448 = vmatprep.subr.bf16.mxu0 0
    %3449 = vmatpush1.bf16.msra.mxu0 0
    %3450 = vmatprep.subr.bf16.mxu0 0
    %3451 = vmatpush1.bf16.msra.mxu0 0
    %3452 = vmatprep.subr.bf16.mxu0 0
    %3453 = vmatpush1.bf16.msra.mxu0 0
    %3454 = vmatprep.subr.bf16.mxu0 0
    %3455 = vmatpush1.bf16.msra.mxu0 0
    %3456 = vmatprep.subr.bf16.mxu0 0
    %3457 = vmatpush1.bf16.msra.mxu0 0
    %3458 = vmatprep.subr.bf16.mxu0 0
    %3459 = vmatpush1.bf16.msra.mxu0 0
    %3460 = vmatprep.subr.bf16.mxu0 0
    %3461 = vmatpush1.bf16.msra.mxu0 0
    %3462 = vmatprep.subr.bf16.mxu0 0
    %3463 = vmatpush1.bf16.msra.mxu0 0
    %3464 = vmatprep.mubr.bf16.mxu0 0
    %3465 = vmatmul.mubr.bf16.gmra.mrb[0].mxu0 %v3427
    %v3466 = vpop.f32.mrb[0].mxu0
    %v3467 = vadd.f32 0.0, %v3466
    %v3468 = vpop.f32.mrb[0].mxu0
    %v3469 = vpop.f32.mrb[0].mxu0
    %v3470 = vadd.f32 0.0, %v3469
    %v3471 = vpop.f32.mrb[0].mxu0
    %3472 = vmatprep.mubr.bf16.mxu0 0
    %3473 = vmatmul.mubr.bf16.gmra.mrb[0].mxu0 %v3430
    %v3474 = vpop.f32.mrb[0].mxu0
    %v3475 = vadd.f32 0.0, %v3474
    %v3476 = vpop.f32.mrb[0].mxu0
    %v3477 = vpop.f32.mrb[0].mxu0
    %v3478 = vpop.f32.mrb[0].mxu0
    %3479 = vdwg.mxu0
    %v3480 = vadd.f32 %v3339, %v3467
    %v3481 = vadd.f32 %v3340, %v3470
    %v3482 = vadd.f32 %v3341, %v3475
    %s3483 = scalar_lea.vmem %s0, 288
    %v3484 = vld [vmem:[%s3483] sm:$0xf]
    %v3485 = vld [vmem:[%s3483 + $0x4] sm:$0xf]
    %v3486 = vld [vmem:[%s3483 + $0x8] sm:$0x1]
    %v3490 = vunpack.c.l.b16 %v3484
    %v3491 = vunpack.c.l.b16 %v3485
    %v3492 = vunpack.c.l.b16 %v3486
    %v3493 = vpack.c.b16 %v3491, %v3490
    %v3494 = vpack.c.b16 %v3492, %v3492
    %3497 = vmatprep.subr.bf16.mxu0 0
    %3498 = vmatpush1.bf16.msra.mxu0 %v103
    %3499 = vmatprep.subr.bf16.mxu0 0
    %3500 = vmatpush1.bf16.msra.mxu0 %v104
    %3501 = vmatprep.subr.bf16.mxu0 0
    %3502 = vmatpush1.bf16.msra.mxu0 %v105
    %3503 = vmatprep.subr.bf16.mxu0 0
    %3504 = vmatpush1.bf16.msra.mxu0 %v106
    %3505 = vmatprep.subr.bf16.mxu0 0
    %3506 = vmatpush1.bf16.msra.mxu0 %v107
    %3507 = vmatprep.subr.bf16.mxu0 0
    %3508 = vmatpush1.bf16.msra.mxu0 %v108
    %3509 = vmatprep.subr.bf16.mxu0 0
    %3510 = vmatpush1.bf16.msra.mxu0 %v109
    %3511 = vmatprep.subr.bf16.mxu0 0
    %3512 = vmatpush1.bf16.msra.mxu0 %v110
    %3513 = vmatprep.subr.bf16.mxu0 0
    %3514 = vmatpush1.bf16.msra.mxu0 0
    %3515 = vmatprep.subr.bf16.mxu0 0
    %3516 = vmatpush1.bf16.msra.mxu0 0
    %3517 = vmatprep.subr.bf16.mxu0 0
    %3518 = vmatpush1.bf16.msra.mxu0 0
    %3519 = vmatprep.subr.bf16.mxu0 0
    %3520 = vmatpush1.bf16.msra.mxu0 0
    %3521 = vmatprep.subr.bf16.mxu0 0
    %3522 = vmatpush1.bf16.msra.mxu0 0
    %3523 = vmatprep.subr.bf16.mxu0 0
    %3524 = vmatpush1.bf16.msra.mxu0 0
    %3525 = vmatprep.subr.bf16.mxu0 0
    %3526 = vmatpush1.bf16.msra.mxu0 0
    %3527 = vmatprep.subr.bf16.mxu0 0
    %3528 = vmatpush1.bf16.msra.mxu0 0
    %3529 = vmatprep.mubr.bf16.mxu0 0
    %3530 = vmatmul.mubr.bf16.gmra.mrb[0].mxu0 %v3493
    %v3531 = vpop.f32.mrb[0].mxu0
    %v3532 = vadd.f32 %v59, %v3531
    %v3533 = vpop.f32.mrb[0].mxu0
    %v3534 = vpop.f32.mrb[0].mxu0
    %v3535 = vadd.f32 %v59, %v3534
    %v3536 = vpop.f32.mrb[0].mxu0
    %3537 = vmatprep.mubr.bf16.mxu0 0
    %3538 = vmatmul.mubr.bf16.gmra.mrb[0].mxu0 %v3494
    %v3539 = vpop.f32.mrb[0].mxu0
    %v3540 = vadd.f32 %v59, %v3539
    %v3541 = vpop.f32.mrb[0].mxu0
    %v3542 = vpop.f32.mrb[0].mxu0
    %v3543 = vpop.f32.mrb[0].mxu0
    %3544 = vdwg.mxu0
    %v3545 = vmax.f32 %v3532, 0.0
    %v3546 = vmax.f32 %v3535, 0.0
    %v3547 = vmax.f32 %v3540, 0.0
    %v3548 = vpack.c.bf16 %v3546, %v3545
    %v3549 = vpack.c.bf16 %v3547, %v3547
    %s3550 = scalar_lea.vmem %s3, 384
    %v3551 = vld [vmem:[%s3550] sm:$0xf]
    %v3552 = vld [vmem:[%s3550 + $0x4] sm:$0xf]
    %v3553 = vld [vmem:[%s3550 + $0x8] sm:$0xf]
    %v3554 = vld [vmem:[%s3550 + $0xc] sm:$0xf]
    %v3559 = vunpack.c.l.b16 %v3551
    %v3560 = vunpack.c.l.b16 %v3552
    %v3561 = vunpack.c.l.b16 %v3553
    %v3562 = vunpack.c.l.b16 %v3554
    %v3563 = vpack.c.b16 %v3560, %v3559
    %v3564 = vpack.c.b16 %v3562, %v3561
    %v3568 = vsel %vm260, %v3548, 0
    %v3571 = vsel %vm260, %v3549, 0
    %3573 = vmatprep.subr.bf16.mxu0 0
    %3574 = vmatpush1.bf16.msra.mxu0 %v3563
    %3575 = vmatprep.subr.bf16.mxu0 0
    %3576 = vmatpush1.bf16.msra.mxu0 %v3564
    %3577 = vmatprep.subr.bf16.mxu0 0
    %3578 = vmatpush1.bf16.msra.mxu0 0
    %3579 = vmatprep.subr.bf16.mxu0 0
    %3580 = vmatpush1.bf16.msra.mxu0 0
    %3581 = vmatprep.subr.bf16.mxu0 0
    %3582 = vmatpush1.bf16.msra.mxu0 0
    %3583 = vmatprep.subr.bf16.mxu0 0
    %3584 = vmatpush1.bf16.msra.mxu0 0
    %3585 = vmatprep.subr.bf16.mxu0 0
    %3586 = vmatpush1.bf16.msra.mxu0 0
    %3587 = vmatprep.subr.bf16.mxu0 0
    %3588 = vmatpush1.bf16.msra.mxu0 0
    %3589 = vmatprep.subr.bf16.mxu0 0
    %3590 = vmatpush1.bf16.msra.mxu0 0
    %3591 = vmatprep.subr.bf16.mxu0 0
    %3592 = vmatpush1.bf16.msra.mxu0 0
    %3593 = vmatprep.subr.bf16.mxu0 0
    %3594 = vmatpush1.bf16.msra.mxu0 0
    %3595 = vmatprep.subr.bf16.mxu0 0
    %3596 = vmatpush1.bf16.msra.mxu0 0
    %3597 = vmatprep.subr.bf16.mxu0 0
    %3598 = vmatpush1.bf16.msra.mxu0 0
    %3599 = vmatprep.subr.bf16.mxu0 0
    %3600 = vmatpush1.bf16.msra.mxu0 0
    %3601 = vmatprep.subr.bf16.mxu0 0
    %3602 = vmatpush1.bf16.msra.mxu0 0
    %3603 = vmatprep.subr.bf16.mxu0 0
    %3604 = vmatpush1.bf16.msra.mxu0 0
    %3605 = vmatprep.mubr.bf16.mxu0 0
    %3606 = vmatmul.mubr.bf16.gmra.mrb[0].mxu0 %v3568
    %v3607 = vpop.f32.mrb[0].mxu0
    %v3608 = vadd.f32 0.0, %v3607
    %v3609 = vpop.f32.mrb[0].mxu0
    %v3610 = vpop.f32.mrb[0].mxu0
    %v3611 = vadd.f32 0.0, %v3610
    %v3612 = vpop.f32.mrb[0].mxu0
    %3613 = vmatprep.mubr.bf16.mxu0 0
    %3614 = vmatmul.mubr.bf16.gmra.mrb[0].mxu0 %v3571
    %v3615 = vpop.f32.mrb[0].mxu0
    %v3616 = vadd.f32 0.0, %v3615
    %v3617 = vpop.f32.mrb[0].mxu0
    %v3618 = vpop.f32.mrb[0].mxu0
    %v3619 = vpop.f32.mrb[0].mxu0
    %3620 = vdwg.mxu0
    %v3621 = vadd.f32 %v3480, %v3608
    %v3622 = vadd.f32 %v3481, %v3611
    %v3623 = vadd.f32 %v3482, %v3616
    %v3625 = vlaneseq
    %v3626 = vshrl.u32 %v3625, 7
    %v3627 = vsub.s32 0, %v3626
    %v3628 = vrot.slane %v51, %v3627
    %v3630 = vadd.f32 %v3621, %v3628
    %v3631 = vadd.f32 %v3622, %v3628
    %v3632 = vadd.f32 %v3623, %v3628
    %v3633 = vmax.f32 %v3630, 0.0
    %v3634 = vmax.f32 %v3631, 0.0
    %v3635 = vmax.f32 %v3632, 0.0
    %vm3636 = vcmask 523264
    %3637 = vst.msk [vmem:[#allocation2] sm:$0xff] %vm3636, %v3633
    %3638 = vst.msk [vmem:[#allocation2 + $0x8] sm:$0xff] %vm3636, %v3634
    %vm3639 = vcmask 517120
    %3640 = vst.msk [vmem:[#allocation2 + $0x10] sm:$0x3] %vm3639, %v3635
    %v3641 = vld [vmem:[#allocation2] sm:$0x3]
    %v3642 = vld [vmem:[%s5] sm:$0xff]
    %v3643 = vld [vmem:[%s5 + $0x8] sm:$0xff]
    %v3644 = vld [vmem:[%s5 + $0x10] sm:$0xff]
    %v3645 = vld [vmem:[%s5 + $0x18] sm:$0xff]
    %v3646 = vld [vmem:[%s5 + $0x20] sm:$0xff]
    %v3647 = vld [vmem:[%s5 + $0x28] sm:$0xff]
    %v3648 = vld [vmem:[%s5 + $0x30] sm:$0xff]
    %v3649 = vld [vmem:[%s5 + $0x38] sm:$0xff]
    %v3650 = vld [vmem:[#allocation2 + $0x2] sm:$0x3]
    %s3651 = scalar_lea.vmem %s5, 64
    %v3652 = vld [vmem:[%s3651] sm:$0xff]
    %v3653 = vld [vmem:[%s3651 + $0x8] sm:$0xff]
    %v3654 = vld [vmem:[%s3651 + $0x10] sm:$0xff]
    %v3655 = vld [vmem:[%s3651 + $0x18] sm:$0xff]
    %v3656 = vld [vmem:[%s3651 + $0x20] sm:$0xff]
    %v3657 = vld [vmem:[%s3651 + $0x28] sm:$0xff]
    %v3658 = vld [vmem:[%s3651 + $0x30] sm:$0xff]
    %v3659 = vld [vmem:[%s3651 + $0x38] sm:$0xff]
    %v3661 = vsel %vm3636, %v3650, 0
    %3663 = vmatprep.subr.mxu0 0.0
    %3664 = vmatpush1.msra.mxu0 %v3652
    %3665 = vmatprep.subr.mxu0 0.0
    %3666 = vmatpush1.msra.mxu0 %v3653
    %3667 = vmatprep.subr.mxu0 0.0
    %3668 = vmatpush1.msra.mxu0 %v3654
    %3669 = vmatprep.subr.mxu0 0.0
    %3670 = vmatpush1.msra.mxu0 %v3655
    %3671 = vmatprep.subr.mxu0 0.0
    %3672 = vmatpush1.msra.mxu0 %v3656
    %3673 = vmatprep.subr.mxu0 0.0
    %3674 = vmatpush1.msra.mxu0 %v3657
    %3675 = vmatprep.subr.mxu0 0.0
    %3676 = vmatpush1.msra.mxu0 %v3658
    %3677 = vmatprep.subr.mxu0 0.0
    %3678 = vmatpush1.msra.mxu0 %v3659
    %3679 = vmatprep.subr.mxu0 0.0
    %3680 = vmatpush1.msra.mxu0 0.0
    %3681 = vmatprep.subr.mxu0 0.0
    %3682 = vmatpush1.msra.mxu0 0.0
    %3683 = vmatprep.subr.mxu0 0.0
    %3684 = vmatpush1.msra.mxu0 0.0
    %3685 = vmatprep.subr.mxu0 0.0
    %3686 = vmatpush1.msra.mxu0 0.0
    %3687 = vmatprep.subr.mxu0 0.0
    %3688 = vmatpush1.msra.mxu0 0.0
    %3689 = vmatprep.subr.mxu0 0.0
    %3690 = vmatpush1.msra.mxu0 0.0
    %3691 = vmatprep.subr.mxu0 0.0
    %3692 = vmatpush1.msra.mxu0 0.0
    %3693 = vmatprep.subr.mxu0 0.0
    %3694 = vmatpush1.msra.mxu0 0.0
    %3695 = vmatprep.subr.mxu0 0.0
    %3696 = vmatpush1.msra.mxu0 0.0
    %3697 = vmatprep.subr.mxu0 0.0
    %3698 = vmatpush1.msra.mxu0 0.0
    %3699 = vmatprep.subr.mxu0 0.0
    %3700 = vmatpush1.msra.mxu0 0.0
    %3701 = vmatprep.subr.mxu0 0.0
    %3702 = vmatpush1.msra.mxu0 0.0
    %3703 = vmatprep.subr.mxu0 0.0
    %3704 = vmatpush1.msra.mxu0 0.0
    %3705 = vmatprep.subr.mxu0 0.0
    %3706 = vmatpush1.msra.mxu0 0.0
    %3707 = vmatprep.subr.mxu0 0.0
    %3708 = vmatpush1.msra.mxu0 0.0
    %3709 = vmatprep.subr.mxu0 0.0
    %3710 = vmatpush1.msra.mxu0 0.0
    %3711 = vmatprep.subr.mxu0 0.0
    %3712 = vmatpush1.msra.mxu0 0.0
    %3713 = vmatprep.subr.mxu0 0.0
    %3714 = vmatpush1.msra.mxu0 0.0
    %3715 = vmatprep.subr.mxu0 0.0
    %3716 = vmatpush1.msra.mxu0 0.0
    %3717 = vmatprep.subr.mxu0 0.0
    %3718 = vmatpush1.msra.mxu0 0.0
    %3719 = vmatprep.subr.mxu0 0.0
    %3720 = vmatpush1.msra.mxu0 0.0
    %3721 = vmatprep.subr.mxu0 0.0
    %3722 = vmatpush1.msra.mxu0 0.0
    %3723 = vmatprep.subr.mxu0 0.0
    %3724 = vmatpush1.msra.mxu0 0.0
    %3725 = vmatprep.subr.mxu0 0.0
    %3726 = vmatpush1.msra.mxu0 0.0
    %3727 = vmatprep.mubr.f32.mxu0 0.0
    %3728 = vmatmul.mubr.f32.gmra.mrb[0].mxu0 %v3661
    %v3729 = vpop.f32.mrb[0].mxu0
    %v3730 = vadd.f32 0.0, %v3729
    %v3731 = vpop.f32.mrb[0].mxu0
    %3732 = vdwg.mxu0
    %v3734 = vsel %vm3636, %v3641, 0
    %3736 = vmatprep.subr.mxu0 0.0
    %3737 = vmatpush1.msra.mxu0 %v3642
    %3738 = vmatprep.subr.mxu0 0.0
    %3739 = vmatpush1.msra.mxu0 %v3643
    %3740 = vmatprep.subr.mxu0 0.0
    %3741 = vmatpush1.msra.mxu0 %v3644
    %3742 = vmatprep.subr.mxu0 0.0
    %3743 = vmatpush1.msra.mxu0 %v3645
    %3744 = vmatprep.subr.mxu0 0.0
    %3745 = vmatpush1.msra.mxu0 %v3646
    %3746 = vmatprep.subr.mxu0 0.0
    %3747 = vmatpush1.msra.mxu0 %v3647
    %3748 = vmatprep.subr.mxu0 0.0
    %3749 = vmatpush1.msra.mxu0 %v3648
    %3750 = vmatprep.subr.mxu0 0.0
    %3751 = vmatpush1.msra.mxu0 %v3649
    %3752 = vmatprep.subr.mxu0 0.0
    %3753 = vmatpush1.msra.mxu0 0.0
    %3754 = vmatprep.subr.mxu0 0.0
    %3755 = vmatpush1.msra.mxu0 0.0
    %3756 = vmatprep.subr.mxu0 0.0
    %3757 = vmatpush1.msra.mxu0 0.0
    %3758 = vmatprep.subr.mxu0 0.0
    %3759 = vmatpush1.msra.mxu0 0.0
    %3760 = vmatprep.subr.mxu0 0.0
    %3761 = vmatpush1.msra.mxu0 0.0
    %3762 = vmatprep.subr.mxu0 0.0
    %3763 = vmatpush1.msra.mxu0 0.0
    %3764 = vmatprep.subr.mxu0 0.0
    %3765 = vmatpush1.msra.mxu0 0.0
    %3766 = vmatprep.subr.mxu0 0.0
    %3767 = vmatpush1.msra.mxu0 0.0
    %3768 = vmatprep.subr.mxu0 0.0
    %3769 = vmatpush1.msra.mxu0 0.0
    %3770 = vmatprep.subr.mxu0 0.0
    %3771 = vmatpush1.msra.mxu0 0.0
    %3772 = vmatprep.subr.mxu0 0.0
    %3773 = vmatpush1.msra.mxu0 0.0
    %3774 = vmatprep.subr.mxu0 0.0
    %3775 = vmatpush1.msra.mxu0 0.0
    %3776 = vmatprep.subr.mxu0 0.0
    %3777 = vmatpush1.msra.mxu0 0.0
    %3778 = vmatprep.subr.mxu0 0.0
    %3779 = vmatpush1.msra.mxu0 0.0
    %3780 = vmatprep.subr.mxu0 0.0
    %3781 = vmatpush1.msra.mxu0 0.0
    %3782 = vmatprep.subr.mxu0 0.0
    %3783 = vmatpush1.msra.mxu0 0.0
    %3784 = vmatprep.subr.mxu0 0.0
    %3785 = vmatpush1.msra.mxu0 0.0
    %3786 = vmatprep.subr.mxu0 0.0
    %3787 = vmatpush1.msra.mxu0 0.0
    %3788 = vmatprep.subr.mxu0 0.0
    %3789 = vmatpush1.msra.mxu0 0.0
    %3790 = vmatprep.subr.mxu0 0.0
    %3791 = vmatpush1.msra.mxu0 0.0
    %3792 = vmatprep.subr.mxu0 0.0
    %3793 = vmatpush1.msra.mxu0 0.0
    %3794 = vmatprep.subr.mxu0 0.0
    %3795 = vmatpush1.msra.mxu0 0.0
    %3796 = vmatprep.subr.mxu0 0.0
    %3797 = vmatpush1.msra.mxu0 0.0
    %3798 = vmatprep.subr.mxu0 0.0
    %3799 = vmatpush1.msra.mxu0 0.0
    %3800 = vmatprep.mubr.f32.mxu0 0.0
    %3801 = vmatmul.mubr.f32.gmra.mrb[0].mxu0 %v3734
    %v3802 = vpop.f32.mrb[0].mxu0
    %v3803 = vadd.f32 %v3730, %v3802
    %v3804 = vpop.f32.mrb[0].mxu0
    %3805 = vdwg.mxu0
    %v3806 = vld [vmem:[#allocation2 + $0x4] sm:$0x3]
    %s3807 = scalar_lea.vmem %s5, 128
    %v3808 = vld [vmem:[%s3807] sm:$0xff]
    %v3809 = vld [vmem:[%s3807 + $0x8] sm:$0xff]
    %v3810 = vld [vmem:[%s3807 + $0x10] sm:$0xff]
    %v3811 = vld [vmem:[%s3807 + $0x18] sm:$0xff]
    %v3812 = vld [vmem:[%s3807 + $0x20] sm:$0xff]
    %v3813 = vld [vmem:[%s3807 + $0x28] sm:$0xff]
    %v3814 = vld [vmem:[%s3807 + $0x30] sm:$0xff]
    %v3815 = vld [vmem:[%s3807 + $0x38] sm:$0xff]
    %v3817 = vsel %vm3636, %v3806, 0
    %3819 = vmatprep.subr.mxu0 0.0
    %3820 = vmatpush1.msra.mxu0 %v3808
    %3821 = vmatprep.subr.mxu0 0.0
    %3822 = vmatpush1.msra.mxu0 %v3809
    %3823 = vmatprep.subr.mxu0 0.0
    %3824 = vmatpush1.msra.mxu0 %v3810
    %3825 = vmatprep.subr.mxu0 0.0
    %3826 = vmatpush1.msra.mxu0 %v3811
    %3827 = vmatprep.subr.mxu0 0.0
    %3828 = vmatpush1.msra.mxu0 %v3812
    %3829 = vmatprep.subr.mxu0 0.0
    %3830 = vmatpush1.msra.mxu0 %v3813
    %3831 = vmatprep.subr.mxu0 0.0
    %3832 = vmatpush1.msra.mxu0 %v3814
    %3833 = vmatprep.subr.mxu0 0.0
    %3834 = vmatpush1.msra.mxu0 %v3815
    %3835 = vmatprep.subr.mxu0 0.0
    %3836 = vmatpush1.msra.mxu0 0.0
    %3837 = vmatprep.subr.mxu0 0.0
    %3838 = vmatpush1.msra.mxu0 0.0
    %3839 = vmatprep.subr.mxu0 0.0
    %3840 = vmatpush1.msra.mxu0 0.0
    %3841 = vmatprep.subr.mxu0 0.0
    %3842 = vmatpush1.msra.mxu0 0.0
    %3843 = vmatprep.subr.mxu0 0.0
    %3844 = vmatpush1.msra.mxu0 0.0
    %3845 = vmatprep.subr.mxu0 0.0
    %3846 = vmatpush1.msra.mxu0 0.0
    %3847 = vmatprep.subr.mxu0 0.0
    %3848 = vmatpush1.msra.mxu0 0.0
    %3849 = vmatprep.subr.mxu0 0.0
    %3850 = vmatpush1.msra.mxu0 0.0
    %3851 = vmatprep.subr.mxu0 0.0
    %3852 = vmatpush1.msra.mxu0 0.0
    %3853 = vmatprep.subr.mxu0 0.0
    %3854 = vmatpush1.msra.mxu0 0.0
    %3855 = vmatprep.subr.mxu0 0.0
    %3856 = vmatpush1.msra.mxu0 0.0
    %3857 = vmatprep.subr.mxu0 0.0
    %3858 = vmatpush1.msra.mxu0 0.0
    %3859 = vmatprep.subr.mxu0 0.0
    %3860 = vmatpush1.msra.mxu0 0.0
    %3861 = vmatprep.subr.mxu0 0.0
    %3862 = vmatpush1.msra.mxu0 0.0
    %3863 = vmatprep.subr.mxu0 0.0
    %3864 = vmatpush1.msra.mxu0 0.0
    %3865 = vmatprep.subr.mxu0 0.0
    %3866 = vmatpush1.msra.mxu0 0.0
    %3867 = vmatprep.subr.mxu0 0.0
    %3868 = vmatpush1.msra.mxu0 0.0
    %3869 = vmatprep.subr.mxu0 0.0
    %3870 = vmatpush1.msra.mxu0 0.0
    %3871 = vmatprep.subr.mxu0 0.0
    %3872 = vmatpush1.msra.mxu0 0.0
    %3873 = vmatprep.subr.mxu0 0.0
    %3874 = vmatpush1.msra.mxu0 0.0
    %3875 = vmatprep.subr.mxu0 0.0
    %3876 = vmatpush1.msra.mxu0 0.0
    %3877 = vmatprep.subr.mxu0 0.0
    %3878 = vmatpush1.msra.mxu0 0.0
    %3879 = vmatprep.subr.mxu0 0.0
    %3880 = vmatpush1.msra.mxu0 0.0
    %3881 = vmatprep.subr.mxu0 0.0
    %3882 = vmatpush1.msra.mxu0 0.0
    %3883 = vmatprep.mubr.f32.mxu0 0.0
    %3884 = vmatmul.mubr.f32.gmra.mrb[0].mxu0 %v3817
    %v3885 = vpop.f32.mrb[0].mxu0
    %v3886 = vadd.f32 0.0, %v3885
    %v3887 = vpop.f32.mrb[0].mxu0
    %3888 = vdwg.mxu0
    %v3889 = vadd.f32 %v3803, %v3886
    %v3890 = vld [vmem:[#allocation2 + $0x6] sm:$0x3]
    %s3891 = scalar_lea.vmem %s5, 192
    %v3892 = vld [vmem:[%s3891] sm:$0xff]
    %v3893 = vld [vmem:[%s3891 + $0x8] sm:$0xff]
    %v3894 = vld [vmem:[%s3891 + $0x10] sm:$0xff]
    %v3895 = vld [vmem:[%s3891 + $0x18] sm:$0xff]
    %v3896 = vld [vmem:[%s3891 + $0x20] sm:$0xff]
    %v3897 = vld [vmem:[%s3891 + $0x28] sm:$0xff]
    %v3898 = vld [vmem:[%s3891 + $0x30] sm:$0xff]
    %v3899 = vld [vmem:[%s3891 + $0x38] sm:$0xff]
    %v3901 = vsel %vm3636, %v3890, 0
    %3903 = vmatprep.subr.mxu0 0.0
    %3904 = vmatpush1.msra.mxu0 %v3892
    %3905 = vmatprep.subr.mxu0 0.0
    %3906 = vmatpush1.msra.mxu0 %v3893
    %3907 = vmatprep.subr.mxu0 0.0
    %3908 = vmatpush1.msra.mxu0 %v3894
    %3909 = vmatprep.subr.mxu0 0.0
    %3910 = vmatpush1.msra.mxu0 %v3895
    %3911 = vmatprep.subr.mxu0 0.0
    %3912 = vmatpush1.msra.mxu0 %v3896
    %3913 = vmatprep.subr.mxu0 0.0
    %3914 = vmatpush1.msra.mxu0 %v3897
    %3915 = vmatprep.subr.mxu0 0.0
    %3916 = vmatpush1.msra.mxu0 %v3898
    %3917 = vmatprep.subr.mxu0 0.0
    %3918 = vmatpush1.msra.mxu0 %v3899
    %3919 = vmatprep.subr.mxu0 0.0
    %3920 = vmatpush1.msra.mxu0 0.0
    %3921 = vmatprep.subr.mxu0 0.0
    %3922 = vmatpush1.msra.mxu0 0.0
    %3923 = vmatprep.subr.mxu0 0.0
    %3924 = vmatpush1.msra.mxu0 0.0
    %3925 = vmatprep.subr.mxu0 0.0
    %3926 = vmatpush1.msra.mxu0 0.0
    %3927 = vmatprep.subr.mxu0 0.0
    %3928 = vmatpush1.msra.mxu0 0.0
    %3929 = vmatprep.subr.mxu0 0.0
    %3930 = vmatpush1.msra.mxu0 0.0
    %3931 = vmatprep.subr.mxu0 0.0
    %3932 = vmatpush1.msra.mxu0 0.0
    %3933 = vmatprep.subr.mxu0 0.0
    %3934 = vmatpush1.msra.mxu0 0.0
    %3935 = vmatprep.subr.mxu0 0.0
    %3936 = vmatpush1.msra.mxu0 0.0
    %3937 = vmatprep.subr.mxu0 0.0
    %3938 = vmatpush1.msra.mxu0 0.0
    %3939 = vmatprep.subr.mxu0 0.0
    %3940 = vmatpush1.msra.mxu0 0.0
    %3941 = vmatprep.subr.mxu0 0.0
    %3942 = vmatpush1.msra.mxu0 0.0
    %3943 = vmatprep.subr.mxu0 0.0
    %3944 = vmatpush1.msra.mxu0 0.0
    %3945 = vmatprep.subr.mxu0 0.0
    %3946 = vmatpush1.msra.mxu0 0.0
    %3947 = vmatprep.subr.mxu0 0.0
    %3948 = vmatpush1.msra.mxu0 0.0
    %3949 = vmatprep.subr.mxu0 0.0
    %3950 = vmatpush1.msra.mxu0 0.0
    %3951 = vmatprep.subr.mxu0 0.0
    %3952 = vmatpush1.msra.mxu0 0.0
    %3953 = vmatprep.subr.mxu0 0.0
    %3954 = vmatpush1.msra.mxu0 0.0
    %3955 = vmatprep.subr.mxu0 0.0
    %3956 = vmatpush1.msra.mxu0 0.0
    %3957 = vmatprep.subr.mxu0 0.0
    %3958 = vmatpush1.msra.mxu0 0.0
    %3959 = vmatprep.subr.mxu0 0.0
    %3960 = vmatpush1.msra.mxu0 0.0
    %3961 = vmatprep.subr.mxu0 0.0
    %3962 = vmatpush1.msra.mxu0 0.0
    %3963 = vmatprep.subr.mxu0 0.0
    %3964 = vmatpush1.msra.mxu0 0.0
    %3965 = vmatprep.subr.mxu0 0.0
    %3966 = vmatpush1.msra.mxu0 0.0
    %3967 = vmatprep.mubr.f32.mxu0 0.0
    %3968 = vmatmul.mubr.f32.gmra.mrb[0].mxu0 %v3901
    %v3969 = vpop.f32.mrb[0].mxu0
    %v3970 = vadd.f32 0.0, %v3969
    %v3971 = vpop.f32.mrb[0].mxu0
    %3972 = vdwg.mxu0
    %v3973 = vadd.f32 %v3889, %v3970
    %v3974 = vld [vmem:[#allocation2 + $0x8] sm:$0x3]
    %s3975 = scalar_lea.vmem %s5, 256
    %v3976 = vld [vmem:[%s3975] sm:$0xff]
    %v3977 = vld [vmem:[%s3975 + $0x8] sm:$0xff]
    %v3978 = vld [vmem:[%s3975 + $0x10] sm:$0xff]
    %v3979 = vld [vmem:[%s3975 + $0x18] sm:$0xff]
    %v3980 = vld [vmem:[%s3975 + $0x20] sm:$0xff]
    %v3981 = vld [vmem:[%s3975 + $0x28] sm:$0xff]
    %v3982 = vld [vmem:[%s3975 + $0x30] sm:$0xff]
    %v3983 = vld [vmem:[%s3975 + $0x38] sm:$0xff]
    %v3985 = vsel %vm3636, %v3974, 0
    %3987 = vmatprep.subr.mxu0 0.0
    %3988 = vmatpush1.msra.mxu0 %v3976
    %3989 = vmatprep.subr.mxu0 0.0
    %3990 = vmatpush1.msra.mxu0 %v3977
    %3991 = vmatprep.subr.mxu0 0.0
    %3992 = vmatpush1.msra.mxu0 %v3978
    %3993 = vmatprep.subr.mxu0 0.0
    %3994 = vmatpush1.msra.mxu0 %v3979
    %3995 = vmatprep.subr.mxu0 0.0
    %3996 = vmatpush1.msra.mxu0 %v3980
    %3997 = vmatprep.subr.mxu0 0.0
    %3998 = vmatpush1.msra.mxu0 %v3981
    %3999 = vmatprep.subr.mxu0 0.0
    %4000 = vmatpush1.msra.mxu0 %v3982
    %4001 = vmatprep.subr.mxu0 0.0
    %4002 = vmatpush1.msra.mxu0 %v3983
    %4003 = vmatprep.subr.mxu0 0.0
    %4004 = vmatpush1.msra.mxu0 0.0
    %4005 = vmatprep.subr.mxu0 0.0
    %4006 = vmatpush1.msra.mxu0 0.0
    %4007 = vmatprep.subr.mxu0 0.0
    %4008 = vmatpush1.msra.mxu0 0.0
    %4009 = vmatprep.subr.mxu0 0.0
    %4010 = vmatpush1.msra.mxu0 0.0
    %4011 = vmatprep.subr.mxu0 0.0
    %4012 = vmatpush1.msra.mxu0 0.0
    %4013 = vmatprep.subr.mxu0 0.0
    %4014 = vmatpush1.msra.mxu0 0.0
    %4015 = vmatprep.subr.mxu0 0.0
    %4016 = vmatpush1.msra.mxu0 0.0
    %4017 = vmatprep.subr.mxu0 0.0
    %4018 = vmatpush1.msra.mxu0 0.0
    %4019 = vmatprep.subr.mxu0 0.0
    %4020 = vmatpush1.msra.mxu0 0.0
    %4021 = vmatprep.subr.mxu0 0.0
    %4022 = vmatpush1.msra.mxu0 0.0
    %4023 = vmatprep.subr.mxu0 0.0
    %4024 = vmatpush1.msra.mxu0 0.0
    %4025 = vmatprep.subr.mxu0 0.0
    %4026 = vmatpush1.msra.mxu0 0.0
    %4027 = vmatprep.subr.mxu0 0.0
    %4028 = vmatpush1.msra.mxu0 0.0
    %4029 = vmatprep.subr.mxu0 0.0
    %4030 = vmatpush1.msra.mxu0 0.0
    %4031 = vmatprep.subr.mxu0 0.0
    %4032 = vmatpush1.msra.mxu0 0.0
    %4033 = vmatprep.subr.mxu0 0.0
    %4034 = vmatpush1.msra.mxu0 0.0
    %4035 = vmatprep.subr.mxu0 0.0
    %4036 = vmatpush1.msra.mxu0 0.0
    %4037 = vmatprep.subr.mxu0 0.0
    %4038 = vmatpush1.msra.mxu0 0.0
    %4039 = vmatprep.subr.mxu0 0.0
    %4040 = vmatpush1.msra.mxu0 0.0
    %4041 = vmatprep.subr.mxu0 0.0
    %4042 = vmatpush1.msra.mxu0 0.0
    %4043 = vmatprep.subr.mxu0 0.0
    %4044 = vmatpush1.msra.mxu0 0.0
    %4045 = vmatprep.subr.mxu0 0.0
    %4046 = vmatpush1.msra.mxu0 0.0
    %4047 = vmatprep.subr.mxu0 0.0
    %4048 = vmatpush1.msra.mxu0 0.0
    %4049 = vmatprep.subr.mxu0 0.0
    %4050 = vmatpush1.msra.mxu0 0.0
    %4051 = vmatprep.mubr.f32.mxu0 0.0
    %4052 = vmatmul.mubr.f32.gmra.mrb[0].mxu0 %v3985
    %v4053 = vpop.f32.mrb[0].mxu0
    %v4054 = vadd.f32 0.0, %v4053
    %v4055 = vpop.f32.mrb[0].mxu0
    %4056 = vdwg.mxu0
    %v4057 = vadd.f32 %v3973, %v4054
    %v4058 = vld [vmem:[#allocation2 + $0xa] sm:$0x3]
    %s4059 = scalar_lea.vmem %s5, 320
    %v4060 = vld [vmem:[%s4059] sm:$0xff]
    %v4061 = vld [vmem:[%s4059 + $0x8] sm:$0xff]
    %v4062 = vld [vmem:[%s4059 + $0x10] sm:$0xff]
    %v4063 = vld [vmem:[%s4059 + $0x18] sm:$0xff]
    %v4064 = vld [vmem:[%s4059 + $0x20] sm:$0xff]
    %v4065 = vld [vmem:[%s4059 + $0x28] sm:$0xff]
    %v4066 = vld [vmem:[%s4059 + $0x30] sm:$0xff]
    %v4067 = vld [vmem:[%s4059 + $0x38] sm:$0xff]
    %v4069 = vsel %vm3636, %v4058, 0
    %4071 = vmatprep.subr.mxu0 0.0
    %4072 = vmatpush1.msra.mxu0 %v4060
    %4073 = vmatprep.subr.mxu0 0.0
    %4074 = vmatpush1.msra.mxu0 %v4061
    %4075 = vmatprep.subr.mxu0 0.0
    %4076 = vmatpush1.msra.mxu0 %v4062
    %4077 = vmatprep.subr.mxu0 0.0
    %4078 = vmatpush1.msra.mxu0 %v4063
    %4079 = vmatprep.subr.mxu0 0.0
    %4080 = vmatpush1.msra.mxu0 %v4064
    %4081 = vmatprep.subr.mxu0 0.0
    %4082 = vmatpush1.msra.mxu0 %v4065
    %4083 = vmatprep.subr.mxu0 0.0
    %4084 = vmatpush1.msra.mxu0 %v4066
    %4085 = vmatprep.subr.mxu0 0.0
    %4086 = vmatpush1.msra.mxu0 %v4067
    %4087 = vmatprep.subr.mxu0 0.0
    %4088 = vmatpush1.msra.mxu0 0.0
    %4089 = vmatprep.subr.mxu0 0.0
    %4090 = vmatpush1.msra.mxu0 0.0
    %4091 = vmatprep.subr.mxu0 0.0
    %4092 = vmatpush1.msra.mxu0 0.0
    %4093 = vmatprep.subr.mxu0 0.0
    %4094 = vmatpush1.msra.mxu0 0.0
    %4095 = vmatprep.subr.mxu0 0.0
    %4096 = vmatpush1.msra.mxu0 0.0
    %4097 = vmatprep.subr.mxu0 0.0
    %4098 = vmatpush1.msra.mxu0 0.0
    %4099 = vmatprep.subr.mxu0 0.0
    %4100 = vmatpush1.msra.mxu0 0.0
    %4101 = vmatprep.subr.mxu0 0.0
    %4102 = vmatpush1.msra.mxu0 0.0
    %4103 = vmatprep.subr.mxu0 0.0
    %4104 = vmatpush1.msra.mxu0 0.0
    %4105 = vmatprep.subr.mxu0 0.0
    %4106 = vmatpush1.msra.mxu0 0.0
    %4107 = vmatprep.subr.mxu0 0.0
    %4108 = vmatpush1.msra.mxu0 0.0
    %4109 = vmatprep.subr.mxu0 0.0
    %4110 = vmatpush1.msra.mxu0 0.0
    %4111 = vmatprep.subr.mxu0 0.0
    %4112 = vmatpush1.msra.mxu0 0.0
    %4113 = vmatprep.subr.mxu0 0.0
    %4114 = vmatpush1.msra.mxu0 0.0
    %4115 = vmatprep.subr.mxu0 0.0
    %4116 = vmatpush1.msra.mxu0 0.0
    %4117 = vmatprep.subr.mxu0 0.0
    %4118 = vmatpush1.msra.mxu0 0.0
    %4119 = vmatprep.subr.mxu0 0.0
    %4120 = vmatpush1.msra.mxu0 0.0
    %4121 = vmatprep.subr.mxu0 0.0
    %4122 = vmatpush1.msra.mxu0 0.0
    %4123 = vmatprep.subr.mxu0 0.0
    %4124 = vmatpush1.msra.mxu0 0.0
    %4125 = vmatprep.subr.mxu0 0.0
    %4126 = vmatpush1.msra.mxu0 0.0
    %4127 = vmatprep.subr.mxu0 0.0
    %4128 = vmatpush1.msra.mxu0 0.0
    %4129 = vmatprep.subr.mxu0 0.0
    %4130 = vmatpush1.msra.mxu0 0.0
    %4131 = vmatprep.subr.mxu0 0.0
    %4132 = vmatpush1.msra.mxu0 0.0
    %4133 = vmatprep.subr.mxu0 0.0
    %4134 = vmatpush1.msra.mxu0 0.0
    %4135 = vmatprep.mubr.f32.mxu0 0.0
    %4136 = vmatmul.mubr.f32.gmra.mrb[0].mxu0 %v4069
    %v4137 = vpop.f32.mrb[0].mxu0
    %v4138 = vadd.f32 0.0, %v4137
    %v4139 = vpop.f32.mrb[0].mxu0
    %4140 = vdwg.mxu0
    %v4141 = vadd.f32 %v4057, %v4138
    %v4142 = vld [vmem:[#allocation2 + $0xc] sm:$0x3]
    %s4143 = scalar_lea.vmem %s5, 384
    %v4144 = vld [vmem:[%s4143] sm:$0xff]
    %v4145 = vld [vmem:[%s4143 + $0x8] sm:$0xff]
    %v4146 = vld [vmem:[%s4143 + $0x10] sm:$0xff]
    %v4147 = vld [vmem:[%s4143 + $0x18] sm:$0xff]
    %v4148 = vld [vmem:[%s4143 + $0x20] sm:$0xff]
    %v4149 = vld [vmem:[%s4143 + $0x28] sm:$0xff]
    %v4150 = vld [vmem:[%s4143 + $0x30] sm:$0xff]
    %v4151 = vld [vmem:[%s4143 + $0x38] sm:$0xff]
    %v4153 = vsel %vm3636, %v4142, 0
    %4155 = vmatprep.subr.mxu0 0.0
    %4156 = vmatpush1.msra.mxu0 %v4144
    %4157 = vmatprep.subr.mxu0 0.0
    %4158 = vmatpush1.msra.mxu0 %v4145
    %4159 = vmatprep.subr.mxu0 0.0
    %4160 = vmatpush1.msra.mxu0 %v4146
    %4161 = vmatprep.subr.mxu0 0.0
    %4162 = vmatpush1.msra.mxu0 %v4147
    %4163 = vmatprep.subr.mxu0 0.0
    %4164 = vmatpush1.msra.mxu0 %v4148
    %4165 = vmatprep.subr.mxu0 0.0
    %4166 = vmatpush1.msra.mxu0 %v4149
    %4167 = vmatprep.subr.mxu0 0.0
    %4168 = vmatpush1.msra.mxu0 %v4150
    %4169 = vmatprep.subr.mxu0 0.0
    %4170 = vmatpush1.msra.mxu0 %v4151
    %4171 = vmatprep.subr.mxu0 0.0
    %4172 = vmatpush1.msra.mxu0 0.0
    %4173 = vmatprep.subr.mxu0 0.0
    %4174 = vmatpush1.msra.mxu0 0.0
    %4175 = vmatprep.subr.mxu0 0.0
    %4176 = vmatpush1.msra.mxu0 0.0
    %4177 = vmatprep.subr.mxu0 0.0
    %4178 = vmatpush1.msra.mxu0 0.0
    %4179 = vmatprep.subr.mxu0 0.0
    %4180 = vmatpush1.msra.mxu0 0.0
    %4181 = vmatprep.subr.mxu0 0.0
    %4182 = vmatpush1.msra.mxu0 0.0
    %4183 = vmatprep.subr.mxu0 0.0
    %4184 = vmatpush1.msra.mxu0 0.0
    %4185 = vmatprep.subr.mxu0 0.0
    %4186 = vmatpush1.msra.mxu0 0.0
    %4187 = vmatprep.subr.mxu0 0.0
    %4188 = vmatpush1.msra.mxu0 0.0
    %4189 = vmatprep.subr.mxu0 0.0
    %4190 = vmatpush1.msra.mxu0 0.0
    %4191 = vmatprep.subr.mxu0 0.0
    %4192 = vmatpush1.msra.mxu0 0.0
    %4193 = vmatprep.subr.mxu0 0.0
    %4194 = vmatpush1.msra.mxu0 0.0
    %4195 = vmatprep.subr.mxu0 0.0
    %4196 = vmatpush1.msra.mxu0 0.0
    %4197 = vmatprep.subr.mxu0 0.0
    %4198 = vmatpush1.msra.mxu0 0.0
    %4199 = vmatprep.subr.mxu0 0.0
    %4200 = vmatpush1.msra.mxu0 0.0
    %4201 = vmatprep.subr.mxu0 0.0
    %4202 = vmatpush1.msra.mxu0 0.0
    %4203 = vmatprep.subr.mxu0 0.0
    %4204 = vmatpush1.msra.mxu0 0.0
    %4205 = vmatprep.subr.mxu0 0.0
    %4206 = vmatpush1.msra.mxu0 0.0
    %4207 = vmatprep.subr.mxu0 0.0
    %4208 = vmatpush1.msra.mxu0 0.0
    %4209 = vmatprep.subr.mxu0 0.0
    %4210 = vmatpush1.msra.mxu0 0.0
    %4211 = vmatprep.subr.mxu0 0.0
    %4212 = vmatpush1.msra.mxu0 0.0
    %4213 = vmatprep.subr.mxu0 0.0
    %4214 = vmatpush1.msra.mxu0 0.0
    %4215 = vmatprep.subr.mxu0 0.0
    %4216 = vmatpush1.msra.mxu0 0.0
    %4217 = vmatprep.subr.mxu0 0.0
    %4218 = vmatpush1.msra.mxu0 0.0
    %4219 = vmatprep.mubr.f32.mxu0 0.0
    %4220 = vmatmul.mubr.f32.gmra.mrb[0].mxu0 %v4153
    %v4221 = vpop.f32.mrb[0].mxu0
    %v4222 = vadd.f32 0.0, %v4221
    %v4223 = vpop.f32.mrb[0].mxu0
    %4224 = vdwg.mxu0
    %v4225 = vadd.f32 %v4141, %v4222
    %v4226 = vld [vmem:[#allocation2 + $0xe] sm:$0x3]
    %s4227 = scalar_lea.vmem %s5, 448
    %v4228 = vld [vmem:[%s4227] sm:$0xff]
    %v4229 = vld [vmem:[%s4227 + $0x8] sm:$0xff]
    %v4230 = vld [vmem:[%s4227 + $0x10] sm:$0xff]
    %v4231 = vld [vmem:[%s4227 + $0x18] sm:$0xff]
    %v4232 = vld [vmem:[%s4227 + $0x20] sm:$0xff]
    %v4233 = vld [vmem:[%s4227 + $0x28] sm:$0xff]
    %v4234 = vld [vmem:[%s4227 + $0x30] sm:$0xff]
    %v4235 = vld [vmem:[%s4227 + $0x38] sm:$0xff]
    %v4237 = vsel %vm3636, %v4226, 0
    %4239 = vmatprep.subr.mxu0 0.0
    %4240 = vmatpush1.msra.mxu0 %v4228
    %4241 = vmatprep.subr.mxu0 0.0
    %4242 = vmatpush1.msra.mxu0 %v4229
    %4243 = vmatprep.subr.mxu0 0.0
    %4244 = vmatpush1.msra.mxu0 %v4230
    %4245 = vmatprep.subr.mxu0 0.0
    %4246 = vmatpush1.msra.mxu0 %v4231
    %4247 = vmatprep.subr.mxu0 0.0
    %4248 = vmatpush1.msra.mxu0 %v4232
    %4249 = vmatprep.subr.mxu0 0.0
    %4250 = vmatpush1.msra.mxu0 %v4233
    %4251 = vmatprep.subr.mxu0 0.0
    %4252 = vmatpush1.msra.mxu0 %v4234
    %4253 = vmatprep.subr.mxu0 0.0
    %4254 = vmatpush1.msra.mxu0 %v4235
    %4255 = vmatprep.subr.mxu0 0.0
    %4256 = vmatpush1.msra.mxu0 0.0
    %4257 = vmatprep.subr.mxu0 0.0
    %4258 = vmatpush1.msra.mxu0 0.0
    %4259 = vmatprep.subr.mxu0 0.0
    %4260 = vmatpush1.msra.mxu0 0.0
    %4261 = vmatprep.subr.mxu0 0.0
    %4262 = vmatpush1.msra.mxu0 0.0
    %4263 = vmatprep.subr.mxu0 0.0
    %4264 = vmatpush1.msra.mxu0 0.0
    %4265 = vmatprep.subr.mxu0 0.0
    %4266 = vmatpush1.msra.mxu0 0.0
    %4267 = vmatprep.subr.mxu0 0.0
    %4268 = vmatpush1.msra.mxu0 0.0
    %4269 = vmatprep.subr.mxu0 0.0
    %4270 = vmatpush1.msra.mxu0 0.0
    %4271 = vmatprep.subr.mxu0 0.0
    %4272 = vmatpush1.msra.mxu0 0.0
    %4273 = vmatprep.subr.mxu0 0.0
    %4274 = vmatpush1.msra.mxu0 0.0
    %4275 = vmatprep.subr.mxu0 0.0
    %4276 = vmatpush1.msra.mxu0 0.0
    %4277 = vmatprep.subr.mxu0 0.0
    %4278 = vmatpush1.msra.mxu0 0.0
    %4279 = vmatprep.subr.mxu0 0.0
    %4280 = vmatpush1.msra.mxu0 0.0
    %4281 = vmatprep.subr.mxu0 0.0
    %4282 = vmatpush1.msra.mxu0 0.0
    %4283 = vmatprep.subr.mxu0 0.0
    %4284 = vmatpush1.msra.mxu0 0.0
    %4285 = vmatprep.subr.mxu0 0.0
    %4286 = vmatpush1.msra.mxu0 0.0
    %4287 = vmatprep.subr.mxu0 0.0
    %4288 = vmatpush1.msra.mxu0 0.0
    %4289 = vmatprep.subr.mxu0 0.0
    %4290 = vmatpush1.msra.mxu0 0.0
    %4291 = vmatprep.subr.mxu0 0.0
    %4292 = vmatpush1.msra.mxu0 0.0
    %4293 = vmatprep.subr.mxu0 0.0
    %4294 = vmatpush1.msra.mxu0 0.0
    %4295 = vmatprep.subr.mxu0 0.0
    %4296 = vmatpush1.msra.mxu0 0.0
    %4297 = vmatprep.subr.mxu0 0.0
    %4298 = vmatpush1.msra.mxu0 0.0
    %4299 = vmatprep.subr.mxu0 0.0
    %4300 = vmatpush1.msra.mxu0 0.0
    %4301 = vmatprep.subr.mxu0 0.0
    %4302 = vmatpush1.msra.mxu0 0.0
    %4303 = vmatprep.mubr.f32.mxu0 0.0
    %4304 = vmatmul.mubr.f32.gmra.mrb[0].mxu0 %v4237
    %v4305 = vpop.f32.mrb[0].mxu0
    %v4306 = vadd.f32 0.0, %v4305
    %v4307 = vpop.f32.mrb[0].mxu0
    %4308 = vdwg.mxu0
    %v4309 = vadd.f32 %v4225, %v4306
    %v4310 = vld [vmem:[#allocation2 + $0x10] sm:$0x3]
    %s4311 = scalar_lea.vmem %s5, 512
    %v4312 = vld [vmem:[%s4311] sm:$0xff]
    %v4313 = vld [vmem:[%s4311 + $0x8] sm:$0xff]
    %v4314 = vld [vmem:[%s4311 + $0x10] sm:$0xff]
    %v4315 = vld [vmem:[%s4311 + $0x18] sm:$0xff]
    %v4316 = vld [vmem:[%s4311 + $0x20] sm:$0xff]
    %v4317 = vld [vmem:[%s4311 + $0x28] sm:$0xff]
    %v4318 = vld [vmem:[%s4311 + $0x30] sm:$0xff]
    %v4319 = vld [vmem:[%s4311 + $0x38] sm:$0xff]
    %v4321 = vsel %vm3636, %v4310, 0
    %4323 = vmatprep.subr.mxu0 0.0
    %4324 = vmatpush1.msra.mxu0 %v4312
    %4325 = vmatprep.subr.mxu0 0.0
    %4326 = vmatpush1.msra.mxu0 %v4313
    %4327 = vmatprep.subr.mxu0 0.0
    %4328 = vmatpush1.msra.mxu0 %v4314
    %4329 = vmatprep.subr.mxu0 0.0
    %4330 = vmatpush1.msra.mxu0 %v4315
    %4331 = vmatprep.subr.mxu0 0.0
    %4332 = vmatpush1.msra.mxu0 %v4316
    %4333 = vmatprep.subr.mxu0 0.0
    %4334 = vmatpush1.msra.mxu0 %v4317
    %4335 = vmatprep.subr.mxu0 0.0
    %4336 = vmatpush1.msra.mxu0 %v4318
    %4337 = vmatprep.subr.mxu0 0.0
    %4338 = vmatpush1.msra.mxu0 %v4319
    %4339 = vmatprep.subr.mxu0 0.0
    %4340 = vmatpush1.msra.mxu0 0.0
    %4341 = vmatprep.subr.mxu0 0.0
    %4342 = vmatpush1.msra.mxu0 0.0
    %4343 = vmatprep.subr.mxu0 0.0
    %4344 = vmatpush1.msra.mxu0 0.0
    %4345 = vmatprep.subr.mxu0 0.0
    %4346 = vmatpush1.msra.mxu0 0.0
    %4347 = vmatprep.subr.mxu0 0.0
    %4348 = vmatpush1.msra.mxu0 0.0
    %4349 = vmatprep.subr.mxu0 0.0
    %4350 = vmatpush1.msra.mxu0 0.0
    %4351 = vmatprep.subr.mxu0 0.0
    %4352 = vmatpush1.msra.mxu0 0.0
    %4353 = vmatprep.subr.mxu0 0.0
    %4354 = vmatpush1.msra.mxu0 0.0
    %4355 = vmatprep.subr.mxu0 0.0
    %4356 = vmatpush1.msra.mxu0 0.0
    %4357 = vmatprep.subr.mxu0 0.0
    %4358 = vmatpush1.msra.mxu0 0.0
    %4359 = vmatprep.subr.mxu0 0.0
    %4360 = vmatpush1.msra.mxu0 0.0
    %4361 = vmatprep.subr.mxu0 0.0
    %4362 = vmatpush1.msra.mxu0 0.0
    %4363 = vmatprep.subr.mxu0 0.0
    %4364 = vmatpush1.msra.mxu0 0.0
    %4365 = vmatprep.subr.mxu0 0.0
    %4366 = vmatpush1.msra.mxu0 0.0
    %4367 = vmatprep.subr.mxu0 0.0
    %4368 = vmatpush1.msra.mxu0 0.0
    %4369 = vmatprep.subr.mxu0 0.0
    %4370 = vmatpush1.msra.mxu0 0.0
    %4371 = vmatprep.subr.mxu0 0.0
    %4372 = vmatpush1.msra.mxu0 0.0
    %4373 = vmatprep.subr.mxu0 0.0
    %4374 = vmatpush1.msra.mxu0 0.0
    %4375 = vmatprep.subr.mxu0 0.0
    %4376 = vmatpush1.msra.mxu0 0.0
    %4377 = vmatprep.subr.mxu0 0.0
    %4378 = vmatpush1.msra.mxu0 0.0
    %4379 = vmatprep.subr.mxu0 0.0
    %4380 = vmatpush1.msra.mxu0 0.0
    %4381 = vmatprep.subr.mxu0 0.0
    %4382 = vmatpush1.msra.mxu0 0.0
    %4383 = vmatprep.subr.mxu0 0.0
    %4384 = vmatpush1.msra.mxu0 0.0
    %4385 = vmatprep.subr.mxu0 0.0
    %4386 = vmatpush1.msra.mxu0 0.0
    %4387 = vmatprep.mubr.f32.mxu0 0.0
    %4388 = vmatmul.mubr.f32.gmra.mrb[0].mxu0 %v4321
    %v4389 = vpop.f32.mrb[0].mxu0
    %v4390 = vadd.f32 0.0, %v4389
    %v4391 = vpop.f32.mrb[0].mxu0
    %4392 = vdwg.mxu0
    %v4393 = vadd.f32 %v4309, %v4390
    %v4394 = vld [vmem:[%s6] sm:$0x1]
    %v4396 = vlaneseq
    %v4397 = vshrl.u32 %v4396, 7
    %v4398 = vsub.s32 0, %v4397
    %v4399 = vrot.slane %v4394, %v4398
    %v4401 = vadd.f32 %v4393, %v4399
    %v4402 = vmax.f32 %v4401, 0.0
    %v4403 = vld [vmem:[%s7] sm:$0xff]
    %v4404 = vld [vmem:[%s7 + $0x8] sm:$0xff]
    %v4405 = vld [vmem:[%s7 + $0x10] sm:$0xff]
    %v4406 = vld [vmem:[%s7 + $0x18] sm:$0xff]
    %v4407 = vld [vmem:[%s8] sm:$0x1]
    %v4409 = vlaneseq
    %v4410 = vshrl.u32 %v4409, 7
    %v4411 = vsub.s32 0, %v4410
    %v4412 = vrot.slane %v4407, %v4411
    %v4415 = vsel %vm260, %v4402, 0
    %4417 = vmatprep.subr.mxu0 0.0
    %4418 = vmatpush1.msra.mxu0 %v4403
    %4419 = vmatprep.subr.mxu0 0.0
    %4420 = vmatpush1.msra.mxu0 %v4404
    %4421 = vmatprep.subr.mxu0 0.0
    %4422 = vmatpush1.msra.mxu0 %v4405
    %4423 = vmatprep.subr.mxu0 0.0
    %4424 = vmatpush1.msra.mxu0 %v4406
    %4425 = vmatprep.subr.mxu0 0.0
    %4426 = vmatpush1.msra.mxu0 0.0
    %4427 = vmatprep.subr.mxu0 0.0
    %4428 = vmatpush1.msra.mxu0 0.0
    %4429 = vmatprep.subr.mxu0 0.0
    %4430 = vmatpush1.msra.mxu0 0.0
    %4431 = vmatprep.subr.mxu0 0.0
    %4432 = vmatpush1.msra.mxu0 0.0
    %4433 = vmatprep.subr.mxu0 0.0
    %4434 = vmatpush1.msra.mxu0 0.0
    %4435 = vmatprep.subr.mxu0 0.0
    %4436 = vmatpush1.msra.mxu0 0.0
    %4437 = vmatprep.subr.mxu0 0.0
    %4438 = vmatpush1.msra.mxu0 0.0
    %4439 = vmatprep.subr.mxu0 0.0
    %4440 = vmatpush1.msra.mxu0 0.0
    %4441 = vmatprep.subr.mxu0 0.0
    %4442 = vmatpush1.msra.mxu0 0.0
    %4443 = vmatprep.subr.mxu0 0.0
    %4444 = vmatpush1.msra.mxu0 0.0
    %4445 = vmatprep.subr.mxu0 0.0
    %4446 = vmatpush1.msra.mxu0 0.0
    %4447 = vmatprep.subr.mxu0 0.0
    %4448 = vmatpush1.msra.mxu0 0.0
    %4449 = vmatprep.subr.mxu0 0.0
    %4450 = vmatpush1.msra.mxu0 0.0
    %4451 = vmatprep.subr.mxu0 0.0
    %4452 = vmatpush1.msra.mxu0 0.0
    %4453 = vmatprep.subr.mxu0 0.0
    %4454 = vmatpush1.msra.mxu0 0.0
    %4455 = vmatprep.subr.mxu0 0.0
    %4456 = vmatpush1.msra.mxu0 0.0
    %4457 = vmatprep.subr.mxu0 0.0
    %4458 = vmatpush1.msra.mxu0 0.0
    %4459 = vmatprep.subr.mxu0 0.0
    %4460 = vmatpush1.msra.mxu0 0.0
    %4461 = vmatprep.subr.mxu0 0.0
    %4462 = vmatpush1.msra.mxu0 0.0
    %4463 = vmatprep.subr.mxu0 0.0
    %4464 = vmatpush1.msra.mxu0 0.0
    %4465 = vmatprep.subr.mxu0 0.0
    %4466 = vmatpush1.msra.mxu0 0.0
    %4467 = vmatprep.subr.mxu0 0.0
    %4468 = vmatpush1.msra.mxu0 0.0
    %4469 = vmatprep.subr.mxu0 0.0
    %4470 = vmatpush1.msra.mxu0 0.0
    %4471 = vmatprep.subr.mxu0 0.0
    %4472 = vmatpush1.msra.mxu0 0.0
    %4473 = vmatprep.subr.mxu0 0.0
    %4474 = vmatpush1.msra.mxu0 0.0
    %4475 = vmatprep.subr.mxu0 0.0
    %4476 = vmatpush1.msra.mxu0 0.0
    %4477 = vmatprep.subr.mxu0 0.0
    %4478 = vmatpush1.msra.mxu0 0.0
    %4479 = vmatprep.subr.mxu0 0.0
    %4480 = vmatpush1.msra.mxu0 0.0
    %4481 = vmatprep.mubr.f32.mxu0 0.0
    %4482 = vmatmul.mubr.f32.gmra.mrb[0].mxu0 %v4415
    %v4483 = vpop.f32.mrb[0].mxu0
    %v4484 = vadd.f32 %v4412, %v4483
    %v4485 = vpop.f32.mrb[0].mxu0
    %4486 = vdwg.mxu0
    %4487 = vst [vmem:[#allocation3] sm:$0x3] %v4484
    // Predicated region
    $region38: #{data_efficient_convnet_forward.1} parent=1 // pred_check
      _
    $region39: #{data_efficient_convnet_forward.1} parent=1 // pred_check_branch
      %4489 = sbr.rel (0) target = $region41
    $region40: #{data_efficient_convnet_forward.1} parent=1 // pred_region
      %s4491 = ssub.s32 32, 32
      %4492 = vsyncadd [#allocation4], %s4491
      %s4494 = sshll.u32 [#allocation3], 4
      %s4495 = int_to_ptr.vmem [resolvable:$true] %s4494
      %4497 = dma.vmem_to_hbm [thread:$0]  %s4495, 32, %s9, [#allocation4]
    $region41: #{data_efficient_convnet_forward.1} parent=1 // pred_fallthru
      _
    // Predicated region
    $region42: #{data_efficient_convnet_forward.1} parent=1 // pred_check
      _
    $region43: #{data_efficient_convnet_forward.1} parent=1 // pred_check_branch
      %4499 = sbr.rel (0) target = $region45
    $region44: #{data_efficient_convnet_forward.1} parent=1 // pred_region
      %4500 = dma.done [#allocation4], 32
    $region45: #{data_efficient_convnet_forward.1} parent=1 // pred_fallthru
      _
    %4501 = vsyncpa [#allocation4], 1

</llo_original>
